<compile_context>
chip_gen: v7x
topology: tpu7x:2x2x1
jax: 0.10.0
libtpu: 0.0.40
codegen_flags: <defaults>
</compile_context>

<pallas_src>
import math

import jax
import jax.numpy as jnp
from jax.experimental import pallas as pl
from jax.experimental.pallas import tpu as pltpu

LN_EPS = 1e-5
_HIGHEST = jax.lax.Precision.HIGHEST


def _round_up(x, m):
    return (x + m - 1) // m * m


def _choose_pack(dq, dh, *, max_const_bytes=1 << 20):
    """Lane-packing factor: pack logical rows so q/attn/out are 128-lane dense."""
    pack_h = 128 // math.gcd(dh, 128)   # smallest pack making pack*dh % 128 == 0
    pack_q = 128 // math.gcd(dq, 128)   # smallest pack making pack*dq % 128 == 0
    pack_full = pack_h * pack_q // math.gcd(pack_h, pack_q)
    for pack in (pack_full, pack_h, 1):
        w_bytes = (pack * dq) * (pack * dh) * 4   # block-diagonal kron weight
        m_bytes = (pack * dh) * (pack * dh) * 4   # block-diagonal segment matrix
        if pack == 1 or max(w_bytes, m_bytes) <= max_const_bytes:
            return pack
    return 1


def prepare_addnorm_q_params(w, b, gamma, beta, *, pack):
    """One-time packing of Linear/LayerNorm params into the lane-packed layout."""
    dq, dh = w.shape
    eye = jnp.eye(pack, dtype=jnp.float32)
    # Block-diagonal weight so q @ W lands directly in the packed layout.
    wp = w if pack == 1 else jnp.kron(eye.astype(w.dtype), w)
    # Block-diagonal ones/dh matrix: x @ mseg == per-segment mean, broadcast
    # across each segment's lanes.
    mseg = jnp.kron(eye, jnp.full((dh, dh), 1.0 / dh, dtype=jnp.float32))
    bp = jnp.tile(b, pack).reshape(1, pack * dh)
    gp = jnp.tile(gamma, pack).reshape(1, pack * dh)
    betap = jnp.tile(beta, pack).reshape(1, pack * dh)
    return dict(wp=wp, bp=bp, gp=gp, betap=betap, mseg=mseg,
                pack=pack, dq=dq, dh=dh)


def _addnorm_q_kernel(q_ref, w_ref, b_ref, gamma_ref, beta_ref, mseg_ref,
                      attn_ref, out_ref):
    # Linear(q) directly in the packed layout (block-diagonal weight).
    x = jnp.dot(q_ref[...], w_ref[...],
                preferred_element_type=jnp.float32, precision=_HIGHEST)
    # + bias + residual (dropout == identity in eval mode).
    x = x + b_ref[...] + attn_ref[...].astype(jnp.float32)

    # LayerNorm per logical row: `pack` independent Dh-lane segments per
    # physical row.  Segment sums go through the MXU via the block-diagonal
    # ones/Dh matrix; results are already broadcast per lane, so no slicing,
    # cross-lane reduction, or concatenation is needed.
    mean = jnp.dot(x, mseg_ref[...],
                   preferred_element_type=jnp.float32, precision=_HIGHEST)
    xc = x - mean
    var = jnp.dot(xc * xc, mseg_ref[...],
                  preferred_element_type=jnp.float32, precision=_HIGHEST)
    y = xc * jax.lax.rsqrt(var + LN_EPS)

    # gamma/beta arrive pre-tiled to the packed width -> single dense store.
    out_ref[...] = (y * gamma_ref[...] + beta_ref[...]).astype(out_ref.dtype)


def addnorm_q(q, attn, params, *, tile_rows=2048,
              vmem_limit_bytes=32 * 1024 * 1024,
              stream_budget_bytes=20 * 1024 * 1024):
    """q: (B,S,Dq), attn: (B,S,Dh); params from prepare_addnorm_q_params."""
    B, S, Dq = q.shape
    Dh = attn.shape[-1]
    pack = params["pack"]
    assert (Dq, Dh) == (params["dq"], params["dh"])
    Dq_p, Dh_p = pack * Dq, pack * Dh
    rows = B * S

    # Pad rows only to the packing granularity (pack logical rows per physical
    # row, 8 sublanes) -- at most pack*8-1 extra rows, never a full tile.
    row_align = pack * 8
    padded_rows = _round_up(rows, row_align)
    q2 = q.reshape(rows, Dq)
    a2 = attn.reshape(rows, Dh)
    if padded_rows != rows:
        q2 = jnp.pad(q2, ((0, padded_rows - rows), (0, 0)))
        a2 = jnp.pad(a2, ((0, padded_rows - rows), (0, 0)))
    packed_rows = padded_rows // pack
    # Zero-copy row-major repack: (R, D) -> (R/pack, pack*D).
    qp = q2.reshape(packed_rows, Dq_p)
    ap = a2.reshape(packed_rows, Dh_p)

    # Row tile (packed rows): big (HBM-bound kernel), capped by the VMEM
    # streaming budget and the problem size; always a multiple of 8 sublanes.
    # The last grid block may be ragged -- Pallas masks it.
    q_lane_bytes = _round_up(Dq_p, 128) * 4              # q pads to 128 lanes in VMEM
    per_row_bytes = 2 * (q_lane_bytes + 2 * Dh_p * 4)    # double-buffered q+attn+out
    cap = max(8, (stream_budget_bytes // per_row_bytes) // 8 * 8)
    tile_m = max(8, min(_round_up(tile_rows, 8), cap, _round_up(packed_rows, 8)))

    grid = (pl.cdiv(packed_rows, tile_m),)

    out_p = pl.pallas_call(
        _addnorm_q_kernel,
        out_shape=jax.ShapeDtypeStruct((packed_rows, Dh_p), attn.dtype),
        grid_spec=pltpu.PrefetchScalarGridSpec(
            num_scalar_prefetch=0,
            grid=grid,
            in_specs=[
                pl.BlockSpec((tile_m, Dq_p), lambda i: (i, 0)),   # q (packed rows)
                pl.BlockSpec((Dq_p, Dh_p), lambda i: (0, 0)),     # weight (resident)
                pl.BlockSpec((1, Dh_p), lambda i: (0, 0)),        # bias (packed)
                pl.BlockSpec((1, Dh_p), lambda i: (0, 0)),        # gamma (packed)
                pl.BlockSpec((1, Dh_p), lambda i: (0, 0)),        # beta (packed)
                pl.BlockSpec((Dh_p, Dh_p), lambda i: (0, 0)),     # segment-mean matrix
                pl.BlockSpec((tile_m, Dh_p), lambda i: (i, 0)),   # attn (packed rows)
            ],
            out_specs=pl.BlockSpec((tile_m, Dh_p), lambda i: (i, 0)),
        ),
        compiler_params=pltpu.CompilerParams(
            dimension_semantics=("parallel",),
            vmem_limit_bytes=vmem_limit_bytes,
        ),
    )(qp, params["wp"], params["bp"], params["gp"], params["betap"],
      params["mseg"], ap)

    out = out_p.reshape(padded_rows, Dh)[:rows]
    return out.reshape(B, S, Dh)


def _reference(q, attn, w, b, gamma, beta):
    x = attn + (jnp.einsum("bsq,qh->bsh", q, w, precision=_HIGHEST) + b)
    mean = jnp.mean(x, axis=-1, keepdims=True)
    var = jnp.mean((x - mean) ** 2, axis=-1, keepdims=True)
    y = (x - mean) * jax.lax.rsqrt(var + LN_EPS)
    return y * gamma + beta


if __name__ == "__main__":
    B, S = 2, 8
    query_size = 16
    num_hiddens = 32   # normalized_shape == num_hiddens

    key = jax.random.PRNGKey(0)
    k_q, k_a, k_w, k_b = jax.random.split(key, 4)

    q = jax.random.normal(k_q, (B, S, query_size), dtype=jnp.float32)
    attn = jax.random.normal(k_a, (B, S, num_hiddens), dtype=jnp.float32)

    # nn.Linear init (weight stored transposed as (Dq, Dh)); nn.LayerNorm affine init.
    lim = 1.0 / (query_size ** 0.5)
    w = jax.random.uniform(k_w, (query_size, num_hiddens), minval=-lim, maxval=lim,
                           dtype=jnp.float32)
    b = jax.random.uniform(k_b, (num_hiddens,), minval=-lim, maxval=lim,
                           dtype=jnp.float32)
    gamma = jnp.ones((num_hiddens,), dtype=jnp.float32)
    beta = jnp.zeros((num_hiddens,), dtype=jnp.float32)

    # One-time parameter packing (hoisted out of the per-call path).
    pack = _choose_pack(query_size, num_hiddens)
    params = prepare_addnorm_q_params(w, b, gamma, beta, pack=pack)

    out = addnorm_q(q, attn, params)
    out = jax.block_until_ready(out)

    ref = _reference(q, attn, w, b, gamma, beta)
    assert out.shape == (B, S, num_hiddens)
    # f32 accumulation-order tolerance between kernel and XLA reference.
    assert jnp.allclose(out, ref, atol=1e-4, rtol=1e-4), "mismatch vs reference"

    print("KERNEL_OK")
</pallas_src>

<mosaic_0001>
module attributes {stable_mosaic.version = 11 : i64} {
  func.func @_addnorm_q_kernel(%arg0: i32, %arg1: memref<8x128xf32, #tpu.memory_space<vmem>>, %arg2: memref<128x256xf32, #tpu.memory_space<vmem>>, %arg3: memref<1x256xf32, #tpu.memory_space<vmem>>, %arg4: memref<1x256xf32, #tpu.memory_space<vmem>>, %arg5: memref<1x256xf32, #tpu.memory_space<vmem>>, %arg6: memref<256x256xf32, #tpu.memory_space<vmem>>, %arg7: memref<8x256xf32, #tpu.memory_space<vmem>>, %arg8: memref<8x256xf32, #tpu.memory_space<vmem>>) attributes {dimension_semantics = [#tpu.dimension_semantics<parallel>], iteration_bounds = array<i64: 1>, scalar_prefetch = 0 : i64, scratch_operands = 0 : i64, tpu.core_type = #tpu.core_type<tc>, window_params = [{transform_indices = @transform_0, window_bounds = array<i64: 8, 128>}, {pipeline_mode = #tpu.pipeline_mode<synchronous>, transform_indices = @transform_1, window_bounds = array<i64: 128, 256>}, {pipeline_mode = #tpu.pipeline_mode<synchronous>, transform_indices = @transform_2, window_bounds = array<i64: 1, 256>}, {pipeline_mode = #tpu.pipeline_mode<synchronous>, transform_indices = @transform_3, window_bounds = array<i64: 1, 256>}, {pipeline_mode = #tpu.pipeline_mode<synchronous>, transform_indices = @transform_4, window_bounds = array<i64: 1, 256>}, {pipeline_mode = #tpu.pipeline_mode<synchronous>, transform_indices = @transform_5, window_bounds = array<i64: 256, 256>}, {transform_indices = @transform_6, window_bounds = array<i64: 8, 256>}, {transform_indices = @transform_7, window_bounds = array<i64: 8, 256>}]} {
    %c0 = arith.constant 0 : index
    %c0_0 = arith.constant 0 : index
    %0 = vector.load %arg1[%c0, %c0_0] : memref<8x128xf32, #tpu.memory_space<vmem>>, vector<8x128xf32>
    %c0_1 = arith.constant 0 : index
    %c0_2 = arith.constant 0 : index
    %1 = vector.load %arg2[%c0_1, %c0_2] : memref<128x256xf32, #tpu.memory_space<vmem>>, vector<128x256xf32>
    %cst = arith.constant dense<0.000000e+00> : vector<8x256xf32>
    %2 = tpu.matmul %0, %1, %cst {dimension_numbers = #tpu.dot_dimension_numbers<[1], [0], [0], [1], [0, 0, 1, 1], [], []>, precision = #tpu.contract_precision<fp32>} : vector<8x128xf32>, vector<128x256xf32>, vector<8x256xf32> -> vector<8x256xf32>
    %c0_3 = arith.constant 0 : index
    %c0_4 = arith.constant 0 : index
    %3 = vector.load %arg3[%c0_3, %c0_4] : memref<1x256xf32, #tpu.memory_space<vmem>>, vector<1x256xf32>
    %4 = vector.broadcast %3 : vector<1x256xf32> to vector<8x256xf32>
    %5 = arith.addf %2, %4 : vector<8x256xf32>
    %c0_5 = arith.constant 0 : index
    %c0_6 = arith.constant 0 : index
    %6 = vector.load %arg7[%c0_5, %c0_6] : memref<8x256xf32, #tpu.memory_space<vmem>>, vector<8x256xf32>
    %7 = arith.addf %5, %6 : vector<8x256xf32>
    %c0_7 = arith.constant 0 : index
    %c0_8 = arith.constant 0 : index
    %8 = vector.load %arg6[%c0_7, %c0_8] : memref<256x256xf32, #tpu.memory_space<vmem>>, vector<256x256xf32>
    %cst_9 = arith.constant dense<0.000000e+00> : vector<8x256xf32>
    %9 = tpu.matmul %7, %8, %cst_9 {dimension_numbers = #tpu.dot_dimension_numbers<[1], [0], [0], [1], [0, 0, 1, 1], [], []>, precision = #tpu.contract_precision<fp32>} : vector<8x256xf32>, vector<256x256xf32>, vector<8x256xf32> -> vector<8x256xf32>
    %10 = arith.subf %7, %9 : vector<8x256xf32>
    %11 = arith.mulf %10, %10 : vector<8x256xf32>
    %c0_10 = arith.constant 0 : index
    %c0_11 = arith.constant 0 : index
    %12 = vector.load %arg6[%c0_10, %c0_11] : memref<256x256xf32, #tpu.memory_space<vmem>>, vector<256x256xf32>
    %cst_12 = arith.constant dense<0.000000e+00> : vector<8x256xf32>
    %13 = tpu.matmul %11, %12, %cst_12 {dimension_numbers = #tpu.dot_dimension_numbers<[1], [0], [0], [1], [0, 0, 1, 1], [], []>, precision = #tpu.contract_precision<fp32>} : vector<8x256xf32>, vector<256x256xf32>, vector<8x256xf32> -> vector<8x256xf32>
    %cst_13 = arith.constant 9.99999974E-6 : f32
    %14 = vector.broadcast %cst_13 : f32 to vector<8x256xf32>
    %15 = arith.addf %13, %14 : vector<8x256xf32>
    %16 = math.rsqrt %15 : vector<8x256xf32>
    %17 = arith.mulf %10, %16 : vector<8x256xf32>
    %c0_14 = arith.constant 0 : index
    %c0_15 = arith.constant 0 : index
    %18 = vector.load %arg4[%c0_14, %c0_15] : memref<1x256xf32, #tpu.memory_space<vmem>>, vector<1x256xf32>
    %19 = vector.broadcast %18 : vector<1x256xf32> to vector<8x256xf32>
    %20 = arith.mulf %17, %19 : vector<8x256xf32>
    %c0_16 = arith.constant 0 : index
    %c0_17 = arith.constant 0 : index
    %21 = vector.load %arg5[%c0_16, %c0_17] : memref<1x256xf32, #tpu.memory_space<vmem>>, vector<1x256xf32>
    %22 = vector.broadcast %21 : vector<1x256xf32> to vector<8x256xf32>
    %23 = arith.addf %20, %22 : vector<8x256xf32>
    %c0_18 = arith.constant 0 : index
    %c0_19 = arith.constant 0 : index
    %24 = vector.load %arg8[%c0_18, %c0_19] : memref<8x256xf32, #tpu.memory_space<vmem>>, vector<8x256xf32>
    tpu.vector_store %arg8[%c0_18, %c0_19], %23 {strides = array<i32>} : memref<8x256xf32, #tpu.memory_space<vmem>>, vector<8x256xf32>,
    return
  }
  func.func @transform_0(%arg0: i32) -> (i32, i32) {
    %c0_i32 = arith.constant 0 : i32
    %c0_i32_0 = arith.constant 0 : i32
    return %arg0, %c0_i32 : i32, i32
  }
  func.func @transform_1(%arg0: i32) -> (i32, i32) {
    %c0_i32 = arith.constant 0 : i32
    %c0_i32_0 = arith.constant 0 : i32
    %c0_i32_1 = arith.constant 0 : i32
    return %c0_i32, %c0_i32_0 : i32, i32
  }
  func.func @transform_2(%arg0: i32) -> (i32, i32) {
    %c0_i32 = arith.constant 0 : i32
    %c0_i32_0 = arith.constant 0 : i32
    %c0_i32_1 = arith.constant 0 : i32
    return %c0_i32, %c0_i32_0 : i32, i32
  }
  func.func @transform_3(%arg0: i32) -> (i32, i32) {
    %c0_i32 = arith.constant 0 : i32
    %c0_i32_0 = arith.constant 0 : i32
    %c0_i32_1 = arith.constant 0 : i32
    return %c0_i32, %c0_i32_0 : i32, i32
  }
  func.func @transform_4(%arg0: i32) -> (i32, i32) {
    %c0_i32 = arith.constant 0 : i32
    %c0_i32_0 = arith.constant 0 : i32
    %c0_i32_1 = arith.constant 0 : i32
    return %c0_i32, %c0_i32_0 : i32, i32
  }
  func.func @transform_5(%arg0: i32) -> (i32, i32) {
    %c0_i32 = arith.constant 0 : i32
    %c0_i32_0 = arith.constant 0 : i32
    %c0_i32_1 = arith.constant 0 : i32
    return %c0_i32, %c0_i32_0 : i32, i32
  }
  func.func @transform_6(%arg0: i32) -> (i32, i32) {
    %c0_i32 = arith.constant 0 : i32
    %c0_i32_0 = arith.constant 0 : i32
    return %arg0, %c0_i32 : i32, i32
  }
  func.func @transform_7(%arg0: i32) -> (i32, i32) {
    %c0_i32 = arith.constant 0 : i32
    %c0_i32_0 = arith.constant 0 : i32
    return %arg0, %c0_i32 : i32, i32
  }
}

</mosaic_0001>

<llo_original>
// kernel: tpu_custom_call.1
$region0: #{tpu_custom_call.1}
  #allocation0 [shape = 'u32[]', space=smem, size = 0x4, offset = 0x4, fixed_abs, tag = 'smem constant byte address 0x4 - core index']
  #allocation1 [shape = 'u32[144,128]{1,0:T(1,128)}', space=vmem, size = 0x12000, scoped, tag = 'internal scratch']
  %s0 = inlined_call_operand.hbm [shape: f32[8,128], index: 0, kind: input, shape index: {}]
  %s1 = inlined_call_operand.hbm [shape: f32[128,256], index: 1, kind: input, shape index: {}]
  %s2 = inlined_call_operand.vmem [shape: f32[1,256], index: 2, kind: input, shape index: {}]
  %s3 = inlined_call_operand.vmem [shape: f32[1,256], index: 3, kind: input, shape index: {}]
  %s4 = inlined_call_operand.vmem [shape: f32[1,256], index: 4, kind: input, shape index: {}]
  %s5 = inlined_call_operand.hbm [shape: f32[256,256], index: 5, kind: input, shape index: {}]
  %s6 = inlined_call_operand.vmem [shape: f32[8,256], index: 6, kind: input, shape index: {}]
  %s7 = inlined_call_operand.hbm [shape: f32[8,256], index: 7, kind: output, shape index: {}]
  %s8 = sld [smem:[#allocation0]]
  $region50: #{tpu_custom_call.1} parent=0
    _
  %s10 = ssub.s32 1, %s8
  %s11 = scalar_select 0, %s10, %s8
  $region1: #{tpu_custom_call.1} parent=0
    #allocation2 [shape = 'u8[4096]{0}', space=vmem, size = 0x1000, scoped, tag = 'input window, operand 0, single buffered']
    #allocation3 [shape = 's32[1]{0}', space=sflag, size = 0x4, scoped, tag = 'scoped memory for tpu_custom_call.1']
    #allocation4 [shape = 's32[1]{0}', space=sflag, size = 0x4, scoped, tag = 'scoped memory for tpu_custom_call.1']
    #allocation5 [shape = 'u8[131072]{0}', space=vmem, size = 0x20000, scoped, tag = 'input window, operand 1, single buffered']
    #allocation6 [shape = 's32[1]{0}', space=sflag, size = 0x4, scoped, tag = 'scoped memory for tpu_custom_call.1']
    #allocation7 [shape = 'u8[262144]{0}', space=vmem, size = 0x40000, scoped, tag = 'input window, operand 5, single buffered']
    #allocation8 [shape = 'u8[8192]{0}', space=vmem, size = 0x2000, scoped, tag = 'output window, operand 0, single buffered']
    %12 = vsyncpa [#allocation3], 0
    %13 = vsyncpa [#allocation6], 0
    %14 = vsyncpa [#allocation4], 0
    // Predicated region
    $region2: #{tpu_custom_call.1} parent=1 // pred_check
      _
    $region3: #{tpu_custom_call.1} parent=1 // pred_check_branch
      %16 = sbr.rel (0) target = $region5
    $region4: #{tpu_custom_call.1} parent=1 // pred_region
      %s18 = ssub.s32 128, 128
      %19 = vsyncadd [#allocation3], %s18
      %s21 = sshll.u32 [#allocation2], 4
      %s22 = int_to_ptr.vmem [resolvable:$true] %s21
      %24 = dma.hbm_to_vmem [thread:$0]  %s0, 128, %s22, [#allocation3]
    $region5: #{tpu_custom_call.1} parent=1 // pred_fallthru
      _
    // Predicated region
    $region6: #{tpu_custom_call.1} parent=1 // pred_check
      _
    $region7: #{tpu_custom_call.1} parent=1 // pred_check_branch
      %26 = sbr.rel (0) target = $region9
    $region8: #{tpu_custom_call.1} parent=1 // pred_region
      %s28 = ssub.s32 4096, 4096
      %29 = vsyncadd [#allocation6], %s28
      %s30 = sshll.u32 [#allocation5], 4
      %s31 = int_to_ptr.vmem [resolvable:$true] %s30
      %36 = dma.hbm_to_vmem [thread:$0]  %s1, 4096, %s31, [#allocation6], 256, 256, 16
    $region9: #{tpu_custom_call.1} parent=1 // pred_fallthru
      _
    // Predicated region
    $region10: #{tpu_custom_call.1} parent=1 // pred_check
      _
    $region11: #{tpu_custom_call.1} parent=1 // pred_check_branch
      %38 = sbr.rel (0) target = $region13
    $region12: #{tpu_custom_call.1} parent=1 // pred_region
      _
    $region13: #{tpu_custom_call.1} parent=1 // pred_fallthru
      _
    // Predicated region
    $region14: #{tpu_custom_call.1} parent=1 // pred_check
      _
    $region15: #{tpu_custom_call.1} parent=1 // pred_check_branch
      %40 = sbr.rel (0) target = $region17
    $region16: #{tpu_custom_call.1} parent=1 // pred_region
      _
    $region17: #{tpu_custom_call.1} parent=1 // pred_fallthru
      _
    // Predicated region
    $region18: #{tpu_custom_call.1} parent=1 // pred_check
      _
    $region19: #{tpu_custom_call.1} parent=1 // pred_check_branch
      %42 = sbr.rel (0) target = $region21
    $region20: #{tpu_custom_call.1} parent=1 // pred_region
      _
    $region21: #{tpu_custom_call.1} parent=1 // pred_fallthru
      _
    // Predicated region
    $region22: #{tpu_custom_call.1} parent=1 // pred_check
      _
    $region23: #{tpu_custom_call.1} parent=1 // pred_check_branch
      %44 = sbr.rel (0) target = $region25
    $region24: #{tpu_custom_call.1} parent=1 // pred_region
      %s46 = ssub.s32 8192, 8192
      %47 = vsyncadd [#allocation6], %s46
      %s48 = sshll.u32 [#allocation7], 4
      %s49 = int_to_ptr.vmem [resolvable:$true] %s48
      %54 = dma.hbm_to_vmem [thread:$0]  %s5, 8192, %s49, [#allocation6], 256, 256, 16
    $region25: #{tpu_custom_call.1} parent=1 // pred_fallthru
      _
    // Predicated region
    $region26: #{tpu_custom_call.1} parent=1 // pred_check
      _
    $region27: #{tpu_custom_call.1} parent=1 // pred_check_branch
      %56 = sbr.rel (0) target = $region29
    $region28: #{tpu_custom_call.1} parent=1 // pred_region
      _
    $region29: #{tpu_custom_call.1} parent=1 // pred_fallthru
      _
    // Predicated region
    $region30: #{tpu_custom_call.1} parent=1 // pred_check
      _
    $region31: #{tpu_custom_call.1} parent=1 // pred_check_branch
      %58 = sbr.rel (0) target = $region33
    $region32: #{tpu_custom_call.1} parent=1 // pred_region
      %59 = dma.done [#allocation3], 128
    $region33: #{tpu_custom_call.1} parent=1 // pred_fallthru
      _
    // Predicated region
    $region34: #{tpu_custom_call.1} parent=1 // pred_check
      _
    $region35: #{tpu_custom_call.1} parent=1 // pred_check_branch
      %61 = sbr.rel (0) target = $region37
    $region36: #{tpu_custom_call.1} parent=1 // pred_region
      %62 = dma.done [#allocation6], 4096
    $region37: #{tpu_custom_call.1} parent=1 // pred_fallthru
      _
    // Predicated region
    $region38: #{tpu_custom_call.1} parent=1 // pred_check
      _
    $region39: #{tpu_custom_call.1} parent=1 // pred_check_branch
      %64 = sbr.rel (0) target = $region41
    $region40: #{tpu_custom_call.1} parent=1 // pred_region
      %65 = dma.done [#allocation6], 8192
    $region41: #{tpu_custom_call.1} parent=1 // pred_fallthru
      _
    %v66 = vld [vmem:[#allocation2] sm:$0xff]
    %v67 = vld [vmem:[#allocation5] sm:$0xff]
    %v68 = vld [vmem:[#allocation5 + $0x8] sm:$0xff]
    %v69 = vld [vmem:[#allocation5 + $0x10] sm:$0xff]
    %v70 = vld [vmem:[#allocation5 + $0x18] sm:$0xff]
    %v71 = vld [vmem:[#allocation5 + $0x20] sm:$0xff]
    %v72 = vld [vmem:[#allocation5 + $0x28] sm:$0xff]
    %v73 = vld [vmem:[#allocation5 + $0x30] sm:$0xff]
    %v74 = vld [vmem:[#allocation5 + $0x38] sm:$0xff]
    %v75 = vld [vmem:[#allocation5 + $0x40] sm:$0xff]
    %v76 = vld [vmem:[#allocation5 + $0x48] sm:$0xff]
    %v77 = vld [vmem:[#allocation5 + $0x50] sm:$0xff]
    %v78 = vld [vmem:[#allocation5 + $0x58] sm:$0xff]
    %v79 = vld [vmem:[#allocation5 + $0x60] sm:$0xff]
    %v80 = vld [vmem:[#allocation5 + $0x68] sm:$0xff]
    %v81 = vld [vmem:[#allocation5 + $0x70] sm:$0xff]
    %v82 = vld [vmem:[#allocation5 + $0x78] sm:$0xff]
    %v83 = vld [vmem:[#allocation5 + $0x80] sm:$0xff]
    %v84 = vld [vmem:[#allocation5 + $0x88] sm:$0xff]
    %v85 = vld [vmem:[#allocation5 + $0x90] sm:$0xff]
    %v86 = vld [vmem:[#allocation5 + $0x98] sm:$0xff]
    %v87 = vld [vmem:[#allocation5 + $0xa0] sm:$0xff]
    %v88 = vld [vmem:[#allocation5 + $0xa8] sm:$0xff]
    %v89 = vld [vmem:[#allocation5 + $0xb0] sm:$0xff]
    %v90 = vld [vmem:[#allocation5 + $0xb8] sm:$0xff]
    %v91 = vld [vmem:[#allocation5 + $0xc0] sm:$0xff]
    %v92 = vld [vmem:[#allocation5 + $0xc8] sm:$0xff]
    %v93 = vld [vmem:[#allocation5 + $0xd0] sm:$0xff]
    %v94 = vld [vmem:[#allocation5 + $0xd8] sm:$0xff]
    %v95 = vld [vmem:[#allocation5 + $0xe0] sm:$0xff]
    %v96 = vld [vmem:[#allocation5 + $0xe8] sm:$0xff]
    %v97 = vld [vmem:[#allocation5 + $0xf0] sm:$0xff]
    %v98 = vld [vmem:[#allocation5 + $0xf8] sm:$0xff]
    %v99 = vld [vmem:[%s2] sm:$0x3]
    %v101 = vlaneseq
    %v102 = vshrl.u32 %v101, 7
    %v103 = vsub.s32 0, %v102
    %v104 = vrot.slane %v99, %v103
    %v105 = vlaneseq
    %v106 = vshrl.u32 %v105, 7
    %v107 = vsub.s32 1, %v106
    %v108 = vrot.slane %v99, %v107
    %v111 = vand.u32 %v68, 4294901760
    %112 = vmatprep.subr.mxu0 %v111
    %v113 = vand.u32 %v67, 4294901760
    %114 = vmatpush1.msra.mxu0 %v113
    %v115 = vand.u32 %v70, 4294901760
    %116 = vmatprep.subr.mxu0 %v115
    %v117 = vand.u32 %v69, 4294901760
    %118 = vmatpush1.msra.mxu0 %v117
    %v119 = vand.u32 %v72, 4294901760
    %120 = vmatprep.subr.mxu0 %v119
    %v121 = vand.u32 %v71, 4294901760
    %122 = vmatpush1.msra.mxu0 %v121
    %v123 = vand.u32 %v74, 4294901760
    %124 = vmatprep.subr.mxu0 %v123
    %v125 = vand.u32 %v73, 4294901760
    %126 = vmatpush1.msra.mxu0 %v125
    %v127 = vand.u32 %v76, 4294901760
    %128 = vmatprep.subr.mxu0 %v127
    %v129 = vand.u32 %v75, 4294901760
    %130 = vmatpush1.msra.mxu0 %v129
    %v131 = vand.u32 %v78, 4294901760
    %132 = vmatprep.subr.mxu0 %v131
    %v133 = vand.u32 %v77, 4294901760
    %134 = vmatpush1.msra.mxu0 %v133
    %v135 = vand.u32 %v80, 4294901760
    %136 = vmatprep.subr.mxu0 %v135
    %v137 = vand.u32 %v79, 4294901760
    %138 = vmatpush1.msra.mxu0 %v137
    %v139 = vand.u32 %v82, 4294901760
    %140 = vmatprep.subr.mxu0 %v139
    %v141 = vand.u32 %v81, 4294901760
    %142 = vmatpush1.msra.mxu0 %v141
    %v143 = vand.u32 %v84, 4294901760
    %144 = vmatprep.subr.mxu0 %v143
    %v145 = vand.u32 %v83, 4294901760
    %146 = vmatpush1.msra.mxu0 %v145
    %v147 = vand.u32 %v86, 4294901760
    %148 = vmatprep.subr.mxu0 %v147
    %v149 = vand.u32 %v85, 4294901760
    %150 = vmatpush1.msra.mxu0 %v149
    %v151 = vand.u32 %v88, 4294901760
    %152 = vmatprep.subr.mxu0 %v151
    %v153 = vand.u32 %v87, 4294901760
    %154 = vmatpush1.msra.mxu0 %v153
    %v155 = vand.u32 %v90, 4294901760
    %156 = vmatprep.subr.mxu0 %v155
    %v157 = vand.u32 %v89, 4294901760
    %158 = vmatpush1.msra.mxu0 %v157
    %v159 = vand.u32 %v92, 4294901760
    %160 = vmatprep.subr.mxu0 %v159
    %v161 = vand.u32 %v91, 4294901760
    %162 = vmatpush1.msra.mxu0 %v161
    %v163 = vand.u32 %v94, 4294901760
    %164 = vmatprep.subr.mxu0 %v163
    %v165 = vand.u32 %v93, 4294901760
    %166 = vmatpush1.msra.mxu0 %v165
    %v167 = vand.u32 %v96, 4294901760
    %168 = vmatprep.subr.mxu0 %v167
    %v169 = vand.u32 %v95, 4294901760
    %170 = vmatpush1.msra.mxu0 %v169
    %v171 = vand.u32 %v98, 4294901760
    %172 = vmatprep.subr.mxu0 %v171
    %v173 = vand.u32 %v97, 4294901760
    %174 = vmatpush1.msra.mxu0 %v173
    %175 = vmatprep.subr.mxu0 0.0
    %176 = vmatpush1.msra.mxu0 0.0
    %177 = vmatprep.subr.mxu0 0.0
    %178 = vmatpush1.msra.mxu0 0.0
    %179 = vmatprep.subr.mxu0 0.0
    %180 = vmatpush1.msra.mxu0 0.0
    %181 = vmatprep.subr.mxu0 0.0
    %182 = vmatpush1.msra.mxu0 0.0
    %183 = vmatprep.subr.mxu0 0.0
    %184 = vmatpush1.msra.mxu0 0.0
    %185 = vmatprep.subr.mxu0 0.0
    %186 = vmatpush1.msra.mxu0 0.0
    %187 = vmatprep.subr.mxu0 0.0
    %188 = vmatpush1.msra.mxu0 0.0
    %189 = vmatprep.subr.mxu0 0.0
    %190 = vmatpush1.msra.mxu0 0.0
    %191 = vmatprep.subr.mxu0 0.0
    %192 = vmatpush1.msra.mxu0 0.0
    %193 = vmatprep.subr.mxu0 0.0
    %194 = vmatpush1.msra.mxu0 0.0
    %195 = vmatprep.subr.mxu0 0.0
    %196 = vmatpush1.msra.mxu0 0.0
    %197 = vmatprep.subr.mxu0 0.0
    %198 = vmatpush1.msra.mxu0 0.0
    %199 = vmatprep.subr.mxu0 0.0
    %200 = vmatpush1.msra.mxu0 0.0
    %201 = vmatprep.subr.mxu0 0.0
    %202 = vmatpush1.msra.mxu0 0.0
    %203 = vmatprep.subr.mxu0 0.0
    %204 = vmatpush1.msra.mxu0 0.0
    %205 = vmatprep.subr.mxu0 0.0
    %206 = vmatpush1.msra.mxu0 0.0
    %207 = vmatprep.mubr.f32.mxu0 0.0
    %v208 = vand.u32 %v66, 4294901760
    %v209 = vsub.f32 %v66, %v208
    %v210 = vand.u32 %v209, 4294901760
    %v211 = vsub.f32 %v209, %v210
    %v212 = vand.u32 %v211, 4294901760
    %213 = vmatmul.mubr.f32.gmra.mrb[0].mxu0 %v212
    %v214 = vpop.f32.mrb[0].mxu0
    %v215 = vadd.f32 %v104, %v214
    %v216 = vpop.f32.mrb[0].mxu0
    %v217 = vadd.f32 %v108, %v216
    %218 = vdwg.mxu0
    %v219 = vand.u32 %v68, 4294901760
    %v220 = vsub.f32 %v68, %v219
    %v221 = vand.u32 %v220, 4294901760
    %v222 = vsub.f32 %v220, %v221
    %v223 = vand.u32 %v222, 4294901760
    %224 = vmatprep.subr.mxu0 %v223
    %v225 = vand.u32 %v67, 4294901760
    %v226 = vsub.f32 %v67, %v225
    %v227 = vand.u32 %v226, 4294901760
    %v228 = vsub.f32 %v226, %v227
    %v229 = vand.u32 %v228, 4294901760
    %230 = vmatpush1.msra.mxu0 %v229
    %v231 = vand.u32 %v70, 4294901760
    %v232 = vsub.f32 %v70, %v231
    %v233 = vand.u32 %v232, 4294901760
    %v234 = vsub.f32 %v232, %v233
    %v235 = vand.u32 %v234, 4294901760
    %236 = vmatprep.subr.mxu0 %v235
    %v237 = vand.u32 %v69, 4294901760
    %v238 = vsub.f32 %v69, %v237
    %v239 = vand.u32 %v238, 4294901760
    %v240 = vsub.f32 %v238, %v239
    %v241 = vand.u32 %v240, 4294901760
    %242 = vmatpush1.msra.mxu0 %v241
    %v243 = vand.u32 %v72, 4294901760
    %v244 = vsub.f32 %v72, %v243
    %v245 = vand.u32 %v244, 4294901760
    %v246 = vsub.f32 %v244, %v245
    %v247 = vand.u32 %v246, 4294901760
    %248 = vmatprep.subr.mxu0 %v247
    %v249 = vand.u32 %v71, 4294901760
    %v250 = vsub.f32 %v71, %v249
    %v251 = vand.u32 %v250, 4294901760
    %v252 = vsub.f32 %v250, %v251
    %v253 = vand.u32 %v252, 4294901760
    %254 = vmatpush1.msra.mxu0 %v253
    %v255 = vand.u32 %v74, 4294901760
    %v256 = vsub.f32 %v74, %v255
    %v257 = vand.u32 %v256, 4294901760
    %v258 = vsub.f32 %v256, %v257
    %v259 = vand.u32 %v258, 4294901760
    %260 = vmatprep.subr.mxu0 %v259
    %v261 = vand.u32 %v73, 4294901760
    %v262 = vsub.f32 %v73, %v261
    %v263 = vand.u32 %v262, 4294901760
    %v264 = vsub.f32 %v262, %v263
    %v265 = vand.u32 %v264, 4294901760
    %266 = vmatpush1.msra.mxu0 %v265
    %v267 = vand.u32 %v76, 4294901760
    %v268 = vsub.f32 %v76, %v267
    %v269 = vand.u32 %v268, 4294901760
    %v270 = vsub.f32 %v268, %v269
    %v271 = vand.u32 %v270, 4294901760
    %272 = vmatprep.subr.mxu0 %v271
    %v273 = vand.u32 %v75, 4294901760
    %v274 = vsub.f32 %v75, %v273
    %v275 = vand.u32 %v274, 4294901760
    %v276 = vsub.f32 %v274, %v275
    %v277 = vand.u32 %v276, 4294901760
    %278 = vmatpush1.msra.mxu0 %v277
    %v279 = vand.u32 %v78, 4294901760
    %v280 = vsub.f32 %v78, %v279
    %v281 = vand.u32 %v280, 4294901760
    %v282 = vsub.f32 %v280, %v281
    %v283 = vand.u32 %v282, 4294901760
    %284 = vmatprep.subr.mxu0 %v283
    %v285 = vand.u32 %v77, 4294901760
    %v286 = vsub.f32 %v77, %v285
    %v287 = vand.u32 %v286, 4294901760
    %v288 = vsub.f32 %v286, %v287
    %v289 = vand.u32 %v288, 4294901760
    %290 = vmatpush1.msra.mxu0 %v289
    %v291 = vand.u32 %v80, 4294901760
    %v292 = vsub.f32 %v80, %v291
    %v293 = vand.u32 %v292, 4294901760
    %v294 = vsub.f32 %v292, %v293
    %v295 = vand.u32 %v294, 4294901760
    %296 = vmatprep.subr.mxu0 %v295
    %v297 = vand.u32 %v79, 4294901760
    %v298 = vsub.f32 %v79, %v297
    %v299 = vand.u32 %v298, 4294901760
    %v300 = vsub.f32 %v298, %v299
    %v301 = vand.u32 %v300, 4294901760
    %302 = vmatpush1.msra.mxu0 %v301
    %v303 = vand.u32 %v82, 4294901760
    %v304 = vsub.f32 %v82, %v303
    %v305 = vand.u32 %v304, 4294901760
    %v306 = vsub.f32 %v304, %v305
    %v307 = vand.u32 %v306, 4294901760
    %308 = vmatprep.subr.mxu0 %v307
    %v309 = vand.u32 %v81, 4294901760
    %v310 = vsub.f32 %v81, %v309
    %v311 = vand.u32 %v310, 4294901760
    %v312 = vsub.f32 %v310, %v311
    %v313 = vand.u32 %v312, 4294901760
    %314 = vmatpush1.msra.mxu0 %v313
    %v315 = vand.u32 %v84, 4294901760
    %v316 = vsub.f32 %v84, %v315
    %v317 = vand.u32 %v316, 4294901760
    %v318 = vsub.f32 %v316, %v317
    %v319 = vand.u32 %v318, 4294901760
    %320 = vmatprep.subr.mxu0 %v319
    %v321 = vand.u32 %v83, 4294901760
    %v322 = vsub.f32 %v83, %v321
    %v323 = vand.u32 %v322, 4294901760
    %v324 = vsub.f32 %v322, %v323
    %v325 = vand.u32 %v324, 4294901760
    %326 = vmatpush1.msra.mxu0 %v325
    %v327 = vand.u32 %v86, 4294901760
    %v328 = vsub.f32 %v86, %v327
    %v329 = vand.u32 %v328, 4294901760
    %v330 = vsub.f32 %v328, %v329
    %v331 = vand.u32 %v330, 4294901760
    %332 = vmatprep.subr.mxu0 %v331
    %v333 = vand.u32 %v85, 4294901760
    %v334 = vsub.f32 %v85, %v333
    %v335 = vand.u32 %v334, 4294901760
    %v336 = vsub.f32 %v334, %v335
    %v337 = vand.u32 %v336, 4294901760
    %338 = vmatpush1.msra.mxu0 %v337
    %v339 = vand.u32 %v88, 4294901760
    %v340 = vsub.f32 %v88, %v339
    %v341 = vand.u32 %v340, 4294901760
    %v342 = vsub.f32 %v340, %v341
    %v343 = vand.u32 %v342, 4294901760
    %344 = vmatprep.subr.mxu0 %v343
    %v345 = vand.u32 %v87, 4294901760
    %v346 = vsub.f32 %v87, %v345
    %v347 = vand.u32 %v346, 4294901760
    %v348 = vsub.f32 %v346, %v347
    %v349 = vand.u32 %v348, 4294901760
    %350 = vmatpush1.msra.mxu0 %v349
    %v351 = vand.u32 %v90, 4294901760
    %v352 = vsub.f32 %v90, %v351
    %v353 = vand.u32 %v352, 4294901760
    %v354 = vsub.f32 %v352, %v353
    %v355 = vand.u32 %v354, 4294901760
    %356 = vmatprep.subr.mxu0 %v355
    %v357 = vand.u32 %v89, 4294901760
    %v358 = vsub.f32 %v89, %v357
    %v359 = vand.u32 %v358, 4294901760
    %v360 = vsub.f32 %v358, %v359
    %v361 = vand.u32 %v360, 4294901760
    %362 = vmatpush1.msra.mxu0 %v361
    %v363 = vand.u32 %v92, 4294901760
    %v364 = vsub.f32 %v92, %v363
    %v365 = vand.u32 %v364, 4294901760
    %v366 = vsub.f32 %v364, %v365
    %v367 = vand.u32 %v366, 4294901760
    %368 = vmatprep.subr.mxu0 %v367
    %v369 = vand.u32 %v91, 4294901760
    %v370 = vsub.f32 %v91, %v369
    %v371 = vand.u32 %v370, 4294901760
    %v372 = vsub.f32 %v370, %v371
    %v373 = vand.u32 %v372, 4294901760
    %374 = vmatpush1.msra.mxu0 %v373
    %v375 = vand.u32 %v94, 4294901760
    %v376 = vsub.f32 %v94, %v375
    %v377 = vand.u32 %v376, 4294901760
    %v378 = vsub.f32 %v376, %v377
    %v379 = vand.u32 %v378, 4294901760
    %380 = vmatprep.subr.mxu0 %v379
    %v381 = vand.u32 %v93, 4294901760
    %v382 = vsub.f32 %v93, %v381
    %v383 = vand.u32 %v382, 4294901760
    %v384 = vsub.f32 %v382, %v383
    %v385 = vand.u32 %v384, 4294901760
    %386 = vmatpush1.msra.mxu0 %v385
    %v387 = vand.u32 %v96, 4294901760
    %v388 = vsub.f32 %v96, %v387
    %v389 = vand.u32 %v388, 4294901760
    %v390 = vsub.f32 %v388, %v389
    %v391 = vand.u32 %v390, 4294901760
    %392 = vmatprep.subr.mxu0 %v391
    %v393 = vand.u32 %v95, 4294901760
    %v394 = vsub.f32 %v95, %v393
    %v395 = vand.u32 %v394, 4294901760
    %v396 = vsub.f32 %v394, %v395
    %v397 = vand.u32 %v396, 4294901760
    %398 = vmatpush1.msra.mxu0 %v397
    %v399 = vand.u32 %v98, 4294901760
    %v400 = vsub.f32 %v98, %v399
    %v401 = vand.u32 %v400, 4294901760
    %v402 = vsub.f32 %v400, %v401
    %v403 = vand.u32 %v402, 4294901760
    %404 = vmatprep.subr.mxu0 %v403
    %v405 = vand.u32 %v97, 4294901760
    %v406 = vsub.f32 %v97, %v405
    %v407 = vand.u32 %v406, 4294901760
    %v408 = vsub.f32 %v406, %v407
    %v409 = vand.u32 %v408, 4294901760
    %410 = vmatpush1.msra.mxu0 %v409
    %411 = vmatprep.subr.mxu0 0.0
    %412 = vmatpush1.msra.mxu0 0.0
    %413 = vmatprep.subr.mxu0 0.0
    %414 = vmatpush1.msra.mxu0 0.0
    %415 = vmatprep.subr.mxu0 0.0
    %416 = vmatpush1.msra.mxu0 0.0
    %417 = vmatprep.subr.mxu0 0.0
    %418 = vmatpush1.msra.mxu0 0.0
    %419 = vmatprep.subr.mxu0 0.0
    %420 = vmatpush1.msra.mxu0 0.0
    %421 = vmatprep.subr.mxu0 0.0
    %422 = vmatpush1.msra.mxu0 0.0
    %423 = vmatprep.subr.mxu0 0.0
    %424 = vmatpush1.msra.mxu0 0.0
    %425 = vmatprep.subr.mxu0 0.0
    %426 = vmatpush1.msra.mxu0 0.0
    %427 = vmatprep.subr.mxu0 0.0
    %428 = vmatpush1.msra.mxu0 0.0
    %429 = vmatprep.subr.mxu0 0.0
    %430 = vmatpush1.msra.mxu0 0.0
    %431 = vmatprep.subr.mxu0 0.0
    %432 = vmatpush1.msra.mxu0 0.0
    %433 = vmatprep.subr.mxu0 0.0
    %434 = vmatpush1.msra.mxu0 0.0
    %435 = vmatprep.subr.mxu0 0.0
    %436 = vmatpush1.msra.mxu0 0.0
    %437 = vmatprep.subr.mxu0 0.0
    %438 = vmatpush1.msra.mxu0 0.0
    %439 = vmatprep.subr.mxu0 0.0
    %440 = vmatpush1.msra.mxu0 0.0
    %441 = vmatprep.subr.mxu0 0.0
    %442 = vmatpush1.msra.mxu0 0.0
    %443 = vmatprep.mubr.f32.mxu0 0.0
    %v444 = vand.u32 %v66, 4294901760
    %445 = vmatmul.mubr.f32.gmra.mrb[0].mxu0 %v444
    %v446 = vpop.f32.mrb[0].mxu0
    %v447 = vadd.f32 %v215, %v446
    %v448 = vpop.f32.mrb[0].mxu0
    %v449 = vadd.f32 %v217, %v448
    %450 = vdwg.mxu0
    %v451 = vand.u32 %v68, 4294901760
    %v452 = vsub.f32 %v68, %v451
    %453 = vmatprep.subr.mxu0 %v452
    %v454 = vand.u32 %v67, 4294901760
    %v455 = vsub.f32 %v67, %v454
    %456 = vmatpush1.msra.mxu0 %v455
    %v457 = vand.u32 %v70, 4294901760
    %v458 = vsub.f32 %v70, %v457
    %459 = vmatprep.subr.mxu0 %v458
    %v460 = vand.u32 %v69, 4294901760
    %v461 = vsub.f32 %v69, %v460
    %462 = vmatpush1.msra.mxu0 %v461
    %v463 = vand.u32 %v72, 4294901760
    %v464 = vsub.f32 %v72, %v463
    %465 = vmatprep.subr.mxu0 %v464
    %v466 = vand.u32 %v71, 4294901760
    %v467 = vsub.f32 %v71, %v466
    %468 = vmatpush1.msra.mxu0 %v467
    %v469 = vand.u32 %v74, 4294901760
    %v470 = vsub.f32 %v74, %v469
    %471 = vmatprep.subr.mxu0 %v470
    %v472 = vand.u32 %v73, 4294901760
    %v473 = vsub.f32 %v73, %v472
    %474 = vmatpush1.msra.mxu0 %v473
    %v475 = vand.u32 %v76, 4294901760
    %v476 = vsub.f32 %v76, %v475
    %477 = vmatprep.subr.mxu0 %v476
    %v478 = vand.u32 %v75, 4294901760
    %v479 = vsub.f32 %v75, %v478
    %480 = vmatpush1.msra.mxu0 %v479
    %v481 = vand.u32 %v78, 4294901760
    %v482 = vsub.f32 %v78, %v481
    %483 = vmatprep.subr.mxu0 %v482
    %v484 = vand.u32 %v77, 4294901760
    %v485 = vsub.f32 %v77, %v484
    %486 = vmatpush1.msra.mxu0 %v485
    %v487 = vand.u32 %v80, 4294901760
    %v488 = vsub.f32 %v80, %v487
    %489 = vmatprep.subr.mxu0 %v488
    %v490 = vand.u32 %v79, 4294901760
    %v491 = vsub.f32 %v79, %v490
    %492 = vmatpush1.msra.mxu0 %v491
    %v493 = vand.u32 %v82, 4294901760
    %v494 = vsub.f32 %v82, %v493
    %495 = vmatprep.subr.mxu0 %v494
    %v496 = vand.u32 %v81, 4294901760
    %v497 = vsub.f32 %v81, %v496
    %498 = vmatpush1.msra.mxu0 %v497
    %v499 = vand.u32 %v84, 4294901760
    %v500 = vsub.f32 %v84, %v499
    %501 = vmatprep.subr.mxu0 %v500
    %v502 = vand.u32 %v83, 4294901760
    %v503 = vsub.f32 %v83, %v502
    %504 = vmatpush1.msra.mxu0 %v503
    %v505 = vand.u32 %v86, 4294901760
    %v506 = vsub.f32 %v86, %v505
    %507 = vmatprep.subr.mxu0 %v506
    %v508 = vand.u32 %v85, 4294901760
    %v509 = vsub.f32 %v85, %v508
    %510 = vmatpush1.msra.mxu0 %v509
    %v511 = vand.u32 %v88, 4294901760
    %v512 = vsub.f32 %v88, %v511
    %513 = vmatprep.subr.mxu0 %v512
    %v514 = vand.u32 %v87, 4294901760
    %v515 = vsub.f32 %v87, %v514
    %516 = vmatpush1.msra.mxu0 %v515
    %v517 = vand.u32 %v90, 4294901760
    %v518 = vsub.f32 %v90, %v517
    %519 = vmatprep.subr.mxu0 %v518
    %v520 = vand.u32 %v89, 4294901760
    %v521 = vsub.f32 %v89, %v520
    %522 = vmatpush1.msra.mxu0 %v521
    %v523 = vand.u32 %v92, 4294901760
    %v524 = vsub.f32 %v92, %v523
    %525 = vmatprep.subr.mxu0 %v524
    %v526 = vand.u32 %v91, 4294901760
    %v527 = vsub.f32 %v91, %v526
    %528 = vmatpush1.msra.mxu0 %v527
    %v529 = vand.u32 %v94, 4294901760
    %v530 = vsub.f32 %v94, %v529
    %531 = vmatprep.subr.mxu0 %v530
    %v532 = vand.u32 %v93, 4294901760
    %v533 = vsub.f32 %v93, %v532
    %534 = vmatpush1.msra.mxu0 %v533
    %v535 = vand.u32 %v96, 4294901760
    %v536 = vsub.f32 %v96, %v535
    %537 = vmatprep.subr.mxu0 %v536
    %v538 = vand.u32 %v95, 4294901760
    %v539 = vsub.f32 %v95, %v538
    %540 = vmatpush1.msra.mxu0 %v539
    %v541 = vand.u32 %v98, 4294901760
    %v542 = vsub.f32 %v98, %v541
    %543 = vmatprep.subr.mxu0 %v542
    %v544 = vand.u32 %v97, 4294901760
    %v545 = vsub.f32 %v97, %v544
    %546 = vmatpush1.msra.mxu0 %v545
    %547 = vmatprep.subr.mxu0 0.0
    %548 = vmatpush1.msra.mxu0 0.0
    %549 = vmatprep.subr.mxu0 0.0
    %550 = vmatpush1.msra.mxu0 0.0
    %551 = vmatprep.subr.mxu0 0.0
    %552 = vmatpush1.msra.mxu0 0.0
    %553 = vmatprep.subr.mxu0 0.0
    %554 = vmatpush1.msra.mxu0 0.0
    %555 = vmatprep.subr.mxu0 0.0
    %556 = vmatpush1.msra.mxu0 0.0
    %557 = vmatprep.subr.mxu0 0.0
    %558 = vmatpush1.msra.mxu0 0.0
    %559 = vmatprep.subr.mxu0 0.0
    %560 = vmatpush1.msra.mxu0 0.0
    %561 = vmatprep.subr.mxu0 0.0
    %562 = vmatpush1.msra.mxu0 0.0
    %563 = vmatprep.subr.mxu0 0.0
    %564 = vmatpush1.msra.mxu0 0.0
    %565 = vmatprep.subr.mxu0 0.0
    %566 = vmatpush1.msra.mxu0 0.0
    %567 = vmatprep.subr.mxu0 0.0
    %568 = vmatpush1.msra.mxu0 0.0
    %569 = vmatprep.subr.mxu0 0.0
    %570 = vmatpush1.msra.mxu0 0.0
    %571 = vmatprep.subr.mxu0 0.0
    %572 = vmatpush1.msra.mxu0 0.0
    %573 = vmatprep.subr.mxu0 0.0
    %574 = vmatpush1.msra.mxu0 0.0
    %575 = vmatprep.subr.mxu0 0.0
    %576 = vmatpush1.msra.mxu0 0.0
    %577 = vmatprep.subr.mxu0 0.0
    %578 = vmatpush1.msra.mxu0 0.0
    %579 = vmatprep.mubr.f32.mxu0 0.0
    %v580 = vand.u32 %v66, 4294901760
    %v581 = vsub.f32 %v66, %v580
    %582 = vmatmul.mubr.f32.gmra.mrb[0].mxu0 %v581
    %v583 = vpop.f32.mrb[0].mxu0
    %v584 = vadd.f32 %v447, %v583
    %v585 = vpop.f32.mrb[0].mxu0
    %v586 = vadd.f32 %v449, %v585
    %587 = vdwg.mxu0
    %v588 = vand.u32 %v68, 4294901760
    %589 = vmatprep.subr.mxu0 %v588
    %v590 = vand.u32 %v67, 4294901760
    %591 = vmatpush1.msra.mxu0 %v590
    %v592 = vand.u32 %v70, 4294901760
    %593 = vmatprep.subr.mxu0 %v592
    %v594 = vand.u32 %v69, 4294901760
    %595 = vmatpush1.msra.mxu0 %v594
    %v596 = vand.u32 %v72, 4294901760
    %597 = vmatprep.subr.mxu0 %v596
    %v598 = vand.u32 %v71, 4294901760
    %599 = vmatpush1.msra.mxu0 %v598
    %v600 = vand.u32 %v74, 4294901760
    %601 = vmatprep.subr.mxu0 %v600
    %v602 = vand.u32 %v73, 4294901760
    %603 = vmatpush1.msra.mxu0 %v602
    %v604 = vand.u32 %v76, 4294901760
    %605 = vmatprep.subr.mxu0 %v604
    %v606 = vand.u32 %v75, 4294901760
    %607 = vmatpush1.msra.mxu0 %v606
    %v608 = vand.u32 %v78, 4294901760
    %609 = vmatprep.subr.mxu0 %v608
    %v610 = vand.u32 %v77, 4294901760
    %611 = vmatpush1.msra.mxu0 %v610
    %v612 = vand.u32 %v80, 4294901760
    %613 = vmatprep.subr.mxu0 %v612
    %v614 = vand.u32 %v79, 4294901760
    %615 = vmatpush1.msra.mxu0 %v614
    %v616 = vand.u32 %v82, 4294901760
    %617 = vmatprep.subr.mxu0 %v616
    %v618 = vand.u32 %v81, 4294901760
    %619 = vmatpush1.msra.mxu0 %v618
    %v620 = vand.u32 %v84, 4294901760
    %621 = vmatprep.subr.mxu0 %v620
    %v622 = vand.u32 %v83, 4294901760
    %623 = vmatpush1.msra.mxu0 %v622
    %v624 = vand.u32 %v86, 4294901760
    %625 = vmatprep.subr.mxu0 %v624
    %v626 = vand.u32 %v85, 4294901760
    %627 = vmatpush1.msra.mxu0 %v626
    %v628 = vand.u32 %v88, 4294901760
    %629 = vmatprep.subr.mxu0 %v628
    %v630 = vand.u32 %v87, 4294901760
    %631 = vmatpush1.msra.mxu0 %v630
    %v632 = vand.u32 %v90, 4294901760
    %633 = vmatprep.subr.mxu0 %v632
    %v634 = vand.u32 %v89, 4294901760
    %635 = vmatpush1.msra.mxu0 %v634
    %v636 = vand.u32 %v92, 4294901760
    %637 = vmatprep.subr.mxu0 %v636
    %v638 = vand.u32 %v91, 4294901760
    %639 = vmatpush1.msra.mxu0 %v638
    %v640 = vand.u32 %v94, 4294901760
    %641 = vmatprep.subr.mxu0 %v640
    %v642 = vand.u32 %v93, 4294901760
    %643 = vmatpush1.msra.mxu0 %v642
    %v644 = vand.u32 %v96, 4294901760
    %645 = vmatprep.subr.mxu0 %v644
    %v646 = vand.u32 %v95, 4294901760
    %647 = vmatpush1.msra.mxu0 %v646
    %v648 = vand.u32 %v98, 4294901760
    %649 = vmatprep.subr.mxu0 %v648
    %v650 = vand.u32 %v97, 4294901760
    %651 = vmatpush1.msra.mxu0 %v650
    %652 = vmatprep.subr.mxu0 0.0
    %653 = vmatpush1.msra.mxu0 0.0
    %654 = vmatprep.subr.mxu0 0.0
    %655 = vmatpush1.msra.mxu0 0.0
    %656 = vmatprep.subr.mxu0 0.0
    %657 = vmatpush1.msra.mxu0 0.0
    %658 = vmatprep.subr.mxu0 0.0
    %659 = vmatpush1.msra.mxu0 0.0
    %660 = vmatprep.subr.mxu0 0.0
    %661 = vmatpush1.msra.mxu0 0.0
    %662 = vmatprep.subr.mxu0 0.0
    %663 = vmatpush1.msra.mxu0 0.0
    %664 = vmatprep.subr.mxu0 0.0
    %665 = vmatpush1.msra.mxu0 0.0
    %666 = vmatprep.subr.mxu0 0.0
    %667 = vmatpush1.msra.mxu0 0.0
    %668 = vmatprep.subr.mxu0 0.0
    %669 = vmatpush1.msra.mxu0 0.0
    %670 = vmatprep.subr.mxu0 0.0
    %671 = vmatpush1.msra.mxu0 0.0
    %672 = vmatprep.subr.mxu0 0.0
    %673 = vmatpush1.msra.mxu0 0.0
    %674 = vmatprep.subr.mxu0 0.0
    %675 = vmatpush1.msra.mxu0 0.0
    %676 = vmatprep.subr.mxu0 0.0
    %677 = vmatpush1.msra.mxu0 0.0
    %678 = vmatprep.subr.mxu0 0.0
    %679 = vmatpush1.msra.mxu0 0.0
    %680 = vmatprep.subr.mxu0 0.0
    %681 = vmatpush1.msra.mxu0 0.0
    %682 = vmatprep.subr.mxu0 0.0
    %683 = vmatpush1.msra.mxu0 0.0
    %684 = vmatprep.mubr.f32.mxu0 0.0
    %v685 = vand.u32 %v66, 4294901760
    %v686 = vsub.f32 %v66, %v685
    %v687 = vand.u32 %v686, 4294901760
    %688 = vmatmul.mubr.f32.gmra.mrb[0].mxu0 %v687
    %v689 = vpop.f32.mrb[0].mxu0
    %v690 = vadd.f32 %v584, %v689
    %v691 = vpop.f32.mrb[0].mxu0
    %v692 = vadd.f32 %v586, %v691
    %693 = vdwg.mxu0
    %v694 = vand.u32 %v68, 4294901760
    %v695 = vsub.f32 %v68, %v694
    %v696 = vand.u32 %v695, 4294901760
    %697 = vmatprep.subr.mxu0 %v696
    %v698 = vand.u32 %v67, 4294901760
    %v699 = vsub.f32 %v67, %v698
    %v700 = vand.u32 %v699, 4294901760
    %701 = vmatpush1.msra.mxu0 %v700
    %v702 = vand.u32 %v70, 4294901760
    %v703 = vsub.f32 %v70, %v702
    %v704 = vand.u32 %v703, 4294901760
    %705 = vmatprep.subr.mxu0 %v704
    %v706 = vand.u32 %v69, 4294901760
    %v707 = vsub.f32 %v69, %v706
    %v708 = vand.u32 %v707, 4294901760
    %709 = vmatpush1.msra.mxu0 %v708
    %v710 = vand.u32 %v72, 4294901760
    %v711 = vsub.f32 %v72, %v710
    %v712 = vand.u32 %v711, 4294901760
    %713 = vmatprep.subr.mxu0 %v712
    %v714 = vand.u32 %v71, 4294901760
    %v715 = vsub.f32 %v71, %v714
    %v716 = vand.u32 %v715, 4294901760
    %717 = vmatpush1.msra.mxu0 %v716
    %v718 = vand.u32 %v74, 4294901760
    %v719 = vsub.f32 %v74, %v718
    %v720 = vand.u32 %v719, 4294901760
    %721 = vmatprep.subr.mxu0 %v720
    %v722 = vand.u32 %v73, 4294901760
    %v723 = vsub.f32 %v73, %v722
    %v724 = vand.u32 %v723, 4294901760
    %725 = vmatpush1.msra.mxu0 %v724
    %v726 = vand.u32 %v76, 4294901760
    %v727 = vsub.f32 %v76, %v726
    %v728 = vand.u32 %v727, 4294901760
    %729 = vmatprep.subr.mxu0 %v728
    %v730 = vand.u32 %v75, 4294901760
    %v731 = vsub.f32 %v75, %v730
    %v732 = vand.u32 %v731, 4294901760
    %733 = vmatpush1.msra.mxu0 %v732
    %v734 = vand.u32 %v78, 4294901760
    %v735 = vsub.f32 %v78, %v734
    %v736 = vand.u32 %v735, 4294901760
    %737 = vmatprep.subr.mxu0 %v736
    %v738 = vand.u32 %v77, 4294901760
    %v739 = vsub.f32 %v77, %v738
    %v740 = vand.u32 %v739, 4294901760
    %741 = vmatpush1.msra.mxu0 %v740
    %v742 = vand.u32 %v80, 4294901760
    %v743 = vsub.f32 %v80, %v742
    %v744 = vand.u32 %v743, 4294901760
    %745 = vmatprep.subr.mxu0 %v744
    %v746 = vand.u32 %v79, 4294901760
    %v747 = vsub.f32 %v79, %v746
    %v748 = vand.u32 %v747, 4294901760
    %749 = vmatpush1.msra.mxu0 %v748
    %v750 = vand.u32 %v82, 4294901760
    %v751 = vsub.f32 %v82, %v750
    %v752 = vand.u32 %v751, 4294901760
    %753 = vmatprep.subr.mxu0 %v752
    %v754 = vand.u32 %v81, 4294901760
    %v755 = vsub.f32 %v81, %v754
    %v756 = vand.u32 %v755, 4294901760
    %757 = vmatpush1.msra.mxu0 %v756
    %v758 = vand.u32 %v84, 4294901760
    %v759 = vsub.f32 %v84, %v758
    %v760 = vand.u32 %v759, 4294901760
    %761 = vmatprep.subr.mxu0 %v760
    %v762 = vand.u32 %v83, 4294901760
    %v763 = vsub.f32 %v83, %v762
    %v764 = vand.u32 %v763, 4294901760
    %765 = vmatpush1.msra.mxu0 %v764
    %v766 = vand.u32 %v86, 4294901760
    %v767 = vsub.f32 %v86, %v766
    %v768 = vand.u32 %v767, 4294901760
    %769 = vmatprep.subr.mxu0 %v768
    %v770 = vand.u32 %v85, 4294901760
    %v771 = vsub.f32 %v85, %v770
    %v772 = vand.u32 %v771, 4294901760
    %773 = vmatpush1.msra.mxu0 %v772
    %v774 = vand.u32 %v88, 4294901760
    %v775 = vsub.f32 %v88, %v774
    %v776 = vand.u32 %v775, 4294901760
    %777 = vmatprep.subr.mxu0 %v776
    %v778 = vand.u32 %v87, 4294901760
    %v779 = vsub.f32 %v87, %v778
    %v780 = vand.u32 %v779, 4294901760
    %781 = vmatpush1.msra.mxu0 %v780
    %v782 = vand.u32 %v90, 4294901760
    %v783 = vsub.f32 %v90, %v782
    %v784 = vand.u32 %v783, 4294901760
    %785 = vmatprep.subr.mxu0 %v784
    %v786 = vand.u32 %v89, 4294901760
    %v787 = vsub.f32 %v89, %v786
    %v788 = vand.u32 %v787, 4294901760
    %789 = vmatpush1.msra.mxu0 %v788
    %v790 = vand.u32 %v92, 4294901760
    %v791 = vsub.f32 %v92, %v790
    %v792 = vand.u32 %v791, 4294901760
    %793 = vmatprep.subr.mxu0 %v792
    %v794 = vand.u32 %v91, 4294901760
    %v795 = vsub.f32 %v91, %v794
    %v796 = vand.u32 %v795, 4294901760
    %797 = vmatpush1.msra.mxu0 %v796
    %v798 = vand.u32 %v94, 4294901760
    %v799 = vsub.f32 %v94, %v798
    %v800 = vand.u32 %v799, 4294901760
    %801 = vmatprep.subr.mxu0 %v800
    %v802 = vand.u32 %v93, 4294901760
    %v803 = vsub.f32 %v93, %v802
    %v804 = vand.u32 %v803, 4294901760
    %805 = vmatpush1.msra.mxu0 %v804
    %v806 = vand.u32 %v96, 4294901760
    %v807 = vsub.f32 %v96, %v806
    %v808 = vand.u32 %v807, 4294901760
    %809 = vmatprep.subr.mxu0 %v808
    %v810 = vand.u32 %v95, 4294901760
    %v811 = vsub.f32 %v95, %v810
    %v812 = vand.u32 %v811, 4294901760
    %813 = vmatpush1.msra.mxu0 %v812
    %v814 = vand.u32 %v98, 4294901760
    %v815 = vsub.f32 %v98, %v814
    %v816 = vand.u32 %v815, 4294901760
    %817 = vmatprep.subr.mxu0 %v816
    %v818 = vand.u32 %v97, 4294901760
    %v819 = vsub.f32 %v97, %v818
    %v820 = vand.u32 %v819, 4294901760
    %821 = vmatpush1.msra.mxu0 %v820
    %822 = vmatprep.subr.mxu0 0.0
    %823 = vmatpush1.msra.mxu0 0.0
    %824 = vmatprep.subr.mxu0 0.0
    %825 = vmatpush1.msra.mxu0 0.0
    %826 = vmatprep.subr.mxu0 0.0
    %827 = vmatpush1.msra.mxu0 0.0
    %828 = vmatprep.subr.mxu0 0.0
    %829 = vmatpush1.msra.mxu0 0.0
    %830 = vmatprep.subr.mxu0 0.0
    %831 = vmatpush1.msra.mxu0 0.0
    %832 = vmatprep.subr.mxu0 0.0
    %833 = vmatpush1.msra.mxu0 0.0
    %834 = vmatprep.subr.mxu0 0.0
    %835 = vmatpush1.msra.mxu0 0.0
    %836 = vmatprep.subr.mxu0 0.0
    %837 = vmatpush1.msra.mxu0 0.0
    %838 = vmatprep.subr.mxu0 0.0
    %839 = vmatpush1.msra.mxu0 0.0
    %840 = vmatprep.subr.mxu0 0.0
    %841 = vmatpush1.msra.mxu0 0.0
    %842 = vmatprep.subr.mxu0 0.0
    %843 = vmatpush1.msra.mxu0 0.0
    %844 = vmatprep.subr.mxu0 0.0
    %845 = vmatpush1.msra.mxu0 0.0
    %846 = vmatprep.subr.mxu0 0.0
    %847 = vmatpush1.msra.mxu0 0.0
    %848 = vmatprep.subr.mxu0 0.0
    %849 = vmatpush1.msra.mxu0 0.0
    %850 = vmatprep.subr.mxu0 0.0
    %851 = vmatpush1.msra.mxu0 0.0
    %852 = vmatprep.subr.mxu0 0.0
    %853 = vmatpush1.msra.mxu0 0.0
    %854 = vmatprep.mubr.f32.mxu0 0.0
    %v855 = vand.u32 %v66, 4294901760
    %856 = vmatmul.mubr.f32.gmra.mrb[0].mxu0 %v855
    %v857 = vpop.f32.mrb[0].mxu0
    %v858 = vadd.f32 %v690, %v857
    %v859 = vpop.f32.mrb[0].mxu0
    %v860 = vadd.f32 %v692, %v859
    %861 = vdwg.mxu0
    %v862 = vand.u32 %v68, 4294901760
    %863 = vmatprep.subr.mxu0 %v862
    %v864 = vand.u32 %v67, 4294901760
    %865 = vmatpush1.msra.mxu0 %v864
    %v866 = vand.u32 %v70, 4294901760
    %867 = vmatprep.subr.mxu0 %v866
    %v868 = vand.u32 %v69, 4294901760
    %869 = vmatpush1.msra.mxu0 %v868
    %v870 = vand.u32 %v72, 4294901760
    %871 = vmatprep.subr.mxu0 %v870
    %v872 = vand.u32 %v71, 4294901760
    %873 = vmatpush1.msra.mxu0 %v872
    %v874 = vand.u32 %v74, 4294901760
    %875 = vmatprep.subr.mxu0 %v874
    %v876 = vand.u32 %v73, 4294901760
    %877 = vmatpush1.msra.mxu0 %v876
    %v878 = vand.u32 %v76, 4294901760
    %879 = vmatprep.subr.mxu0 %v878
    %v880 = vand.u32 %v75, 4294901760
    %881 = vmatpush1.msra.mxu0 %v880
    %v882 = vand.u32 %v78, 4294901760
    %883 = vmatprep.subr.mxu0 %v882
    %v884 = vand.u32 %v77, 4294901760
    %885 = vmatpush1.msra.mxu0 %v884
    %v886 = vand.u32 %v80, 4294901760
    %887 = vmatprep.subr.mxu0 %v886
    %v888 = vand.u32 %v79, 4294901760
    %889 = vmatpush1.msra.mxu0 %v888
    %v890 = vand.u32 %v82, 4294901760
    %891 = vmatprep.subr.mxu0 %v890
    %v892 = vand.u32 %v81, 4294901760
    %893 = vmatpush1.msra.mxu0 %v892
    %v894 = vand.u32 %v84, 4294901760
    %895 = vmatprep.subr.mxu0 %v894
    %v896 = vand.u32 %v83, 4294901760
    %897 = vmatpush1.msra.mxu0 %v896
    %v898 = vand.u32 %v86, 4294901760
    %899 = vmatprep.subr.mxu0 %v898
    %v900 = vand.u32 %v85, 4294901760
    %901 = vmatpush1.msra.mxu0 %v900
    %v902 = vand.u32 %v88, 4294901760
    %903 = vmatprep.subr.mxu0 %v902
    %v904 = vand.u32 %v87, 4294901760
    %905 = vmatpush1.msra.mxu0 %v904
    %v906 = vand.u32 %v90, 4294901760
    %907 = vmatprep.subr.mxu0 %v906
    %v908 = vand.u32 %v89, 4294901760
    %909 = vmatpush1.msra.mxu0 %v908
    %v910 = vand.u32 %v92, 4294901760
    %911 = vmatprep.subr.mxu0 %v910
    %v912 = vand.u32 %v91, 4294901760
    %913 = vmatpush1.msra.mxu0 %v912
    %v914 = vand.u32 %v94, 4294901760
    %915 = vmatprep.subr.mxu0 %v914
    %v916 = vand.u32 %v93, 4294901760
    %917 = vmatpush1.msra.mxu0 %v916
    %v918 = vand.u32 %v96, 4294901760
    %919 = vmatprep.subr.mxu0 %v918
    %v920 = vand.u32 %v95, 4294901760
    %921 = vmatpush1.msra.mxu0 %v920
    %v922 = vand.u32 %v98, 4294901760
    %923 = vmatprep.subr.mxu0 %v922
    %v924 = vand.u32 %v97, 4294901760
    %925 = vmatpush1.msra.mxu0 %v924
    %926 = vmatprep.subr.mxu0 0.0
    %927 = vmatpush1.msra.mxu0 0.0
    %928 = vmatprep.subr.mxu0 0.0
    %929 = vmatpush1.msra.mxu0 0.0
    %930 = vmatprep.subr.mxu0 0.0
    %931 = vmatpush1.msra.mxu0 0.0
    %932 = vmatprep.subr.mxu0 0.0
    %933 = vmatpush1.msra.mxu0 0.0
    %934 = vmatprep.subr.mxu0 0.0
    %935 = vmatpush1.msra.mxu0 0.0
    %936 = vmatprep.subr.mxu0 0.0
    %937 = vmatpush1.msra.mxu0 0.0
    %938 = vmatprep.subr.mxu0 0.0
    %939 = vmatpush1.msra.mxu0 0.0
    %940 = vmatprep.subr.mxu0 0.0
    %941 = vmatpush1.msra.mxu0 0.0
    %942 = vmatprep.subr.mxu0 0.0
    %943 = vmatpush1.msra.mxu0 0.0
    %944 = vmatprep.subr.mxu0 0.0
    %945 = vmatpush1.msra.mxu0 0.0
    %946 = vmatprep.subr.mxu0 0.0
    %947 = vmatpush1.msra.mxu0 0.0
    %948 = vmatprep.subr.mxu0 0.0
    %949 = vmatpush1.msra.mxu0 0.0
    %950 = vmatprep.subr.mxu0 0.0
    %951 = vmatpush1.msra.mxu0 0.0
    %952 = vmatprep.subr.mxu0 0.0
    %953 = vmatpush1.msra.mxu0 0.0
    %954 = vmatprep.subr.mxu0 0.0
    %955 = vmatpush1.msra.mxu0 0.0
    %956 = vmatprep.subr.mxu0 0.0
    %957 = vmatpush1.msra.mxu0 0.0
    %958 = vmatprep.mubr.f32.mxu0 0.0
    %v959 = vand.u32 %v66, 4294901760
    %960 = vmatmul.mubr.f32.gmra.mrb[0].mxu0 %v959
    %v961 = vpop.f32.mrb[0].mxu0
    %v962 = vadd.f32 %v858, %v961
    %v963 = vpop.f32.mrb[0].mxu0
    %v964 = vadd.f32 %v860, %v963
    %965 = vdwg.mxu0
    %v966 = vld [vmem:[%s6] sm:$0xff]
    %v967 = vld [vmem:[%s6 + $0x8] sm:$0xff]
    %v968 = vadd.f32 %v962, %v966
    %v969 = vadd.f32 %v964, %v967
    %v970 = vld [vmem:[#allocation7] sm:$0xff]
    %v971 = vld [vmem:[#allocation7 + $0x8] sm:$0xff]
    %v972 = vld [vmem:[#allocation7 + $0x10] sm:$0xff]
    %v973 = vld [vmem:[#allocation7 + $0x18] sm:$0xff]
    %v974 = vld [vmem:[#allocation7 + $0x20] sm:$0xff]
    %v975 = vld [vmem:[#allocation7 + $0x28] sm:$0xff]
    %v976 = vld [vmem:[#allocation7 + $0x30] sm:$0xff]
    %v977 = vld [vmem:[#allocation7 + $0x38] sm:$0xff]
    %v978 = vld [vmem:[#allocation7 + $0x40] sm:$0xff]
    %v979 = vld [vmem:[#allocation7 + $0x48] sm:$0xff]
    %v980 = vld [vmem:[#allocation7 + $0x50] sm:$0xff]
    %v981 = vld [vmem:[#allocation7 + $0x58] sm:$0xff]
    %v982 = vld [vmem:[#allocation7 + $0x60] sm:$0xff]
    %v983 = vld [vmem:[#allocation7 + $0x68] sm:$0xff]
    %v984 = vld [vmem:[#allocation7 + $0x70] sm:$0xff]
    %v985 = vld [vmem:[#allocation7 + $0x78] sm:$0xff]
    %v986 = vld [vmem:[#allocation7 + $0x80] sm:$0xff]
    %v987 = vld [vmem:[#allocation7 + $0x88] sm:$0xff]
    %v988 = vld [vmem:[#allocation7 + $0x90] sm:$0xff]
    %v989 = vld [vmem:[#allocation7 + $0x98] sm:$0xff]
    %v990 = vld [vmem:[#allocation7 + $0xa0] sm:$0xff]
    %v991 = vld [vmem:[#allocation7 + $0xa8] sm:$0xff]
    %v992 = vld [vmem:[#allocation7 + $0xb0] sm:$0xff]
    %v993 = vld [vmem:[#allocation7 + $0xb8] sm:$0xff]
    %v994 = vld [vmem:[#allocation7 + $0xc0] sm:$0xff]
    %v995 = vld [vmem:[#allocation7 + $0xc8] sm:$0xff]
    %v996 = vld [vmem:[#allocation7 + $0xd0] sm:$0xff]
    %v997 = vld [vmem:[#allocation7 + $0xd8] sm:$0xff]
    %v998 = vld [vmem:[#allocation7 + $0xe0] sm:$0xff]
    %v999 = vld [vmem:[#allocation7 + $0xe8] sm:$0xff]
    %v1000 = vld [vmem:[#allocation7 + $0xf0] sm:$0xff]
    %v1001 = vld [vmem:[#allocation7 + $0xf8] sm:$0xff]
    %v1002 = vld [vmem:[#allocation7 + $0x100] sm:$0xff]
    %v1003 = vld [vmem:[#allocation7 + $0x108] sm:$0xff]
    %v1004 = vld [vmem:[#allocation7 + $0x110] sm:$0xff]
    %v1005 = vld [vmem:[#allocation7 + $0x118] sm:$0xff]
    %v1006 = vld [vmem:[#allocation7 + $0x120] sm:$0xff]
    %v1007 = vld [vmem:[#allocation7 + $0x128] sm:$0xff]
    %v1008 = vld [vmem:[#allocation7 + $0x130] sm:$0xff]
    %v1009 = vld [vmem:[#allocation7 + $0x138] sm:$0xff]
    %v1010 = vld [vmem:[#allocation7 + $0x140] sm:$0xff]
    %v1011 = vld [vmem:[#allocation7 + $0x148] sm:$0xff]
    %v1012 = vld [vmem:[#allocation7 + $0x150] sm:$0xff]
    %v1013 = vld [vmem:[#allocation7 + $0x158] sm:$0xff]
    %v1014 = vld [vmem:[#allocation7 + $0x160] sm:$0xff]
    %v1015 = vld [vmem:[#allocation7 + $0x168] sm:$0xff]
    %v1016 = vld [vmem:[#allocation7 + $0x170] sm:$0xff]
    %v1017 = vld [vmem:[#allocation7 + $0x178] sm:$0xff]
    %v1018 = vld [vmem:[#allocation7 + $0x180] sm:$0xff]
    %v1019 = vld [vmem:[#allocation7 + $0x188] sm:$0xff]
    %v1020 = vld [vmem:[#allocation7 + $0x190] sm:$0xff]
    %v1021 = vld [vmem:[#allocation7 + $0x198] sm:$0xff]
    %v1022 = vld [vmem:[#allocation7 + $0x1a0] sm:$0xff]
    %v1023 = vld [vmem:[#allocation7 + $0x1a8] sm:$0xff]
    %v1024 = vld [vmem:[#allocation7 + $0x1b0] sm:$0xff]
    %v1025 = vld [vmem:[#allocation7 + $0x1b8] sm:$0xff]
    %v1026 = vld [vmem:[#allocation7 + $0x1c0] sm:$0xff]
    %v1027 = vld [vmem:[#allocation7 + $0x1c8] sm:$0xff]
    %v1028 = vld [vmem:[#allocation7 + $0x1d0] sm:$0xff]
    %v1029 = vld [vmem:[#allocation7 + $0x1d8] sm:$0xff]
    %v1030 = vld [vmem:[#allocation7 + $0x1e0] sm:$0xff]
    %v1031 = vld [vmem:[#allocation7 + $0x1e8] sm:$0xff]
    %v1032 = vld [vmem:[#allocation7 + $0x1f0] sm:$0xff]
    %v1033 = vld [vmem:[#allocation7 + $0x1f8] sm:$0xff]
    %v1034 = vand.u32 %v971, 4294901760
    %1035 = vmatprep.subr.mxu0 %v1034
    %v1036 = vand.u32 %v970, 4294901760
    %1037 = vmatpush1.msra.mxu0 %v1036
    %v1038 = vand.u32 %v973, 4294901760
    %1039 = vmatprep.subr.mxu0 %v1038
    %v1040 = vand.u32 %v972, 4294901760
    %1041 = vmatpush1.msra.mxu0 %v1040
    %v1042 = vand.u32 %v975, 4294901760
    %1043 = vmatprep.subr.mxu0 %v1042
    %v1044 = vand.u32 %v974, 4294901760
    %1045 = vmatpush1.msra.mxu0 %v1044
    %v1046 = vand.u32 %v977, 4294901760
    %1047 = vmatprep.subr.mxu0 %v1046
    %v1048 = vand.u32 %v976, 4294901760
    %1049 = vmatpush1.msra.mxu0 %v1048
    %v1050 = vand.u32 %v979, 4294901760
    %1051 = vmatprep.subr.mxu0 %v1050
    %v1052 = vand.u32 %v978, 4294901760
    %1053 = vmatpush1.msra.mxu0 %v1052
    %v1054 = vand.u32 %v981, 4294901760
    %1055 = vmatprep.subr.mxu0 %v1054
    %v1056 = vand.u32 %v980, 4294901760
    %1057 = vmatpush1.msra.mxu0 %v1056
    %v1058 = vand.u32 %v983, 4294901760
    %1059 = vmatprep.subr.mxu0 %v1058
    %v1060 = vand.u32 %v982, 4294901760
    %1061 = vmatpush1.msra.mxu0 %v1060
    %v1062 = vand.u32 %v985, 4294901760
    %1063 = vmatprep.subr.mxu0 %v1062
    %v1064 = vand.u32 %v984, 4294901760
    %1065 = vmatpush1.msra.mxu0 %v1064
    %v1066 = vand.u32 %v987, 4294901760
    %1067 = vmatprep.subr.mxu0 %v1066
    %v1068 = vand.u32 %v986, 4294901760
    %1069 = vmatpush1.msra.mxu0 %v1068
    %v1070 = vand.u32 %v989, 4294901760
    %1071 = vmatprep.subr.mxu0 %v1070
    %v1072 = vand.u32 %v988, 4294901760
    %1073 = vmatpush1.msra.mxu0 %v1072
    %v1074 = vand.u32 %v991, 4294901760
    %1075 = vmatprep.subr.mxu0 %v1074
    %v1076 = vand.u32 %v990, 4294901760
    %1077 = vmatpush1.msra.mxu0 %v1076
    %v1078 = vand.u32 %v993, 4294901760
    %1079 = vmatprep.subr.mxu0 %v1078
    %v1080 = vand.u32 %v992, 4294901760
    %1081 = vmatpush1.msra.mxu0 %v1080
    %v1082 = vand.u32 %v995, 4294901760
    %1083 = vmatprep.subr.mxu0 %v1082
    %v1084 = vand.u32 %v994, 4294901760
    %1085 = vmatpush1.msra.mxu0 %v1084
    %v1086 = vand.u32 %v997, 4294901760
    %1087 = vmatprep.subr.mxu0 %v1086
    %v1088 = vand.u32 %v996, 4294901760
    %1089 = vmatpush1.msra.mxu0 %v1088
    %v1090 = vand.u32 %v999, 4294901760
    %1091 = vmatprep.subr.mxu0 %v1090
    %v1092 = vand.u32 %v998, 4294901760
    %1093 = vmatpush1.msra.mxu0 %v1092
    %v1094 = vand.u32 %v1001, 4294901760
    %1095 = vmatprep.subr.mxu0 %v1094
    %v1096 = vand.u32 %v1000, 4294901760
    %1097 = vmatpush1.msra.mxu0 %v1096
    %v1098 = vand.u32 %v1003, 4294901760
    %1099 = vmatprep.subr.mxu0 %v1098
    %v1100 = vand.u32 %v1002, 4294901760
    %1101 = vmatpush1.msra.mxu0 %v1100
    %v1102 = vand.u32 %v1005, 4294901760
    %1103 = vmatprep.subr.mxu0 %v1102
    %v1104 = vand.u32 %v1004, 4294901760
    %1105 = vmatpush1.msra.mxu0 %v1104
    %v1106 = vand.u32 %v1007, 4294901760
    %1107 = vmatprep.subr.mxu0 %v1106
    %v1108 = vand.u32 %v1006, 4294901760
    %1109 = vmatpush1.msra.mxu0 %v1108
    %v1110 = vand.u32 %v1009, 4294901760
    %1111 = vmatprep.subr.mxu0 %v1110
    %v1112 = vand.u32 %v1008, 4294901760
    %1113 = vmatpush1.msra.mxu0 %v1112
    %v1114 = vand.u32 %v1011, 4294901760
    %1115 = vmatprep.subr.mxu0 %v1114
    %v1116 = vand.u32 %v1010, 4294901760
    %1117 = vmatpush1.msra.mxu0 %v1116
    %v1118 = vand.u32 %v1013, 4294901760
    %1119 = vmatprep.subr.mxu0 %v1118
    %v1120 = vand.u32 %v1012, 4294901760
    %1121 = vmatpush1.msra.mxu0 %v1120
    %v1122 = vand.u32 %v1015, 4294901760
    %1123 = vmatprep.subr.mxu0 %v1122
    %v1124 = vand.u32 %v1014, 4294901760
    %1125 = vmatpush1.msra.mxu0 %v1124
    %v1126 = vand.u32 %v1017, 4294901760
    %1127 = vmatprep.subr.mxu0 %v1126
    %v1128 = vand.u32 %v1016, 4294901760
    %1129 = vmatpush1.msra.mxu0 %v1128
    %v1130 = vand.u32 %v1019, 4294901760
    %1131 = vmatprep.subr.mxu0 %v1130
    %v1132 = vand.u32 %v1018, 4294901760
    %1133 = vmatpush1.msra.mxu0 %v1132
    %v1134 = vand.u32 %v1021, 4294901760
    %1135 = vmatprep.subr.mxu0 %v1134
    %v1136 = vand.u32 %v1020, 4294901760
    %1137 = vmatpush1.msra.mxu0 %v1136
    %v1138 = vand.u32 %v1023, 4294901760
    %1139 = vmatprep.subr.mxu0 %v1138
    %v1140 = vand.u32 %v1022, 4294901760
    %1141 = vmatpush1.msra.mxu0 %v1140
    %v1142 = vand.u32 %v1025, 4294901760
    %1143 = vmatprep.subr.mxu0 %v1142
    %v1144 = vand.u32 %v1024, 4294901760
    %1145 = vmatpush1.msra.mxu0 %v1144
    %v1146 = vand.u32 %v1027, 4294901760
    %1147 = vmatprep.subr.mxu0 %v1146
    %v1148 = vand.u32 %v1026, 4294901760
    %1149 = vmatpush1.msra.mxu0 %v1148
    %v1150 = vand.u32 %v1029, 4294901760
    %1151 = vmatprep.subr.mxu0 %v1150
    %v1152 = vand.u32 %v1028, 4294901760
    %1153 = vmatpush1.msra.mxu0 %v1152
    %v1154 = vand.u32 %v1031, 4294901760
    %1155 = vmatprep.subr.mxu0 %v1154
    %v1156 = vand.u32 %v1030, 4294901760
    %1157 = vmatpush1.msra.mxu0 %v1156
    %v1158 = vand.u32 %v1033, 4294901760
    %1159 = vmatprep.subr.mxu0 %v1158
    %v1160 = vand.u32 %v1032, 4294901760
    %1161 = vmatpush1.msra.mxu0 %v1160
    %v1162 = vand.u32 %v969, 4294901760
    %v1163 = vsub.f32 %v969, %v1162
    %v1164 = vand.u32 %v1163, 4294901760
    %v1165 = vsub.f32 %v1163, %v1164
    %v1166 = vand.u32 %v1165, 4294901760
    %1167 = vmatprep.mubr.f32.mxu0 %v1166
    %v1168 = vand.u32 %v968, 4294901760
    %v1169 = vsub.f32 %v968, %v1168
    %v1170 = vand.u32 %v1169, 4294901760
    %v1171 = vsub.f32 %v1169, %v1170
    %v1172 = vand.u32 %v1171, 4294901760
    %1173 = vmatmul.mubr.f32.gmra.mrb[0].mxu0 %v1172
    %v1174 = vpop.f32.mrb[0].mxu0
    %v1175 = vadd.f32 0.0, %v1174
    %v1176 = vpop.f32.mrb[0].mxu0
    %v1177 = vadd.f32 0.0, %v1176
    %1178 = vdwg.mxu0
    %v1179 = vand.u32 %v971, 4294901760
    %v1180 = vsub.f32 %v971, %v1179
    %v1181 = vand.u32 %v1180, 4294901760
    %v1182 = vsub.f32 %v1180, %v1181
    %v1183 = vand.u32 %v1182, 4294901760
    %1184 = vmatprep.subr.mxu0 %v1183
    %v1185 = vand.u32 %v970, 4294901760
    %v1186 = vsub.f32 %v970, %v1185
    %v1187 = vand.u32 %v1186, 4294901760
    %v1188 = vsub.f32 %v1186, %v1187
    %v1189 = vand.u32 %v1188, 4294901760
    %1190 = vmatpush1.msra.mxu0 %v1189
    %v1191 = vand.u32 %v973, 4294901760
    %v1192 = vsub.f32 %v973, %v1191
    %v1193 = vand.u32 %v1192, 4294901760
    %v1194 = vsub.f32 %v1192, %v1193
    %v1195 = vand.u32 %v1194, 4294901760
    %1196 = vmatprep.subr.mxu0 %v1195
    %v1197 = vand.u32 %v972, 4294901760
    %v1198 = vsub.f32 %v972, %v1197
    %v1199 = vand.u32 %v1198, 4294901760
    %v1200 = vsub.f32 %v1198, %v1199
    %v1201 = vand.u32 %v1200, 4294901760
    %1202 = vmatpush1.msra.mxu0 %v1201
    %v1203 = vand.u32 %v975, 4294901760
    %v1204 = vsub.f32 %v975, %v1203
    %v1205 = vand.u32 %v1204, 4294901760
    %v1206 = vsub.f32 %v1204, %v1205
    %v1207 = vand.u32 %v1206, 4294901760
    %1208 = vmatprep.subr.mxu0 %v1207
    %v1209 = vand.u32 %v974, 4294901760
    %v1210 = vsub.f32 %v974, %v1209
    %v1211 = vand.u32 %v1210, 4294901760
    %v1212 = vsub.f32 %v1210, %v1211
    %v1213 = vand.u32 %v1212, 4294901760
    %1214 = vmatpush1.msra.mxu0 %v1213
    %v1215 = vand.u32 %v977, 4294901760
    %v1216 = vsub.f32 %v977, %v1215
    %v1217 = vand.u32 %v1216, 4294901760
    %v1218 = vsub.f32 %v1216, %v1217
    %v1219 = vand.u32 %v1218, 4294901760
    %1220 = vmatprep.subr.mxu0 %v1219
    %v1221 = vand.u32 %v976, 4294901760
    %v1222 = vsub.f32 %v976, %v1221
    %v1223 = vand.u32 %v1222, 4294901760
    %v1224 = vsub.f32 %v1222, %v1223
    %v1225 = vand.u32 %v1224, 4294901760
    %1226 = vmatpush1.msra.mxu0 %v1225
    %v1227 = vand.u32 %v979, 4294901760
    %v1228 = vsub.f32 %v979, %v1227
    %v1229 = vand.u32 %v1228, 4294901760
    %v1230 = vsub.f32 %v1228, %v1229
    %v1231 = vand.u32 %v1230, 4294901760
    %1232 = vmatprep.subr.mxu0 %v1231
    %v1233 = vand.u32 %v978, 4294901760
    %v1234 = vsub.f32 %v978, %v1233
    %v1235 = vand.u32 %v1234, 4294901760
    %v1236 = vsub.f32 %v1234, %v1235
    %v1237 = vand.u32 %v1236, 4294901760
    %1238 = vmatpush1.msra.mxu0 %v1237
    %v1239 = vand.u32 %v981, 4294901760
    %v1240 = vsub.f32 %v981, %v1239
    %v1241 = vand.u32 %v1240, 4294901760
    %v1242 = vsub.f32 %v1240, %v1241
    %v1243 = vand.u32 %v1242, 4294901760
    %1244 = vmatprep.subr.mxu0 %v1243
    %v1245 = vand.u32 %v980, 4294901760
    %v1246 = vsub.f32 %v980, %v1245
    %v1247 = vand.u32 %v1246, 4294901760
    %v1248 = vsub.f32 %v1246, %v1247
    %v1249 = vand.u32 %v1248, 4294901760
    %1250 = vmatpush1.msra.mxu0 %v1249
    %v1251 = vand.u32 %v983, 4294901760
    %v1252 = vsub.f32 %v983, %v1251
    %v1253 = vand.u32 %v1252, 4294901760
    %v1254 = vsub.f32 %v1252, %v1253
    %v1255 = vand.u32 %v1254, 4294901760
    %1256 = vmatprep.subr.mxu0 %v1255
    %v1257 = vand.u32 %v982, 4294901760
    %v1258 = vsub.f32 %v982, %v1257
    %v1259 = vand.u32 %v1258, 4294901760
    %v1260 = vsub.f32 %v1258, %v1259
    %v1261 = vand.u32 %v1260, 4294901760
    %1262 = vmatpush1.msra.mxu0 %v1261
    %v1263 = vand.u32 %v985, 4294901760
    %v1264 = vsub.f32 %v985, %v1263
    %v1265 = vand.u32 %v1264, 4294901760
    %v1266 = vsub.f32 %v1264, %v1265
    %v1267 = vand.u32 %v1266, 4294901760
    %1268 = vmatprep.subr.mxu0 %v1267
    %v1269 = vand.u32 %v984, 4294901760
    %v1270 = vsub.f32 %v984, %v1269
    %v1271 = vand.u32 %v1270, 4294901760
    %v1272 = vsub.f32 %v1270, %v1271
    %v1273 = vand.u32 %v1272, 4294901760
    %1274 = vmatpush1.msra.mxu0 %v1273
    %v1275 = vand.u32 %v987, 4294901760
    %v1276 = vsub.f32 %v987, %v1275
    %v1277 = vand.u32 %v1276, 4294901760
    %v1278 = vsub.f32 %v1276, %v1277
    %v1279 = vand.u32 %v1278, 4294901760
    %1280 = vmatprep.subr.mxu0 %v1279
    %v1281 = vand.u32 %v986, 4294901760
    %v1282 = vsub.f32 %v986, %v1281
    %v1283 = vand.u32 %v1282, 4294901760
    %v1284 = vsub.f32 %v1282, %v1283
    %v1285 = vand.u32 %v1284, 4294901760
    %1286 = vmatpush1.msra.mxu0 %v1285
    %v1287 = vand.u32 %v989, 4294901760
    %v1288 = vsub.f32 %v989, %v1287
    %v1289 = vand.u32 %v1288, 4294901760
    %v1290 = vsub.f32 %v1288, %v1289
    %v1291 = vand.u32 %v1290, 4294901760
    %1292 = vmatprep.subr.mxu0 %v1291
    %v1293 = vand.u32 %v988, 4294901760
    %v1294 = vsub.f32 %v988, %v1293
    %v1295 = vand.u32 %v1294, 4294901760
    %v1296 = vsub.f32 %v1294, %v1295
    %v1297 = vand.u32 %v1296, 4294901760
    %1298 = vmatpush1.msra.mxu0 %v1297
    %v1299 = vand.u32 %v991, 4294901760
    %v1300 = vsub.f32 %v991, %v1299
    %v1301 = vand.u32 %v1300, 4294901760
    %v1302 = vsub.f32 %v1300, %v1301
    %v1303 = vand.u32 %v1302, 4294901760
    %1304 = vmatprep.subr.mxu0 %v1303
    %v1305 = vand.u32 %v990, 4294901760
    %v1306 = vsub.f32 %v990, %v1305
    %v1307 = vand.u32 %v1306, 4294901760
    %v1308 = vsub.f32 %v1306, %v1307
    %v1309 = vand.u32 %v1308, 4294901760
    %1310 = vmatpush1.msra.mxu0 %v1309
    %v1311 = vand.u32 %v993, 4294901760
    %v1312 = vsub.f32 %v993, %v1311
    %v1313 = vand.u32 %v1312, 4294901760
    %v1314 = vsub.f32 %v1312, %v1313
    %v1315 = vand.u32 %v1314, 4294901760
    %1316 = vmatprep.subr.mxu0 %v1315
    %v1317 = vand.u32 %v992, 4294901760
    %v1318 = vsub.f32 %v992, %v1317
    %v1319 = vand.u32 %v1318, 4294901760
    %v1320 = vsub.f32 %v1318, %v1319
    %v1321 = vand.u32 %v1320, 4294901760
    %1322 = vmatpush1.msra.mxu0 %v1321
    %v1323 = vand.u32 %v995, 4294901760
    %v1324 = vsub.f32 %v995, %v1323
    %v1325 = vand.u32 %v1324, 4294901760
    %v1326 = vsub.f32 %v1324, %v1325
    %v1327 = vand.u32 %v1326, 4294901760
    %1328 = vmatprep.subr.mxu0 %v1327
    %v1329 = vand.u32 %v994, 4294901760
    %v1330 = vsub.f32 %v994, %v1329
    %v1331 = vand.u32 %v1330, 4294901760
    %v1332 = vsub.f32 %v1330, %v1331
    %v1333 = vand.u32 %v1332, 4294901760
    %1334 = vmatpush1.msra.mxu0 %v1333
    %v1335 = vand.u32 %v997, 4294901760
    %v1336 = vsub.f32 %v997, %v1335
    %v1337 = vand.u32 %v1336, 4294901760
    %v1338 = vsub.f32 %v1336, %v1337
    %v1339 = vand.u32 %v1338, 4294901760
    %1340 = vmatprep.subr.mxu0 %v1339
    %v1341 = vand.u32 %v996, 4294901760
    %v1342 = vsub.f32 %v996, %v1341
    %v1343 = vand.u32 %v1342, 4294901760
    %v1344 = vsub.f32 %v1342, %v1343
    %v1345 = vand.u32 %v1344, 4294901760
    %1346 = vmatpush1.msra.mxu0 %v1345
    %v1347 = vand.u32 %v999, 4294901760
    %v1348 = vsub.f32 %v999, %v1347
    %v1349 = vand.u32 %v1348, 4294901760
    %v1350 = vsub.f32 %v1348, %v1349
    %v1351 = vand.u32 %v1350, 4294901760
    %1352 = vmatprep.subr.mxu0 %v1351
    %v1353 = vand.u32 %v998, 4294901760
    %v1354 = vsub.f32 %v998, %v1353
    %v1355 = vand.u32 %v1354, 4294901760
    %v1356 = vsub.f32 %v1354, %v1355
    %v1357 = vand.u32 %v1356, 4294901760
    %1358 = vmatpush1.msra.mxu0 %v1357
    %v1359 = vand.u32 %v1001, 4294901760
    %v1360 = vsub.f32 %v1001, %v1359
    %v1361 = vand.u32 %v1360, 4294901760
    %v1362 = vsub.f32 %v1360, %v1361
    %v1363 = vand.u32 %v1362, 4294901760
    %1364 = vmatprep.subr.mxu0 %v1363
    %v1365 = vand.u32 %v1000, 4294901760
    %v1366 = vsub.f32 %v1000, %v1365
    %v1367 = vand.u32 %v1366, 4294901760
    %v1368 = vsub.f32 %v1366, %v1367
    %v1369 = vand.u32 %v1368, 4294901760
    %1370 = vmatpush1.msra.mxu0 %v1369
    %v1371 = vand.u32 %v1003, 4294901760
    %v1372 = vsub.f32 %v1003, %v1371
    %v1373 = vand.u32 %v1372, 4294901760
    %v1374 = vsub.f32 %v1372, %v1373
    %v1375 = vand.u32 %v1374, 4294901760
    %1376 = vmatprep.subr.mxu0 %v1375
    %v1377 = vand.u32 %v1002, 4294901760
    %v1378 = vsub.f32 %v1002, %v1377
    %v1379 = vand.u32 %v1378, 4294901760
    %v1380 = vsub.f32 %v1378, %v1379
    %v1381 = vand.u32 %v1380, 4294901760
    %1382 = vmatpush1.msra.mxu0 %v1381
    %v1383 = vand.u32 %v1005, 4294901760
    %v1384 = vsub.f32 %v1005, %v1383
    %v1385 = vand.u32 %v1384, 4294901760
    %v1386 = vsub.f32 %v1384, %v1385
    %v1387 = vand.u32 %v1386, 4294901760
    %1388 = vmatprep.subr.mxu0 %v1387
    %v1389 = vand.u32 %v1004, 4294901760
    %v1390 = vsub.f32 %v1004, %v1389
    %v1391 = vand.u32 %v1390, 4294901760
    %v1392 = vsub.f32 %v1390, %v1391
    %v1393 = vand.u32 %v1392, 4294901760
    %1394 = vmatpush1.msra.mxu0 %v1393
    %v1395 = vand.u32 %v1007, 4294901760
    %v1396 = vsub.f32 %v1007, %v1395
    %v1397 = vand.u32 %v1396, 4294901760
    %v1398 = vsub.f32 %v1396, %v1397
    %v1399 = vand.u32 %v1398, 4294901760
    %1400 = vmatprep.subr.mxu0 %v1399
    %v1401 = vand.u32 %v1006, 4294901760
    %v1402 = vsub.f32 %v1006, %v1401
    %v1403 = vand.u32 %v1402, 4294901760
    %v1404 = vsub.f32 %v1402, %v1403
    %v1405 = vand.u32 %v1404, 4294901760
    %1406 = vmatpush1.msra.mxu0 %v1405
    %v1407 = vand.u32 %v1009, 4294901760
    %v1408 = vsub.f32 %v1009, %v1407
    %v1409 = vand.u32 %v1408, 4294901760
    %v1410 = vsub.f32 %v1408, %v1409
    %v1411 = vand.u32 %v1410, 4294901760
    %1412 = vmatprep.subr.mxu0 %v1411
    %v1413 = vand.u32 %v1008, 4294901760
    %v1414 = vsub.f32 %v1008, %v1413
    %v1415 = vand.u32 %v1414, 4294901760
    %v1416 = vsub.f32 %v1414, %v1415
    %v1417 = vand.u32 %v1416, 4294901760
    %1418 = vmatpush1.msra.mxu0 %v1417
    %v1419 = vand.u32 %v1011, 4294901760
    %v1420 = vsub.f32 %v1011, %v1419
    %v1421 = vand.u32 %v1420, 4294901760
    %v1422 = vsub.f32 %v1420, %v1421
    %v1423 = vand.u32 %v1422, 4294901760
    %1424 = vmatprep.subr.mxu0 %v1423
    %v1425 = vand.u32 %v1010, 4294901760
    %v1426 = vsub.f32 %v1010, %v1425
    %v1427 = vand.u32 %v1426, 4294901760
    %v1428 = vsub.f32 %v1426, %v1427
    %v1429 = vand.u32 %v1428, 4294901760
    %1430 = vmatpush1.msra.mxu0 %v1429
    %v1431 = vand.u32 %v1013, 4294901760
    %v1432 = vsub.f32 %v1013, %v1431
    %v1433 = vand.u32 %v1432, 4294901760
    %v1434 = vsub.f32 %v1432, %v1433
    %v1435 = vand.u32 %v1434, 4294901760
    %1436 = vmatprep.subr.mxu0 %v1435
    %v1437 = vand.u32 %v1012, 4294901760
    %v1438 = vsub.f32 %v1012, %v1437
    %v1439 = vand.u32 %v1438, 4294901760
    %v1440 = vsub.f32 %v1438, %v1439
    %v1441 = vand.u32 %v1440, 4294901760
    %1442 = vmatpush1.msra.mxu0 %v1441
    %v1443 = vand.u32 %v1015, 4294901760
    %v1444 = vsub.f32 %v1015, %v1443
    %v1445 = vand.u32 %v1444, 4294901760
    %v1446 = vsub.f32 %v1444, %v1445
    %v1447 = vand.u32 %v1446, 4294901760
    %1448 = vmatprep.subr.mxu0 %v1447
    %v1449 = vand.u32 %v1014, 4294901760
    %v1450 = vsub.f32 %v1014, %v1449
    %v1451 = vand.u32 %v1450, 4294901760
    %v1452 = vsub.f32 %v1450, %v1451
    %v1453 = vand.u32 %v1452, 4294901760
    %1454 = vmatpush1.msra.mxu0 %v1453
    %v1455 = vand.u32 %v1017, 4294901760
    %v1456 = vsub.f32 %v1017, %v1455
    %v1457 = vand.u32 %v1456, 4294901760
    %v1458 = vsub.f32 %v1456, %v1457
    %v1459 = vand.u32 %v1458, 4294901760
    %1460 = vmatprep.subr.mxu0 %v1459
    %v1461 = vand.u32 %v1016, 4294901760
    %v1462 = vsub.f32 %v1016, %v1461
    %v1463 = vand.u32 %v1462, 4294901760
    %v1464 = vsub.f32 %v1462, %v1463
    %v1465 = vand.u32 %v1464, 4294901760
    %1466 = vmatpush1.msra.mxu0 %v1465
    %v1467 = vand.u32 %v1019, 4294901760
    %v1468 = vsub.f32 %v1019, %v1467
    %v1469 = vand.u32 %v1468, 4294901760
    %v1470 = vsub.f32 %v1468, %v1469
    %v1471 = vand.u32 %v1470, 4294901760
    %1472 = vmatprep.subr.mxu0 %v1471
    %v1473 = vand.u32 %v1018, 4294901760
    %v1474 = vsub.f32 %v1018, %v1473
    %v1475 = vand.u32 %v1474, 4294901760
    %v1476 = vsub.f32 %v1474, %v1475
    %v1477 = vand.u32 %v1476, 4294901760
    %1478 = vmatpush1.msra.mxu0 %v1477
    %v1479 = vand.u32 %v1021, 4294901760
    %v1480 = vsub.f32 %v1021, %v1479
    %v1481 = vand.u32 %v1480, 4294901760
    %v1482 = vsub.f32 %v1480, %v1481
    %v1483 = vand.u32 %v1482, 4294901760
    %1484 = vmatprep.subr.mxu0 %v1483
    %v1485 = vand.u32 %v1020, 4294901760
    %v1486 = vsub.f32 %v1020, %v1485
    %v1487 = vand.u32 %v1486, 4294901760
    %v1488 = vsub.f32 %v1486, %v1487
    %v1489 = vand.u32 %v1488, 4294901760
    %1490 = vmatpush1.msra.mxu0 %v1489
    %v1491 = vand.u32 %v1023, 4294901760
    %v1492 = vsub.f32 %v1023, %v1491
    %v1493 = vand.u32 %v1492, 4294901760
    %v1494 = vsub.f32 %v1492, %v1493
    %v1495 = vand.u32 %v1494, 4294901760
    %1496 = vmatprep.subr.mxu0 %v1495
    %v1497 = vand.u32 %v1022, 4294901760
    %v1498 = vsub.f32 %v1022, %v1497
    %v1499 = vand.u32 %v1498, 4294901760
    %v1500 = vsub.f32 %v1498, %v1499
    %v1501 = vand.u32 %v1500, 4294901760
    %1502 = vmatpush1.msra.mxu0 %v1501
    %v1503 = vand.u32 %v1025, 4294901760
    %v1504 = vsub.f32 %v1025, %v1503
    %v1505 = vand.u32 %v1504, 4294901760
    %v1506 = vsub.f32 %v1504, %v1505
    %v1507 = vand.u32 %v1506, 4294901760
    %1508 = vmatprep.subr.mxu0 %v1507
    %v1509 = vand.u32 %v1024, 4294901760
    %v1510 = vsub.f32 %v1024, %v1509
    %v1511 = vand.u32 %v1510, 4294901760
    %v1512 = vsub.f32 %v1510, %v1511
    %v1513 = vand.u32 %v1512, 4294901760
    %1514 = vmatpush1.msra.mxu0 %v1513
    %v1515 = vand.u32 %v1027, 4294901760
    %v1516 = vsub.f32 %v1027, %v1515
    %v1517 = vand.u32 %v1516, 4294901760
    %v1518 = vsub.f32 %v1516, %v1517
    %v1519 = vand.u32 %v1518, 4294901760
    %1520 = vmatprep.subr.mxu0 %v1519
    %v1521 = vand.u32 %v1026, 4294901760
    %v1522 = vsub.f32 %v1026, %v1521
    %v1523 = vand.u32 %v1522, 4294901760
    %v1524 = vsub.f32 %v1522, %v1523
    %v1525 = vand.u32 %v1524, 4294901760
    %1526 = vmatpush1.msra.mxu0 %v1525
    %v1527 = vand.u32 %v1029, 4294901760
    %v1528 = vsub.f32 %v1029, %v1527
    %v1529 = vand.u32 %v1528, 4294901760
    %v1530 = vsub.f32 %v1528, %v1529
    %v1531 = vand.u32 %v1530, 4294901760
    %1532 = vmatprep.subr.mxu0 %v1531
    %v1533 = vand.u32 %v1028, 4294901760
    %v1534 = vsub.f32 %v1028, %v1533
    %v1535 = vand.u32 %v1534, 4294901760
    %v1536 = vsub.f32 %v1534, %v1535
    %v1537 = vand.u32 %v1536, 4294901760
    %1538 = vmatpush1.msra.mxu0 %v1537
    %v1539 = vand.u32 %v1031, 4294901760
    %v1540 = vsub.f32 %v1031, %v1539
    %v1541 = vand.u32 %v1540, 4294901760
    %v1542 = vsub.f32 %v1540, %v1541
    %v1543 = vand.u32 %v1542, 4294901760
    %1544 = vmatprep.subr.mxu0 %v1543
    %v1545 = vand.u32 %v1030, 4294901760
    %v1546 = vsub.f32 %v1030, %v1545
    %v1547 = vand.u32 %v1546, 4294901760
    %v1548 = vsub.f32 %v1546, %v1547
    %v1549 = vand.u32 %v1548, 4294901760
    %1550 = vmatpush1.msra.mxu0 %v1549
    %v1551 = vand.u32 %v1033, 4294901760
    %v1552 = vsub.f32 %v1033, %v1551
    %v1553 = vand.u32 %v1552, 4294901760
    %v1554 = vsub.f32 %v1552, %v1553
    %v1555 = vand.u32 %v1554, 4294901760
    %1556 = vmatprep.subr.mxu0 %v1555
    %v1557 = vand.u32 %v1032, 4294901760
    %v1558 = vsub.f32 %v1032, %v1557
    %v1559 = vand.u32 %v1558, 4294901760
    %v1560 = vsub.f32 %v1558, %v1559
    %v1561 = vand.u32 %v1560, 4294901760
    %1562 = vmatpush1.msra.mxu0 %v1561
    %v1563 = vand.u32 %v969, 4294901760
    %1564 = vmatprep.mubr.f32.mxu0 %v1563
    %v1565 = vand.u32 %v968, 4294901760
    %1566 = vmatmul.mubr.f32.gmra.mrb[0].mxu0 %v1565
    %v1567 = vpop.f32.mrb[0].mxu0
    %v1568 = vadd.f32 %v1175, %v1567
    %v1569 = vpop.f32.mrb[0].mxu0
    %v1570 = vadd.f32 %v1177, %v1569
    %1571 = vdwg.mxu0
    %v1572 = vand.u32 %v971, 4294901760
    %v1573 = vsub.f32 %v971, %v1572
    %1574 = vmatprep.subr.mxu0 %v1573
    %v1575 = vand.u32 %v970, 4294901760
    %v1576 = vsub.f32 %v970, %v1575
    %1577 = vmatpush1.msra.mxu0 %v1576
    %v1578 = vand.u32 %v973, 4294901760
    %v1579 = vsub.f32 %v973, %v1578
    %1580 = vmatprep.subr.mxu0 %v1579
    %v1581 = vand.u32 %v972, 4294901760
    %v1582 = vsub.f32 %v972, %v1581
    %1583 = vmatpush1.msra.mxu0 %v1582
    %v1584 = vand.u32 %v975, 4294901760
    %v1585 = vsub.f32 %v975, %v1584
    %1586 = vmatprep.subr.mxu0 %v1585
    %v1587 = vand.u32 %v974, 4294901760
    %v1588 = vsub.f32 %v974, %v1587
    %1589 = vmatpush1.msra.mxu0 %v1588
    %v1590 = vand.u32 %v977, 4294901760
    %v1591 = vsub.f32 %v977, %v1590
    %1592 = vmatprep.subr.mxu0 %v1591
    %v1593 = vand.u32 %v976, 4294901760
    %v1594 = vsub.f32 %v976, %v1593
    %1595 = vmatpush1.msra.mxu0 %v1594
    %v1596 = vand.u32 %v979, 4294901760
    %v1597 = vsub.f32 %v979, %v1596
    %1598 = vmatprep.subr.mxu0 %v1597
    %v1599 = vand.u32 %v978, 4294901760
    %v1600 = vsub.f32 %v978, %v1599
    %1601 = vmatpush1.msra.mxu0 %v1600
    %v1602 = vand.u32 %v981, 4294901760
    %v1603 = vsub.f32 %v981, %v1602
    %1604 = vmatprep.subr.mxu0 %v1603
    %v1605 = vand.u32 %v980, 4294901760
    %v1606 = vsub.f32 %v980, %v1605
    %1607 = vmatpush1.msra.mxu0 %v1606
    %v1608 = vand.u32 %v983, 4294901760
    %v1609 = vsub.f32 %v983, %v1608
    %1610 = vmatprep.subr.mxu0 %v1609
    %v1611 = vand.u32 %v982, 4294901760
    %v1612 = vsub.f32 %v982, %v1611
    %1613 = vmatpush1.msra.mxu0 %v1612
    %v1614 = vand.u32 %v985, 4294901760
    %v1615 = vsub.f32 %v985, %v1614
    %1616 = vmatprep.subr.mxu0 %v1615
    %v1617 = vand.u32 %v984, 4294901760
    %v1618 = vsub.f32 %v984, %v1617
    %1619 = vmatpush1.msra.mxu0 %v1618
    %v1620 = vand.u32 %v987, 4294901760
    %v1621 = vsub.f32 %v987, %v1620
    %1622 = vmatprep.subr.mxu0 %v1621
    %v1623 = vand.u32 %v986, 4294901760
    %v1624 = vsub.f32 %v986, %v1623
    %1625 = vmatpush1.msra.mxu0 %v1624
    %v1626 = vand.u32 %v989, 4294901760
    %v1627 = vsub.f32 %v989, %v1626
    %1628 = vmatprep.subr.mxu0 %v1627
    %v1629 = vand.u32 %v988, 4294901760
    %v1630 = vsub.f32 %v988, %v1629
    %1631 = vmatpush1.msra.mxu0 %v1630
    %v1632 = vand.u32 %v991, 4294901760
    %v1633 = vsub.f32 %v991, %v1632
    %1634 = vmatprep.subr.mxu0 %v1633
    %v1635 = vand.u32 %v990, 4294901760
    %v1636 = vsub.f32 %v990, %v1635
    %1637 = vmatpush1.msra.mxu0 %v1636
    %v1638 = vand.u32 %v993, 4294901760
    %v1639 = vsub.f32 %v993, %v1638
    %1640 = vmatprep.subr.mxu0 %v1639
    %v1641 = vand.u32 %v992, 4294901760
    %v1642 = vsub.f32 %v992, %v1641
    %1643 = vmatpush1.msra.mxu0 %v1642
    %v1644 = vand.u32 %v995, 4294901760
    %v1645 = vsub.f32 %v995, %v1644
    %1646 = vmatprep.subr.mxu0 %v1645
    %v1647 = vand.u32 %v994, 4294901760
    %v1648 = vsub.f32 %v994, %v1647
    %1649 = vmatpush1.msra.mxu0 %v1648
    %v1650 = vand.u32 %v997, 4294901760
    %v1651 = vsub.f32 %v997, %v1650
    %1652 = vmatprep.subr.mxu0 %v1651
    %v1653 = vand.u32 %v996, 4294901760
    %v1654 = vsub.f32 %v996, %v1653
    %1655 = vmatpush1.msra.mxu0 %v1654
    %v1656 = vand.u32 %v999, 4294901760
    %v1657 = vsub.f32 %v999, %v1656
    %1658 = vmatprep.subr.mxu0 %v1657
    %v1659 = vand.u32 %v998, 4294901760
    %v1660 = vsub.f32 %v998, %v1659
    %1661 = vmatpush1.msra.mxu0 %v1660
    %v1662 = vand.u32 %v1001, 4294901760
    %v1663 = vsub.f32 %v1001, %v1662
    %1664 = vmatprep.subr.mxu0 %v1663
    %v1665 = vand.u32 %v1000, 4294901760
    %v1666 = vsub.f32 %v1000, %v1665
    %1667 = vmatpush1.msra.mxu0 %v1666
    %v1668 = vand.u32 %v1003, 4294901760
    %v1669 = vsub.f32 %v1003, %v1668
    %1670 = vmatprep.subr.mxu0 %v1669
    %v1671 = vand.u32 %v1002, 4294901760
    %v1672 = vsub.f32 %v1002, %v1671
    %1673 = vmatpush1.msra.mxu0 %v1672
    %v1674 = vand.u32 %v1005, 4294901760
    %v1675 = vsub.f32 %v1005, %v1674
    %1676 = vmatprep.subr.mxu0 %v1675
    %v1677 = vand.u32 %v1004, 4294901760
    %v1678 = vsub.f32 %v1004, %v1677
    %1679 = vmatpush1.msra.mxu0 %v1678
    %v1680 = vand.u32 %v1007, 4294901760
    %v1681 = vsub.f32 %v1007, %v1680
    %1682 = vmatprep.subr.mxu0 %v1681
    %v1683 = vand.u32 %v1006, 4294901760
    %v1684 = vsub.f32 %v1006, %v1683
    %1685 = vmatpush1.msra.mxu0 %v1684
    %v1686 = vand.u32 %v1009, 4294901760
    %v1687 = vsub.f32 %v1009, %v1686
    %1688 = vmatprep.subr.mxu0 %v1687
    %v1689 = vand.u32 %v1008, 4294901760
    %v1690 = vsub.f32 %v1008, %v1689
    %1691 = vmatpush1.msra.mxu0 %v1690
    %v1692 = vand.u32 %v1011, 4294901760
    %v1693 = vsub.f32 %v1011, %v1692
    %1694 = vmatprep.subr.mxu0 %v1693
    %v1695 = vand.u32 %v1010, 4294901760
    %v1696 = vsub.f32 %v1010, %v1695
    %1697 = vmatpush1.msra.mxu0 %v1696
    %v1698 = vand.u32 %v1013, 4294901760
    %v1699 = vsub.f32 %v1013, %v1698
    %1700 = vmatprep.subr.mxu0 %v1699
    %v1701 = vand.u32 %v1012, 4294901760
    %v1702 = vsub.f32 %v1012, %v1701
    %1703 = vmatpush1.msra.mxu0 %v1702
    %v1704 = vand.u32 %v1015, 4294901760
    %v1705 = vsub.f32 %v1015, %v1704
    %1706 = vmatprep.subr.mxu0 %v1705
    %v1707 = vand.u32 %v1014, 4294901760
    %v1708 = vsub.f32 %v1014, %v1707
    %1709 = vmatpush1.msra.mxu0 %v1708
    %v1710 = vand.u32 %v1017, 4294901760
    %v1711 = vsub.f32 %v1017, %v1710
    %1712 = vmatprep.subr.mxu0 %v1711
    %v1713 = vand.u32 %v1016, 4294901760
    %v1714 = vsub.f32 %v1016, %v1713
    %1715 = vmatpush1.msra.mxu0 %v1714
    %v1716 = vand.u32 %v1019, 4294901760
    %v1717 = vsub.f32 %v1019, %v1716
    %1718 = vmatprep.subr.mxu0 %v1717
    %v1719 = vand.u32 %v1018, 4294901760
    %v1720 = vsub.f32 %v1018, %v1719
    %1721 = vmatpush1.msra.mxu0 %v1720
    %v1722 = vand.u32 %v1021, 4294901760
    %v1723 = vsub.f32 %v1021, %v1722
    %1724 = vmatprep.subr.mxu0 %v1723
    %v1725 = vand.u32 %v1020, 4294901760
    %v1726 = vsub.f32 %v1020, %v1725
    %1727 = vmatpush1.msra.mxu0 %v1726
    %v1728 = vand.u32 %v1023, 4294901760
    %v1729 = vsub.f32 %v1023, %v1728
    %1730 = vmatprep.subr.mxu0 %v1729
    %v1731 = vand.u32 %v1022, 4294901760
    %v1732 = vsub.f32 %v1022, %v1731
    %1733 = vmatpush1.msra.mxu0 %v1732
    %v1734 = vand.u32 %v1025, 4294901760
    %v1735 = vsub.f32 %v1025, %v1734
    %1736 = vmatprep.subr.mxu0 %v1735
    %v1737 = vand.u32 %v1024, 4294901760
    %v1738 = vsub.f32 %v1024, %v1737
    %1739 = vmatpush1.msra.mxu0 %v1738
    %v1740 = vand.u32 %v1027, 4294901760
    %v1741 = vsub.f32 %v1027, %v1740
    %1742 = vmatprep.subr.mxu0 %v1741
    %v1743 = vand.u32 %v1026, 4294901760
    %v1744 = vsub.f32 %v1026, %v1743
    %1745 = vmatpush1.msra.mxu0 %v1744
    %v1746 = vand.u32 %v1029, 4294901760
    %v1747 = vsub.f32 %v1029, %v1746
    %1748 = vmatprep.subr.mxu0 %v1747
    %v1749 = vand.u32 %v1028, 4294901760
    %v1750 = vsub.f32 %v1028, %v1749
    %1751 = vmatpush1.msra.mxu0 %v1750
    %v1752 = vand.u32 %v1031, 4294901760
    %v1753 = vsub.f32 %v1031, %v1752
    %1754 = vmatprep.subr.mxu0 %v1753
    %v1755 = vand.u32 %v1030, 4294901760
    %v1756 = vsub.f32 %v1030, %v1755
    %1757 = vmatpush1.msra.mxu0 %v1756
    %v1758 = vand.u32 %v1033, 4294901760
    %v1759 = vsub.f32 %v1033, %v1758
    %1760 = vmatprep.subr.mxu0 %v1759
    %v1761 = vand.u32 %v1032, 4294901760
    %v1762 = vsub.f32 %v1032, %v1761
    %1763 = vmatpush1.msra.mxu0 %v1762
    %v1764 = vand.u32 %v969, 4294901760
    %v1765 = vsub.f32 %v969, %v1764
    %1766 = vmatprep.mubr.f32.mxu0 %v1765
    %v1767 = vand.u32 %v968, 4294901760
    %v1768 = vsub.f32 %v968, %v1767
    %1769 = vmatmul.mubr.f32.gmra.mrb[0].mxu0 %v1768
    %v1770 = vpop.f32.mrb[0].mxu0
    %v1771 = vadd.f32 %v1568, %v1770
    %v1772 = vpop.f32.mrb[0].mxu0
    %v1773 = vadd.f32 %v1570, %v1772
    %1774 = vdwg.mxu0
    %v1775 = vand.u32 %v971, 4294901760
    %1776 = vmatprep.subr.mxu0 %v1775
    %v1777 = vand.u32 %v970, 4294901760
    %1778 = vmatpush1.msra.mxu0 %v1777
    %v1779 = vand.u32 %v973, 4294901760
    %1780 = vmatprep.subr.mxu0 %v1779
    %v1781 = vand.u32 %v972, 4294901760
    %1782 = vmatpush1.msra.mxu0 %v1781
    %v1783 = vand.u32 %v975, 4294901760
    %1784 = vmatprep.subr.mxu0 %v1783
    %v1785 = vand.u32 %v974, 4294901760
    %1786 = vmatpush1.msra.mxu0 %v1785
    %v1787 = vand.u32 %v977, 4294901760
    %1788 = vmatprep.subr.mxu0 %v1787
    %v1789 = vand.u32 %v976, 4294901760
    %1790 = vmatpush1.msra.mxu0 %v1789
    %v1791 = vand.u32 %v979, 4294901760
    %1792 = vmatprep.subr.mxu0 %v1791
    %v1793 = vand.u32 %v978, 4294901760
    %1794 = vmatpush1.msra.mxu0 %v1793
    %v1795 = vand.u32 %v981, 4294901760
    %1796 = vmatprep.subr.mxu0 %v1795
    %v1797 = vand.u32 %v980, 4294901760
    %1798 = vmatpush1.msra.mxu0 %v1797
    %v1799 = vand.u32 %v983, 4294901760
    %1800 = vmatprep.subr.mxu0 %v1799
    %v1801 = vand.u32 %v982, 4294901760
    %1802 = vmatpush1.msra.mxu0 %v1801
    %v1803 = vand.u32 %v985, 4294901760
    %1804 = vmatprep.subr.mxu0 %v1803
    %v1805 = vand.u32 %v984, 4294901760
    %1806 = vmatpush1.msra.mxu0 %v1805
    %v1807 = vand.u32 %v987, 4294901760
    %1808 = vmatprep.subr.mxu0 %v1807
    %v1809 = vand.u32 %v986, 4294901760
    %1810 = vmatpush1.msra.mxu0 %v1809
    %v1811 = vand.u32 %v989, 4294901760
    %1812 = vmatprep.subr.mxu0 %v1811
    %v1813 = vand.u32 %v988, 4294901760
    %1814 = vmatpush1.msra.mxu0 %v1813
    %v1815 = vand.u32 %v991, 4294901760
    %1816 = vmatprep.subr.mxu0 %v1815
    %v1817 = vand.u32 %v990, 4294901760
    %1818 = vmatpush1.msra.mxu0 %v1817
    %v1819 = vand.u32 %v993, 4294901760
    %1820 = vmatprep.subr.mxu0 %v1819
    %v1821 = vand.u32 %v992, 4294901760
    %1822 = vmatpush1.msra.mxu0 %v1821
    %v1823 = vand.u32 %v995, 4294901760
    %1824 = vmatprep.subr.mxu0 %v1823
    %v1825 = vand.u32 %v994, 4294901760
    %1826 = vmatpush1.msra.mxu0 %v1825
    %v1827 = vand.u32 %v997, 4294901760
    %1828 = vmatprep.subr.mxu0 %v1827
    %v1829 = vand.u32 %v996, 4294901760
    %1830 = vmatpush1.msra.mxu0 %v1829
    %v1831 = vand.u32 %v999, 4294901760
    %1832 = vmatprep.subr.mxu0 %v1831
    %v1833 = vand.u32 %v998, 4294901760
    %1834 = vmatpush1.msra.mxu0 %v1833
    %v1835 = vand.u32 %v1001, 4294901760
    %1836 = vmatprep.subr.mxu0 %v1835
    %v1837 = vand.u32 %v1000, 4294901760
    %1838 = vmatpush1.msra.mxu0 %v1837
    %v1839 = vand.u32 %v1003, 4294901760
    %1840 = vmatprep.subr.mxu0 %v1839
    %v1841 = vand.u32 %v1002, 4294901760
    %1842 = vmatpush1.msra.mxu0 %v1841
    %v1843 = vand.u32 %v1005, 4294901760
    %1844 = vmatprep.subr.mxu0 %v1843
    %v1845 = vand.u32 %v1004, 4294901760
    %1846 = vmatpush1.msra.mxu0 %v1845
    %v1847 = vand.u32 %v1007, 4294901760
    %1848 = vmatprep.subr.mxu0 %v1847
    %v1849 = vand.u32 %v1006, 4294901760
    %1850 = vmatpush1.msra.mxu0 %v1849
    %v1851 = vand.u32 %v1009, 4294901760
    %1852 = vmatprep.subr.mxu0 %v1851
    %v1853 = vand.u32 %v1008, 4294901760
    %1854 = vmatpush1.msra.mxu0 %v1853
    %v1855 = vand.u32 %v1011, 4294901760
    %1856 = vmatprep.subr.mxu0 %v1855
    %v1857 = vand.u32 %v1010, 4294901760
    %1858 = vmatpush1.msra.mxu0 %v1857
    %v1859 = vand.u32 %v1013, 4294901760
    %1860 = vmatprep.subr.mxu0 %v1859
    %v1861 = vand.u32 %v1012, 4294901760
    %1862 = vmatpush1.msra.mxu0 %v1861
    %v1863 = vand.u32 %v1015, 4294901760
    %1864 = vmatprep.subr.mxu0 %v1863
    %v1865 = vand.u32 %v1014, 4294901760
    %1866 = vmatpush1.msra.mxu0 %v1865
    %v1867 = vand.u32 %v1017, 4294901760
    %1868 = vmatprep.subr.mxu0 %v1867
    %v1869 = vand.u32 %v1016, 4294901760
    %1870 = vmatpush1.msra.mxu0 %v1869
    %v1871 = vand.u32 %v1019, 4294901760
    %1872 = vmatprep.subr.mxu0 %v1871
    %v1873 = vand.u32 %v1018, 4294901760
    %1874 = vmatpush1.msra.mxu0 %v1873
    %v1875 = vand.u32 %v1021, 4294901760
    %1876 = vmatprep.subr.mxu0 %v1875
    %v1877 = vand.u32 %v1020, 4294901760
    %1878 = vmatpush1.msra.mxu0 %v1877
    %v1879 = vand.u32 %v1023, 4294901760
    %1880 = vmatprep.subr.mxu0 %v1879
    %v1881 = vand.u32 %v1022, 4294901760
    %1882 = vmatpush1.msra.mxu0 %v1881
    %v1883 = vand.u32 %v1025, 4294901760
    %1884 = vmatprep.subr.mxu0 %v1883
    %v1885 = vand.u32 %v1024, 4294901760
    %1886 = vmatpush1.msra.mxu0 %v1885
    %v1887 = vand.u32 %v1027, 4294901760
    %1888 = vmatprep.subr.mxu0 %v1887
    %v1889 = vand.u32 %v1026, 4294901760
    %1890 = vmatpush1.msra.mxu0 %v1889
    %v1891 = vand.u32 %v1029, 4294901760
    %1892 = vmatprep.subr.mxu0 %v1891
    %v1893 = vand.u32 %v1028, 4294901760
    %1894 = vmatpush1.msra.mxu0 %v1893
    %v1895 = vand.u32 %v1031, 4294901760
    %1896 = vmatprep.subr.mxu0 %v1895
    %v1897 = vand.u32 %v1030, 4294901760
    %1898 = vmatpush1.msra.mxu0 %v1897
    %v1899 = vand.u32 %v1033, 4294901760
    %1900 = vmatprep.subr.mxu0 %v1899
    %v1901 = vand.u32 %v1032, 4294901760
    %1902 = vmatpush1.msra.mxu0 %v1901
    %v1903 = vand.u32 %v969, 4294901760
    %v1904 = vsub.f32 %v969, %v1903
    %v1905 = vand.u32 %v1904, 4294901760
    %1906 = vmatprep.mubr.f32.mxu0 %v1905
    %v1907 = vand.u32 %v968, 4294901760
    %v1908 = vsub.f32 %v968, %v1907
    %v1909 = vand.u32 %v1908, 4294901760
    %1910 = vmatmul.mubr.f32.gmra.mrb[0].mxu0 %v1909
    %v1911 = vpop.f32.mrb[0].mxu0
    %v1912 = vadd.f32 %v1771, %v1911
    %v1913 = vpop.f32.mrb[0].mxu0
    %v1914 = vadd.f32 %v1773, %v1913
    %1915 = vdwg.mxu0
    %v1916 = vand.u32 %v971, 4294901760
    %v1917 = vsub.f32 %v971, %v1916
    %v1918 = vand.u32 %v1917, 4294901760
    %1919 = vmatprep.subr.mxu0 %v1918
    %v1920 = vand.u32 %v970, 4294901760
    %v1921 = vsub.f32 %v970, %v1920
    %v1922 = vand.u32 %v1921, 4294901760
    %1923 = vmatpush1.msra.mxu0 %v1922
    %v1924 = vand.u32 %v973, 4294901760
    %v1925 = vsub.f32 %v973, %v1924
    %v1926 = vand.u32 %v1925, 4294901760
    %1927 = vmatprep.subr.mxu0 %v1926
    %v1928 = vand.u32 %v972, 4294901760
    %v1929 = vsub.f32 %v972, %v1928
    %v1930 = vand.u32 %v1929, 4294901760
    %1931 = vmatpush1.msra.mxu0 %v1930
    %v1932 = vand.u32 %v975, 4294901760
    %v1933 = vsub.f32 %v975, %v1932
    %v1934 = vand.u32 %v1933, 4294901760
    %1935 = vmatprep.subr.mxu0 %v1934
    %v1936 = vand.u32 %v974, 4294901760
    %v1937 = vsub.f32 %v974, %v1936
    %v1938 = vand.u32 %v1937, 4294901760
    %1939 = vmatpush1.msra.mxu0 %v1938
    %v1940 = vand.u32 %v977, 4294901760
    %v1941 = vsub.f32 %v977, %v1940
    %v1942 = vand.u32 %v1941, 4294901760
    %1943 = vmatprep.subr.mxu0 %v1942
    %v1944 = vand.u32 %v976, 4294901760
    %v1945 = vsub.f32 %v976, %v1944
    %v1946 = vand.u32 %v1945, 4294901760
    %1947 = vmatpush1.msra.mxu0 %v1946
    %v1948 = vand.u32 %v979, 4294901760
    %v1949 = vsub.f32 %v979, %v1948
    %v1950 = vand.u32 %v1949, 4294901760
    %1951 = vmatprep.subr.mxu0 %v1950
    %v1952 = vand.u32 %v978, 4294901760
    %v1953 = vsub.f32 %v978, %v1952
    %v1954 = vand.u32 %v1953, 4294901760
    %1955 = vmatpush1.msra.mxu0 %v1954
    %v1956 = vand.u32 %v981, 4294901760
    %v1957 = vsub.f32 %v981, %v1956
    %v1958 = vand.u32 %v1957, 4294901760
    %1959 = vmatprep.subr.mxu0 %v1958
    %v1960 = vand.u32 %v980, 4294901760
    %v1961 = vsub.f32 %v980, %v1960
    %v1962 = vand.u32 %v1961, 4294901760
    %1963 = vmatpush1.msra.mxu0 %v1962
    %v1964 = vand.u32 %v983, 4294901760
    %v1965 = vsub.f32 %v983, %v1964
    %v1966 = vand.u32 %v1965, 4294901760
    %1967 = vmatprep.subr.mxu0 %v1966
    %v1968 = vand.u32 %v982, 4294901760
    %v1969 = vsub.f32 %v982, %v1968
    %v1970 = vand.u32 %v1969, 4294901760
    %1971 = vmatpush1.msra.mxu0 %v1970
    %v1972 = vand.u32 %v985, 4294901760
    %v1973 = vsub.f32 %v985, %v1972
    %v1974 = vand.u32 %v1973, 4294901760
    %1975 = vmatprep.subr.mxu0 %v1974
    %v1976 = vand.u32 %v984, 4294901760
    %v1977 = vsub.f32 %v984, %v1976
    %v1978 = vand.u32 %v1977, 4294901760
    %1979 = vmatpush1.msra.mxu0 %v1978
    %v1980 = vand.u32 %v987, 4294901760
    %v1981 = vsub.f32 %v987, %v1980
    %v1982 = vand.u32 %v1981, 4294901760
    %1983 = vmatprep.subr.mxu0 %v1982
    %v1984 = vand.u32 %v986, 4294901760
    %v1985 = vsub.f32 %v986, %v1984
    %v1986 = vand.u32 %v1985, 4294901760
    %1987 = vmatpush1.msra.mxu0 %v1986
    %v1988 = vand.u32 %v989, 4294901760
    %v1989 = vsub.f32 %v989, %v1988
    %v1990 = vand.u32 %v1989, 4294901760
    %1991 = vmatprep.subr.mxu0 %v1990
    %v1992 = vand.u32 %v988, 4294901760
    %v1993 = vsub.f32 %v988, %v1992
    %v1994 = vand.u32 %v1993, 4294901760
    %1995 = vmatpush1.msra.mxu0 %v1994
    %v1996 = vand.u32 %v991, 4294901760
    %v1997 = vsub.f32 %v991, %v1996
    %v1998 = vand.u32 %v1997, 4294901760
    %1999 = vmatprep.subr.mxu0 %v1998
    %v2000 = vand.u32 %v990, 4294901760
    %v2001 = vsub.f32 %v990, %v2000
    %v2002 = vand.u32 %v2001, 4294901760
    %2003 = vmatpush1.msra.mxu0 %v2002
    %v2004 = vand.u32 %v993, 4294901760
    %v2005 = vsub.f32 %v993, %v2004
    %v2006 = vand.u32 %v2005, 4294901760
    %2007 = vmatprep.subr.mxu0 %v2006
    %v2008 = vand.u32 %v992, 4294901760
    %v2009 = vsub.f32 %v992, %v2008
    %v2010 = vand.u32 %v2009, 4294901760
    %2011 = vmatpush1.msra.mxu0 %v2010
    %v2012 = vand.u32 %v995, 4294901760
    %v2013 = vsub.f32 %v995, %v2012
    %v2014 = vand.u32 %v2013, 4294901760
    %2015 = vmatprep.subr.mxu0 %v2014
    %v2016 = vand.u32 %v994, 4294901760
    %v2017 = vsub.f32 %v994, %v2016
    %v2018 = vand.u32 %v2017, 4294901760
    %2019 = vmatpush1.msra.mxu0 %v2018
    %v2020 = vand.u32 %v997, 4294901760
    %v2021 = vsub.f32 %v997, %v2020
    %v2022 = vand.u32 %v2021, 4294901760
    %2023 = vmatprep.subr.mxu0 %v2022
    %v2024 = vand.u32 %v996, 4294901760
    %v2025 = vsub.f32 %v996, %v2024
    %v2026 = vand.u32 %v2025, 4294901760
    %2027 = vmatpush1.msra.mxu0 %v2026
    %v2028 = vand.u32 %v999, 4294901760
    %v2029 = vsub.f32 %v999, %v2028
    %v2030 = vand.u32 %v2029, 4294901760
    %2031 = vmatprep.subr.mxu0 %v2030
    %v2032 = vand.u32 %v998, 4294901760
    %v2033 = vsub.f32 %v998, %v2032
    %v2034 = vand.u32 %v2033, 4294901760
    %2035 = vmatpush1.msra.mxu0 %v2034
    %v2036 = vand.u32 %v1001, 4294901760
    %v2037 = vsub.f32 %v1001, %v2036
    %v2038 = vand.u32 %v2037, 4294901760
    %2039 = vmatprep.subr.mxu0 %v2038
    %v2040 = vand.u32 %v1000, 4294901760
    %v2041 = vsub.f32 %v1000, %v2040
    %v2042 = vand.u32 %v2041, 4294901760
    %2043 = vmatpush1.msra.mxu0 %v2042
    %v2044 = vand.u32 %v1003, 4294901760
    %v2045 = vsub.f32 %v1003, %v2044
    %v2046 = vand.u32 %v2045, 4294901760
    %2047 = vmatprep.subr.mxu0 %v2046
    %v2048 = vand.u32 %v1002, 4294901760
    %v2049 = vsub.f32 %v1002, %v2048
    %v2050 = vand.u32 %v2049, 4294901760
    %2051 = vmatpush1.msra.mxu0 %v2050
    %v2052 = vand.u32 %v1005, 4294901760
    %v2053 = vsub.f32 %v1005, %v2052
    %v2054 = vand.u32 %v2053, 4294901760
    %2055 = vmatprep.subr.mxu0 %v2054
    %v2056 = vand.u32 %v1004, 4294901760
    %v2057 = vsub.f32 %v1004, %v2056
    %v2058 = vand.u32 %v2057, 4294901760
    %2059 = vmatpush1.msra.mxu0 %v2058
    %v2060 = vand.u32 %v1007, 4294901760
    %v2061 = vsub.f32 %v1007, %v2060
    %v2062 = vand.u32 %v2061, 4294901760
    %2063 = vmatprep.subr.mxu0 %v2062
    %v2064 = vand.u32 %v1006, 4294901760
    %v2065 = vsub.f32 %v1006, %v2064
    %v2066 = vand.u32 %v2065, 4294901760
    %2067 = vmatpush1.msra.mxu0 %v2066
    %v2068 = vand.u32 %v1009, 4294901760
    %v2069 = vsub.f32 %v1009, %v2068
    %v2070 = vand.u32 %v2069, 4294901760
    %2071 = vmatprep.subr.mxu0 %v2070
    %v2072 = vand.u32 %v1008, 4294901760
    %v2073 = vsub.f32 %v1008, %v2072
    %v2074 = vand.u32 %v2073, 4294901760
    %2075 = vmatpush1.msra.mxu0 %v2074
    %v2076 = vand.u32 %v1011, 4294901760
    %v2077 = vsub.f32 %v1011, %v2076
    %v2078 = vand.u32 %v2077, 4294901760
    %2079 = vmatprep.subr.mxu0 %v2078
    %v2080 = vand.u32 %v1010, 4294901760
    %v2081 = vsub.f32 %v1010, %v2080
    %v2082 = vand.u32 %v2081, 4294901760
    %2083 = vmatpush1.msra.mxu0 %v2082
    %v2084 = vand.u32 %v1013, 4294901760
    %v2085 = vsub.f32 %v1013, %v2084
    %v2086 = vand.u32 %v2085, 4294901760
    %2087 = vmatprep.subr.mxu0 %v2086
    %v2088 = vand.u32 %v1012, 4294901760
    %v2089 = vsub.f32 %v1012, %v2088
    %v2090 = vand.u32 %v2089, 4294901760
    %2091 = vmatpush1.msra.mxu0 %v2090
    %v2092 = vand.u32 %v1015, 4294901760
    %v2093 = vsub.f32 %v1015, %v2092
    %v2094 = vand.u32 %v2093, 4294901760
    %2095 = vmatprep.subr.mxu0 %v2094
    %v2096 = vand.u32 %v1014, 4294901760
    %v2097 = vsub.f32 %v1014, %v2096
    %v2098 = vand.u32 %v2097, 4294901760
    %2099 = vmatpush1.msra.mxu0 %v2098
    %v2100 = vand.u32 %v1017, 4294901760
    %v2101 = vsub.f32 %v1017, %v2100
    %v2102 = vand.u32 %v2101, 4294901760
    %2103 = vmatprep.subr.mxu0 %v2102
    %v2104 = vand.u32 %v1016, 4294901760
    %v2105 = vsub.f32 %v1016, %v2104
    %v2106 = vand.u32 %v2105, 4294901760
    %2107 = vmatpush1.msra.mxu0 %v2106
    %v2108 = vand.u32 %v1019, 4294901760
    %v2109 = vsub.f32 %v1019, %v2108
    %v2110 = vand.u32 %v2109, 4294901760
    %2111 = vmatprep.subr.mxu0 %v2110
    %v2112 = vand.u32 %v1018, 4294901760
    %v2113 = vsub.f32 %v1018, %v2112
    %v2114 = vand.u32 %v2113, 4294901760
    %2115 = vmatpush1.msra.mxu0 %v2114
    %v2116 = vand.u32 %v1021, 4294901760
    %v2117 = vsub.f32 %v1021, %v2116
    %v2118 = vand.u32 %v2117, 4294901760
    %2119 = vmatprep.subr.mxu0 %v2118
    %v2120 = vand.u32 %v1020, 4294901760
    %v2121 = vsub.f32 %v1020, %v2120
    %v2122 = vand.u32 %v2121, 4294901760
    %2123 = vmatpush1.msra.mxu0 %v2122
    %v2124 = vand.u32 %v1023, 4294901760
    %v2125 = vsub.f32 %v1023, %v2124
    %v2126 = vand.u32 %v2125, 4294901760
    %2127 = vmatprep.subr.mxu0 %v2126
    %v2128 = vand.u32 %v1022, 4294901760
    %v2129 = vsub.f32 %v1022, %v2128
    %v2130 = vand.u32 %v2129, 4294901760
    %2131 = vmatpush1.msra.mxu0 %v2130
    %v2132 = vand.u32 %v1025, 4294901760
    %v2133 = vsub.f32 %v1025, %v2132
    %v2134 = vand.u32 %v2133, 4294901760
    %2135 = vmatprep.subr.mxu0 %v2134
    %v2136 = vand.u32 %v1024, 4294901760
    %v2137 = vsub.f32 %v1024, %v2136
    %v2138 = vand.u32 %v2137, 4294901760
    %2139 = vmatpush1.msra.mxu0 %v2138
    %v2140 = vand.u32 %v1027, 4294901760
    %v2141 = vsub.f32 %v1027, %v2140
    %v2142 = vand.u32 %v2141, 4294901760
    %2143 = vmatprep.subr.mxu0 %v2142
    %v2144 = vand.u32 %v1026, 4294901760
    %v2145 = vsub.f32 %v1026, %v2144
    %v2146 = vand.u32 %v2145, 4294901760
    %2147 = vmatpush1.msra.mxu0 %v2146
    %v2148 = vand.u32 %v1029, 4294901760
    %v2149 = vsub.f32 %v1029, %v2148
    %v2150 = vand.u32 %v2149, 4294901760
    %2151 = vmatprep.subr.mxu0 %v2150
    %v2152 = vand.u32 %v1028, 4294901760
    %v2153 = vsub.f32 %v1028, %v2152
    %v2154 = vand.u32 %v2153, 4294901760
    %2155 = vmatpush1.msra.mxu0 %v2154
    %v2156 = vand.u32 %v1031, 4294901760
    %v2157 = vsub.f32 %v1031, %v2156
    %v2158 = vand.u32 %v2157, 4294901760
    %2159 = vmatprep.subr.mxu0 %v2158
    %v2160 = vand.u32 %v1030, 4294901760
    %v2161 = vsub.f32 %v1030, %v2160
    %v2162 = vand.u32 %v2161, 4294901760
    %2163 = vmatpush1.msra.mxu0 %v2162
    %v2164 = vand.u32 %v1033, 4294901760
    %v2165 = vsub.f32 %v1033, %v2164
    %v2166 = vand.u32 %v2165, 4294901760
    %2167 = vmatprep.subr.mxu0 %v2166
    %v2168 = vand.u32 %v1032, 4294901760
    %v2169 = vsub.f32 %v1032, %v2168
    %v2170 = vand.u32 %v2169, 4294901760
    %2171 = vmatpush1.msra.mxu0 %v2170
    %v2172 = vand.u32 %v969, 4294901760
    %2173 = vmatprep.mubr.f32.mxu0 %v2172
    %v2174 = vand.u32 %v968, 4294901760
    %2175 = vmatmul.mubr.f32.gmra.mrb[0].mxu0 %v2174
    %v2176 = vpop.f32.mrb[0].mxu0
    %v2177 = vadd.f32 %v1912, %v2176
    %v2178 = vpop.f32.mrb[0].mxu0
    %v2179 = vadd.f32 %v1914, %v2178
    %2180 = vdwg.mxu0
    %v2181 = vand.u32 %v971, 4294901760
    %2182 = vmatprep.subr.mxu0 %v2181
    %v2183 = vand.u32 %v970, 4294901760
    %2184 = vmatpush1.msra.mxu0 %v2183
    %v2185 = vand.u32 %v973, 4294901760
    %2186 = vmatprep.subr.mxu0 %v2185
    %v2187 = vand.u32 %v972, 4294901760
    %2188 = vmatpush1.msra.mxu0 %v2187
    %v2189 = vand.u32 %v975, 4294901760
    %2190 = vmatprep.subr.mxu0 %v2189
    %v2191 = vand.u32 %v974, 4294901760
    %2192 = vmatpush1.msra.mxu0 %v2191
    %v2193 = vand.u32 %v977, 4294901760
    %2194 = vmatprep.subr.mxu0 %v2193
    %v2195 = vand.u32 %v976, 4294901760
    %2196 = vmatpush1.msra.mxu0 %v2195
    %v2197 = vand.u32 %v979, 4294901760
    %2198 = vmatprep.subr.mxu0 %v2197
    %v2199 = vand.u32 %v978, 4294901760
    %2200 = vmatpush1.msra.mxu0 %v2199
    %v2201 = vand.u32 %v981, 4294901760
    %2202 = vmatprep.subr.mxu0 %v2201
    %v2203 = vand.u32 %v980, 4294901760
    %2204 = vmatpush1.msra.mxu0 %v2203
    %v2205 = vand.u32 %v983, 4294901760
    %2206 = vmatprep.subr.mxu0 %v2205
    %v2207 = vand.u32 %v982, 4294901760
    %2208 = vmatpush1.msra.mxu0 %v2207
    %v2209 = vand.u32 %v985, 4294901760
    %2210 = vmatprep.subr.mxu0 %v2209
    %v2211 = vand.u32 %v984, 4294901760
    %2212 = vmatpush1.msra.mxu0 %v2211
    %v2213 = vand.u32 %v987, 4294901760
    %2214 = vmatprep.subr.mxu0 %v2213
    %v2215 = vand.u32 %v986, 4294901760
    %2216 = vmatpush1.msra.mxu0 %v2215
    %v2217 = vand.u32 %v989, 4294901760
    %2218 = vmatprep.subr.mxu0 %v2217
    %v2219 = vand.u32 %v988, 4294901760
    %2220 = vmatpush1.msra.mxu0 %v2219
    %v2221 = vand.u32 %v991, 4294901760
    %2222 = vmatprep.subr.mxu0 %v2221
    %v2223 = vand.u32 %v990, 4294901760
    %2224 = vmatpush1.msra.mxu0 %v2223
    %v2225 = vand.u32 %v993, 4294901760
    %2226 = vmatprep.subr.mxu0 %v2225
    %v2227 = vand.u32 %v992, 4294901760
    %2228 = vmatpush1.msra.mxu0 %v2227
    %v2229 = vand.u32 %v995, 4294901760
    %2230 = vmatprep.subr.mxu0 %v2229
    %v2231 = vand.u32 %v994, 4294901760
    %2232 = vmatpush1.msra.mxu0 %v2231
    %v2233 = vand.u32 %v997, 4294901760
    %2234 = vmatprep.subr.mxu0 %v2233
    %v2235 = vand.u32 %v996, 4294901760
    %2236 = vmatpush1.msra.mxu0 %v2235
    %v2237 = vand.u32 %v999, 4294901760
    %2238 = vmatprep.subr.mxu0 %v2237
    %v2239 = vand.u32 %v998, 4294901760
    %2240 = vmatpush1.msra.mxu0 %v2239
    %v2241 = vand.u32 %v1001, 4294901760
    %2242 = vmatprep.subr.mxu0 %v2241
    %v2243 = vand.u32 %v1000, 4294901760
    %2244 = vmatpush1.msra.mxu0 %v2243
    %v2245 = vand.u32 %v1003, 4294901760
    %2246 = vmatprep.subr.mxu0 %v2245
    %v2247 = vand.u32 %v1002, 4294901760
    %2248 = vmatpush1.msra.mxu0 %v2247
    %v2249 = vand.u32 %v1005, 4294901760
    %2250 = vmatprep.subr.mxu0 %v2249
    %v2251 = vand.u32 %v1004, 4294901760
    %2252 = vmatpush1.msra.mxu0 %v2251
    %v2253 = vand.u32 %v1007, 4294901760
    %2254 = vmatprep.subr.mxu0 %v2253
    %v2255 = vand.u32 %v1006, 4294901760
    %2256 = vmatpush1.msra.mxu0 %v2255
    %v2257 = vand.u32 %v1009, 4294901760
    %2258 = vmatprep.subr.mxu0 %v2257
    %v2259 = vand.u32 %v1008, 4294901760
    %2260 = vmatpush1.msra.mxu0 %v2259
    %v2261 = vand.u32 %v1011, 4294901760
    %2262 = vmatprep.subr.mxu0 %v2261
    %v2263 = vand.u32 %v1010, 4294901760
    %2264 = vmatpush1.msra.mxu0 %v2263
    %v2265 = vand.u32 %v1013, 4294901760
    %2266 = vmatprep.subr.mxu0 %v2265
    %v2267 = vand.u32 %v1012, 4294901760
    %2268 = vmatpush1.msra.mxu0 %v2267
    %v2269 = vand.u32 %v1015, 4294901760
    %2270 = vmatprep.subr.mxu0 %v2269
    %v2271 = vand.u32 %v1014, 4294901760
    %2272 = vmatpush1.msra.mxu0 %v2271
    %v2273 = vand.u32 %v1017, 4294901760
    %2274 = vmatprep.subr.mxu0 %v2273
    %v2275 = vand.u32 %v1016, 4294901760
    %2276 = vmatpush1.msra.mxu0 %v2275
    %v2277 = vand.u32 %v1019, 4294901760
    %2278 = vmatprep.subr.mxu0 %v2277
    %v2279 = vand.u32 %v1018, 4294901760
    %2280 = vmatpush1.msra.mxu0 %v2279
    %v2281 = vand.u32 %v1021, 4294901760
    %2282 = vmatprep.subr.mxu0 %v2281
    %v2283 = vand.u32 %v1020, 4294901760
    %2284 = vmatpush1.msra.mxu0 %v2283
    %v2285 = vand.u32 %v1023, 4294901760
    %2286 = vmatprep.subr.mxu0 %v2285
    %v2287 = vand.u32 %v1022, 4294901760
    %2288 = vmatpush1.msra.mxu0 %v2287
    %v2289 = vand.u32 %v1025, 4294901760
    %2290 = vmatprep.subr.mxu0 %v2289
    %v2291 = vand.u32 %v1024, 4294901760
    %2292 = vmatpush1.msra.mxu0 %v2291
    %v2293 = vand.u32 %v1027, 4294901760
    %2294 = vmatprep.subr.mxu0 %v2293
    %v2295 = vand.u32 %v1026, 4294901760
    %2296 = vmatpush1.msra.mxu0 %v2295
    %v2297 = vand.u32 %v1029, 4294901760
    %2298 = vmatprep.subr.mxu0 %v2297
    %v2299 = vand.u32 %v1028, 4294901760
    %2300 = vmatpush1.msra.mxu0 %v2299
    %v2301 = vand.u32 %v1031, 4294901760
    %2302 = vmatprep.subr.mxu0 %v2301
    %v2303 = vand.u32 %v1030, 4294901760
    %2304 = vmatpush1.msra.mxu0 %v2303
    %v2305 = vand.u32 %v1033, 4294901760
    %2306 = vmatprep.subr.mxu0 %v2305
    %v2307 = vand.u32 %v1032, 4294901760
    %2308 = vmatpush1.msra.mxu0 %v2307
    %v2309 = vand.u32 %v969, 4294901760
    %2310 = vmatprep.mubr.f32.mxu0 %v2309
    %v2311 = vand.u32 %v968, 4294901760
    %2312 = vmatmul.mubr.f32.gmra.mrb[0].mxu0 %v2311
    %v2313 = vpop.f32.mrb[0].mxu0
    %v2314 = vadd.f32 %v2177, %v2313
    %v2315 = vpop.f32.mrb[0].mxu0
    %v2316 = vadd.f32 %v2179, %v2315
    %2317 = vdwg.mxu0
    %v2318 = vsub.f32 %v968, %v2314
    %v2319 = vsub.f32 %v969, %v2316
    %v2320 = vmul.f32 %v2318, %v2318
    %v2321 = vmul.f32 %v2319, %v2319
    %v2322 = vand.u32 %v971, 4294901760
    %2323 = vmatprep.subr.mxu0 %v2322
    %v2324 = vand.u32 %v970, 4294901760
    %2325 = vmatpush1.msra.mxu0 %v2324
    %v2326 = vand.u32 %v973, 4294901760
    %2327 = vmatprep.subr.mxu0 %v2326
    %v2328 = vand.u32 %v972, 4294901760
    %2329 = vmatpush1.msra.mxu0 %v2328
    %v2330 = vand.u32 %v975, 4294901760
    %2331 = vmatprep.subr.mxu0 %v2330
    %v2332 = vand.u32 %v974, 4294901760
    %2333 = vmatpush1.msra.mxu0 %v2332
    %v2334 = vand.u32 %v977, 4294901760
    %2335 = vmatprep.subr.mxu0 %v2334
    %v2336 = vand.u32 %v976, 4294901760
    %2337 = vmatpush1.msra.mxu0 %v2336
    %v2338 = vand.u32 %v979, 4294901760
    %2339 = vmatprep.subr.mxu0 %v2338
    %v2340 = vand.u32 %v978, 4294901760
    %2341 = vmatpush1.msra.mxu0 %v2340
    %v2342 = vand.u32 %v981, 4294901760
    %2343 = vmatprep.subr.mxu0 %v2342
    %v2344 = vand.u32 %v980, 4294901760
    %2345 = vmatpush1.msra.mxu0 %v2344
    %v2346 = vand.u32 %v983, 4294901760
    %2347 = vmatprep.subr.mxu0 %v2346
    %v2348 = vand.u32 %v982, 4294901760
    %2349 = vmatpush1.msra.mxu0 %v2348
    %v2350 = vand.u32 %v985, 4294901760
    %2351 = vmatprep.subr.mxu0 %v2350
    %v2352 = vand.u32 %v984, 4294901760
    %2353 = vmatpush1.msra.mxu0 %v2352
    %v2354 = vand.u32 %v987, 4294901760
    %2355 = vmatprep.subr.mxu0 %v2354
    %v2356 = vand.u32 %v986, 4294901760
    %2357 = vmatpush1.msra.mxu0 %v2356
    %v2358 = vand.u32 %v989, 4294901760
    %2359 = vmatprep.subr.mxu0 %v2358
    %v2360 = vand.u32 %v988, 4294901760
    %2361 = vmatpush1.msra.mxu0 %v2360
    %v2362 = vand.u32 %v991, 4294901760
    %2363 = vmatprep.subr.mxu0 %v2362
    %v2364 = vand.u32 %v990, 4294901760
    %2365 = vmatpush1.msra.mxu0 %v2364
    %v2366 = vand.u32 %v993, 4294901760
    %2367 = vmatprep.subr.mxu0 %v2366
    %v2368 = vand.u32 %v992, 4294901760
    %2369 = vmatpush1.msra.mxu0 %v2368
    %v2370 = vand.u32 %v995, 4294901760
    %2371 = vmatprep.subr.mxu0 %v2370
    %v2372 = vand.u32 %v994, 4294901760
    %2373 = vmatpush1.msra.mxu0 %v2372
    %v2374 = vand.u32 %v997, 4294901760
    %2375 = vmatprep.subr.mxu0 %v2374
    %v2376 = vand.u32 %v996, 4294901760
    %2377 = vmatpush1.msra.mxu0 %v2376
    %v2378 = vand.u32 %v999, 4294901760
    %2379 = vmatprep.subr.mxu0 %v2378
    %v2380 = vand.u32 %v998, 4294901760
    %2381 = vmatpush1.msra.mxu0 %v2380
    %v2382 = vand.u32 %v1001, 4294901760
    %2383 = vmatprep.subr.mxu0 %v2382
    %v2384 = vand.u32 %v1000, 4294901760
    %2385 = vmatpush1.msra.mxu0 %v2384
    %v2386 = vand.u32 %v1003, 4294901760
    %2387 = vmatprep.subr.mxu0 %v2386
    %v2388 = vand.u32 %v1002, 4294901760
    %2389 = vmatpush1.msra.mxu0 %v2388
    %v2390 = vand.u32 %v1005, 4294901760
    %2391 = vmatprep.subr.mxu0 %v2390
    %v2392 = vand.u32 %v1004, 4294901760
    %2393 = vmatpush1.msra.mxu0 %v2392
    %v2394 = vand.u32 %v1007, 4294901760
    %2395 = vmatprep.subr.mxu0 %v2394
    %v2396 = vand.u32 %v1006, 4294901760
    %2397 = vmatpush1.msra.mxu0 %v2396
    %v2398 = vand.u32 %v1009, 4294901760
    %2399 = vmatprep.subr.mxu0 %v2398
    %v2400 = vand.u32 %v1008, 4294901760
    %2401 = vmatpush1.msra.mxu0 %v2400
    %v2402 = vand.u32 %v1011, 4294901760
    %2403 = vmatprep.subr.mxu0 %v2402
    %v2404 = vand.u32 %v1010, 4294901760
    %2405 = vmatpush1.msra.mxu0 %v2404
    %v2406 = vand.u32 %v1013, 4294901760
    %2407 = vmatprep.subr.mxu0 %v2406
    %v2408 = vand.u32 %v1012, 4294901760
    %2409 = vmatpush1.msra.mxu0 %v2408
    %v2410 = vand.u32 %v1015, 4294901760
    %2411 = vmatprep.subr.mxu0 %v2410
    %v2412 = vand.u32 %v1014, 4294901760
    %2413 = vmatpush1.msra.mxu0 %v2412
    %v2414 = vand.u32 %v1017, 4294901760
    %2415 = vmatprep.subr.mxu0 %v2414
    %v2416 = vand.u32 %v1016, 4294901760
    %2417 = vmatpush1.msra.mxu0 %v2416
    %v2418 = vand.u32 %v1019, 4294901760
    %2419 = vmatprep.subr.mxu0 %v2418
    %v2420 = vand.u32 %v1018, 4294901760
    %2421 = vmatpush1.msra.mxu0 %v2420
    %v2422 = vand.u32 %v1021, 4294901760
    %2423 = vmatprep.subr.mxu0 %v2422
    %v2424 = vand.u32 %v1020, 4294901760
    %2425 = vmatpush1.msra.mxu0 %v2424
    %v2426 = vand.u32 %v1023, 4294901760
    %2427 = vmatprep.subr.mxu0 %v2426
    %v2428 = vand.u32 %v1022, 4294901760
    %2429 = vmatpush1.msra.mxu0 %v2428
    %v2430 = vand.u32 %v1025, 4294901760
    %2431 = vmatprep.subr.mxu0 %v2430
    %v2432 = vand.u32 %v1024, 4294901760
    %2433 = vmatpush1.msra.mxu0 %v2432
    %v2434 = vand.u32 %v1027, 4294901760
    %2435 = vmatprep.subr.mxu0 %v2434
    %v2436 = vand.u32 %v1026, 4294901760
    %2437 = vmatpush1.msra.mxu0 %v2436
    %v2438 = vand.u32 %v1029, 4294901760
    %2439 = vmatprep.subr.mxu0 %v2438
    %v2440 = vand.u32 %v1028, 4294901760
    %2441 = vmatpush1.msra.mxu0 %v2440
    %v2442 = vand.u32 %v1031, 4294901760
    %2443 = vmatprep.subr.mxu0 %v2442
    %v2444 = vand.u32 %v1030, 4294901760
    %2445 = vmatpush1.msra.mxu0 %v2444
    %v2446 = vand.u32 %v1033, 4294901760
    %2447 = vmatprep.subr.mxu0 %v2446
    %v2448 = vand.u32 %v1032, 4294901760
    %2449 = vmatpush1.msra.mxu0 %v2448
    %v2450 = vand.u32 %v2321, 4294901760
    %v2451 = vsub.f32 %v2321, %v2450
    %v2452 = vand.u32 %v2451, 4294901760
    %v2453 = vsub.f32 %v2451, %v2452
    %v2454 = vand.u32 %v2453, 4294901760
    %2455 = vmatprep.mubr.f32.mxu0 %v2454
    %v2456 = vand.u32 %v2320, 4294901760
    %v2457 = vsub.f32 %v2320, %v2456
    %v2458 = vand.u32 %v2457, 4294901760
    %v2459 = vsub.f32 %v2457, %v2458
    %v2460 = vand.u32 %v2459, 4294901760
    %2461 = vmatmul.mubr.f32.gmra.mrb[0].mxu0 %v2460
    %v2462 = vpop.f32.mrb[0].mxu0
    %v2463 = vadd.f32 1e-05, %v2462
    %v2464 = vpop.f32.mrb[0].mxu0
    %v2465 = vadd.f32 1e-05, %v2464
    %2466 = vdwg.mxu0
    %v2467 = vand.u32 %v971, 4294901760
    %v2468 = vsub.f32 %v971, %v2467
    %v2469 = vand.u32 %v2468, 4294901760
    %v2470 = vsub.f32 %v2468, %v2469
    %v2471 = vand.u32 %v2470, 4294901760
    %2472 = vmatprep.subr.mxu0 %v2471
    %v2473 = vand.u32 %v970, 4294901760
    %v2474 = vsub.f32 %v970, %v2473
    %v2475 = vand.u32 %v2474, 4294901760
    %v2476 = vsub.f32 %v2474, %v2475
    %v2477 = vand.u32 %v2476, 4294901760
    %2478 = vmatpush1.msra.mxu0 %v2477
    %v2479 = vand.u32 %v973, 4294901760
    %v2480 = vsub.f32 %v973, %v2479
    %v2481 = vand.u32 %v2480, 4294901760
    %v2482 = vsub.f32 %v2480, %v2481
    %v2483 = vand.u32 %v2482, 4294901760
    %2484 = vmatprep.subr.mxu0 %v2483
    %v2485 = vand.u32 %v972, 4294901760
    %v2486 = vsub.f32 %v972, %v2485
    %v2487 = vand.u32 %v2486, 4294901760
    %v2488 = vsub.f32 %v2486, %v2487
    %v2489 = vand.u32 %v2488, 4294901760
    %2490 = vmatpush1.msra.mxu0 %v2489
    %v2491 = vand.u32 %v975, 4294901760
    %v2492 = vsub.f32 %v975, %v2491
    %v2493 = vand.u32 %v2492, 4294901760
    %v2494 = vsub.f32 %v2492, %v2493
    %v2495 = vand.u32 %v2494, 4294901760
    %2496 = vmatprep.subr.mxu0 %v2495
    %v2497 = vand.u32 %v974, 4294901760
    %v2498 = vsub.f32 %v974, %v2497
    %v2499 = vand.u32 %v2498, 4294901760
    %v2500 = vsub.f32 %v2498, %v2499
    %v2501 = vand.u32 %v2500, 4294901760
    %2502 = vmatpush1.msra.mxu0 %v2501
    %v2503 = vand.u32 %v977, 4294901760
    %v2504 = vsub.f32 %v977, %v2503
    %v2505 = vand.u32 %v2504, 4294901760
    %v2506 = vsub.f32 %v2504, %v2505
    %v2507 = vand.u32 %v2506, 4294901760
    %2508 = vmatprep.subr.mxu0 %v2507
    %v2509 = vand.u32 %v976, 4294901760
    %v2510 = vsub.f32 %v976, %v2509
    %v2511 = vand.u32 %v2510, 4294901760
    %v2512 = vsub.f32 %v2510, %v2511
    %v2513 = vand.u32 %v2512, 4294901760
    %2514 = vmatpush1.msra.mxu0 %v2513
    %v2515 = vand.u32 %v979, 4294901760
    %v2516 = vsub.f32 %v979, %v2515
    %v2517 = vand.u32 %v2516, 4294901760
    %v2518 = vsub.f32 %v2516, %v2517
    %v2519 = vand.u32 %v2518, 4294901760
    %2520 = vmatprep.subr.mxu0 %v2519
    %v2521 = vand.u32 %v978, 4294901760
    %v2522 = vsub.f32 %v978, %v2521
    %v2523 = vand.u32 %v2522, 4294901760
    %v2524 = vsub.f32 %v2522, %v2523
    %v2525 = vand.u32 %v2524, 4294901760
    %2526 = vmatpush1.msra.mxu0 %v2525
    %v2527 = vand.u32 %v981, 4294901760
    %v2528 = vsub.f32 %v981, %v2527
    %v2529 = vand.u32 %v2528, 4294901760
    %v2530 = vsub.f32 %v2528, %v2529
    %v2531 = vand.u32 %v2530, 4294901760
    %2532 = vmatprep.subr.mxu0 %v2531
    %v2533 = vand.u32 %v980, 4294901760
    %v2534 = vsub.f32 %v980, %v2533
    %v2535 = vand.u32 %v2534, 4294901760
    %v2536 = vsub.f32 %v2534, %v2535
    %v2537 = vand.u32 %v2536, 4294901760
    %2538 = vmatpush1.msra.mxu0 %v2537
    %v2539 = vand.u32 %v983, 4294901760
    %v2540 = vsub.f32 %v983, %v2539
    %v2541 = vand.u32 %v2540, 4294901760
    %v2542 = vsub.f32 %v2540, %v2541
    %v2543 = vand.u32 %v2542, 4294901760
    %2544 = vmatprep.subr.mxu0 %v2543
    %v2545 = vand.u32 %v982, 4294901760
    %v2546 = vsub.f32 %v982, %v2545
    %v2547 = vand.u32 %v2546, 4294901760
    %v2548 = vsub.f32 %v2546, %v2547
    %v2549 = vand.u32 %v2548, 4294901760
    %2550 = vmatpush1.msra.mxu0 %v2549
    %v2551 = vand.u32 %v985, 4294901760
    %v2552 = vsub.f32 %v985, %v2551
    %v2553 = vand.u32 %v2552, 4294901760
    %v2554 = vsub.f32 %v2552, %v2553
    %v2555 = vand.u32 %v2554, 4294901760
    %2556 = vmatprep.subr.mxu0 %v2555
    %v2557 = vand.u32 %v984, 4294901760
    %v2558 = vsub.f32 %v984, %v2557
    %v2559 = vand.u32 %v2558, 4294901760
    %v2560 = vsub.f32 %v2558, %v2559
    %v2561 = vand.u32 %v2560, 4294901760
    %2562 = vmatpush1.msra.mxu0 %v2561
    %v2563 = vand.u32 %v987, 4294901760
    %v2564 = vsub.f32 %v987, %v2563
    %v2565 = vand.u32 %v2564, 4294901760
    %v2566 = vsub.f32 %v2564, %v2565
    %v2567 = vand.u32 %v2566, 4294901760
    %2568 = vmatprep.subr.mxu0 %v2567
    %v2569 = vand.u32 %v986, 4294901760
    %v2570 = vsub.f32 %v986, %v2569
    %v2571 = vand.u32 %v2570, 4294901760
    %v2572 = vsub.f32 %v2570, %v2571
    %v2573 = vand.u32 %v2572, 4294901760
    %2574 = vmatpush1.msra.mxu0 %v2573
    %v2575 = vand.u32 %v989, 4294901760
    %v2576 = vsub.f32 %v989, %v2575
    %v2577 = vand.u32 %v2576, 4294901760
    %v2578 = vsub.f32 %v2576, %v2577
    %v2579 = vand.u32 %v2578, 4294901760
    %2580 = vmatprep.subr.mxu0 %v2579
    %v2581 = vand.u32 %v988, 4294901760
    %v2582 = vsub.f32 %v988, %v2581
    %v2583 = vand.u32 %v2582, 4294901760
    %v2584 = vsub.f32 %v2582, %v2583
    %v2585 = vand.u32 %v2584, 4294901760
    %2586 = vmatpush1.msra.mxu0 %v2585
    %v2587 = vand.u32 %v991, 4294901760
    %v2588 = vsub.f32 %v991, %v2587
    %v2589 = vand.u32 %v2588, 4294901760
    %v2590 = vsub.f32 %v2588, %v2589
    %v2591 = vand.u32 %v2590, 4294901760
    %2592 = vmatprep.subr.mxu0 %v2591
    %v2593 = vand.u32 %v990, 4294901760
    %v2594 = vsub.f32 %v990, %v2593
    %v2595 = vand.u32 %v2594, 4294901760
    %v2596 = vsub.f32 %v2594, %v2595
    %v2597 = vand.u32 %v2596, 4294901760
    %2598 = vmatpush1.msra.mxu0 %v2597
    %v2599 = vand.u32 %v993, 4294901760
    %v2600 = vsub.f32 %v993, %v2599
    %v2601 = vand.u32 %v2600, 4294901760
    %v2602 = vsub.f32 %v2600, %v2601
    %v2603 = vand.u32 %v2602, 4294901760
    %2604 = vmatprep.subr.mxu0 %v2603
    %v2605 = vand.u32 %v992, 4294901760
    %v2606 = vsub.f32 %v992, %v2605
    %v2607 = vand.u32 %v2606, 4294901760
    %v2608 = vsub.f32 %v2606, %v2607
    %v2609 = vand.u32 %v2608, 4294901760
    %2610 = vmatpush1.msra.mxu0 %v2609
    %v2611 = vand.u32 %v995, 4294901760
    %v2612 = vsub.f32 %v995, %v2611
    %v2613 = vand.u32 %v2612, 4294901760
    %v2614 = vsub.f32 %v2612, %v2613
    %v2615 = vand.u32 %v2614, 4294901760
    %2616 = vmatprep.subr.mxu0 %v2615
    %v2617 = vand.u32 %v994, 4294901760
    %v2618 = vsub.f32 %v994, %v2617
    %v2619 = vand.u32 %v2618, 4294901760
    %v2620 = vsub.f32 %v2618, %v2619
    %v2621 = vand.u32 %v2620, 4294901760
    %2622 = vmatpush1.msra.mxu0 %v2621
    %v2623 = vand.u32 %v997, 4294901760
    %v2624 = vsub.f32 %v997, %v2623
    %v2625 = vand.u32 %v2624, 4294901760
    %v2626 = vsub.f32 %v2624, %v2625
    %v2627 = vand.u32 %v2626, 4294901760
    %2628 = vmatprep.subr.mxu0 %v2627
    %v2629 = vand.u32 %v996, 4294901760
    %v2630 = vsub.f32 %v996, %v2629
    %v2631 = vand.u32 %v2630, 4294901760
    %v2632 = vsub.f32 %v2630, %v2631
    %v2633 = vand.u32 %v2632, 4294901760
    %2634 = vmatpush1.msra.mxu0 %v2633
    %v2635 = vand.u32 %v999, 4294901760
    %v2636 = vsub.f32 %v999, %v2635
    %v2637 = vand.u32 %v2636, 4294901760
    %v2638 = vsub.f32 %v2636, %v2637
    %v2639 = vand.u32 %v2638, 4294901760
    %2640 = vmatprep.subr.mxu0 %v2639
    %v2641 = vand.u32 %v998, 4294901760
    %v2642 = vsub.f32 %v998, %v2641
    %v2643 = vand.u32 %v2642, 4294901760
    %v2644 = vsub.f32 %v2642, %v2643
    %v2645 = vand.u32 %v2644, 4294901760
    %2646 = vmatpush1.msra.mxu0 %v2645
    %v2647 = vand.u32 %v1001, 4294901760
    %v2648 = vsub.f32 %v1001, %v2647
    %v2649 = vand.u32 %v2648, 4294901760
    %v2650 = vsub.f32 %v2648, %v2649
    %v2651 = vand.u32 %v2650, 4294901760
    %2652 = vmatprep.subr.mxu0 %v2651
    %v2653 = vand.u32 %v1000, 4294901760
    %v2654 = vsub.f32 %v1000, %v2653
    %v2655 = vand.u32 %v2654, 4294901760
    %v2656 = vsub.f32 %v2654, %v2655
    %v2657 = vand.u32 %v2656, 4294901760
    %2658 = vmatpush1.msra.mxu0 %v2657
    %v2659 = vand.u32 %v1003, 4294901760
    %v2660 = vsub.f32 %v1003, %v2659
    %v2661 = vand.u32 %v2660, 4294901760
    %v2662 = vsub.f32 %v2660, %v2661
    %v2663 = vand.u32 %v2662, 4294901760
    %2664 = vmatprep.subr.mxu0 %v2663
    %v2665 = vand.u32 %v1002, 4294901760
    %v2666 = vsub.f32 %v1002, %v2665
    %v2667 = vand.u32 %v2666, 4294901760
    %v2668 = vsub.f32 %v2666, %v2667
    %v2669 = vand.u32 %v2668, 4294901760
    %2670 = vmatpush1.msra.mxu0 %v2669
    %v2671 = vand.u32 %v1005, 4294901760
    %v2672 = vsub.f32 %v1005, %v2671
    %v2673 = vand.u32 %v2672, 4294901760
    %v2674 = vsub.f32 %v2672, %v2673
    %v2675 = vand.u32 %v2674, 4294901760
    %2676 = vmatprep.subr.mxu0 %v2675
    %v2677 = vand.u32 %v1004, 4294901760
    %v2678 = vsub.f32 %v1004, %v2677
    %v2679 = vand.u32 %v2678, 4294901760
    %v2680 = vsub.f32 %v2678, %v2679
    %v2681 = vand.u32 %v2680, 4294901760
    %2682 = vmatpush1.msra.mxu0 %v2681
    %v2683 = vand.u32 %v1007, 4294901760
    %v2684 = vsub.f32 %v1007, %v2683
    %v2685 = vand.u32 %v2684, 4294901760
    %v2686 = vsub.f32 %v2684, %v2685
    %v2687 = vand.u32 %v2686, 4294901760
    %2688 = vmatprep.subr.mxu0 %v2687
    %v2689 = vand.u32 %v1006, 4294901760
    %v2690 = vsub.f32 %v1006, %v2689
    %v2691 = vand.u32 %v2690, 4294901760
    %v2692 = vsub.f32 %v2690, %v2691
    %v2693 = vand.u32 %v2692, 4294901760
    %2694 = vmatpush1.msra.mxu0 %v2693
    %v2695 = vand.u32 %v1009, 4294901760
    %v2696 = vsub.f32 %v1009, %v2695
    %v2697 = vand.u32 %v2696, 4294901760
    %v2698 = vsub.f32 %v2696, %v2697
    %v2699 = vand.u32 %v2698, 4294901760
    %2700 = vmatprep.subr.mxu0 %v2699
    %v2701 = vand.u32 %v1008, 4294901760
    %v2702 = vsub.f32 %v1008, %v2701
    %v2703 = vand.u32 %v2702, 4294901760
    %v2704 = vsub.f32 %v2702, %v2703
    %v2705 = vand.u32 %v2704, 4294901760
    %2706 = vmatpush1.msra.mxu0 %v2705
    %v2707 = vand.u32 %v1011, 4294901760
    %v2708 = vsub.f32 %v1011, %v2707
    %v2709 = vand.u32 %v2708, 4294901760
    %v2710 = vsub.f32 %v2708, %v2709
    %v2711 = vand.u32 %v2710, 4294901760
    %2712 = vmatprep.subr.mxu0 %v2711
    %v2713 = vand.u32 %v1010, 4294901760
    %v2714 = vsub.f32 %v1010, %v2713
    %v2715 = vand.u32 %v2714, 4294901760
    %v2716 = vsub.f32 %v2714, %v2715
    %v2717 = vand.u32 %v2716, 4294901760
    %2718 = vmatpush1.msra.mxu0 %v2717
    %v2719 = vand.u32 %v1013, 4294901760
    %v2720 = vsub.f32 %v1013, %v2719
    %v2721 = vand.u32 %v2720, 4294901760
    %v2722 = vsub.f32 %v2720, %v2721
    %v2723 = vand.u32 %v2722, 4294901760
    %2724 = vmatprep.subr.mxu0 %v2723
    %v2725 = vand.u32 %v1012, 4294901760
    %v2726 = vsub.f32 %v1012, %v2725
    %v2727 = vand.u32 %v2726, 4294901760
    %v2728 = vsub.f32 %v2726, %v2727
    %v2729 = vand.u32 %v2728, 4294901760
    %2730 = vmatpush1.msra.mxu0 %v2729
    %v2731 = vand.u32 %v1015, 4294901760
    %v2732 = vsub.f32 %v1015, %v2731
    %v2733 = vand.u32 %v2732, 4294901760
    %v2734 = vsub.f32 %v2732, %v2733
    %v2735 = vand.u32 %v2734, 4294901760
    %2736 = vmatprep.subr.mxu0 %v2735
    %v2737 = vand.u32 %v1014, 4294901760
    %v2738 = vsub.f32 %v1014, %v2737
    %v2739 = vand.u32 %v2738, 4294901760
    %v2740 = vsub.f32 %v2738, %v2739
    %v2741 = vand.u32 %v2740, 4294901760
    %2742 = vmatpush1.msra.mxu0 %v2741
    %v2743 = vand.u32 %v1017, 4294901760
    %v2744 = vsub.f32 %v1017, %v2743
    %v2745 = vand.u32 %v2744, 4294901760
    %v2746 = vsub.f32 %v2744, %v2745
    %v2747 = vand.u32 %v2746, 4294901760
    %2748 = vmatprep.subr.mxu0 %v2747
    %v2749 = vand.u32 %v1016, 4294901760
    %v2750 = vsub.f32 %v1016, %v2749
    %v2751 = vand.u32 %v2750, 4294901760
    %v2752 = vsub.f32 %v2750, %v2751
    %v2753 = vand.u32 %v2752, 4294901760
    %2754 = vmatpush1.msra.mxu0 %v2753
    %v2755 = vand.u32 %v1019, 4294901760
    %v2756 = vsub.f32 %v1019, %v2755
    %v2757 = vand.u32 %v2756, 4294901760
    %v2758 = vsub.f32 %v2756, %v2757
    %v2759 = vand.u32 %v2758, 4294901760
    %2760 = vmatprep.subr.mxu0 %v2759
    %v2761 = vand.u32 %v1018, 4294901760
    %v2762 = vsub.f32 %v1018, %v2761
    %v2763 = vand.u32 %v2762, 4294901760
    %v2764 = vsub.f32 %v2762, %v2763
    %v2765 = vand.u32 %v2764, 4294901760
    %2766 = vmatpush1.msra.mxu0 %v2765
    %v2767 = vand.u32 %v1021, 4294901760
    %v2768 = vsub.f32 %v1021, %v2767
    %v2769 = vand.u32 %v2768, 4294901760
    %v2770 = vsub.f32 %v2768, %v2769
    %v2771 = vand.u32 %v2770, 4294901760
    %2772 = vmatprep.subr.mxu0 %v2771
    %v2773 = vand.u32 %v1020, 4294901760
    %v2774 = vsub.f32 %v1020, %v2773
    %v2775 = vand.u32 %v2774, 4294901760
    %v2776 = vsub.f32 %v2774, %v2775
    %v2777 = vand.u32 %v2776, 4294901760
    %2778 = vmatpush1.msra.mxu0 %v2777
    %v2779 = vand.u32 %v1023, 4294901760
    %v2780 = vsub.f32 %v1023, %v2779
    %v2781 = vand.u32 %v2780, 4294901760
    %v2782 = vsub.f32 %v2780, %v2781
    %v2783 = vand.u32 %v2782, 4294901760
    %2784 = vmatprep.subr.mxu0 %v2783
    %v2785 = vand.u32 %v1022, 4294901760
    %v2786 = vsub.f32 %v1022, %v2785
    %v2787 = vand.u32 %v2786, 4294901760
    %v2788 = vsub.f32 %v2786, %v2787
    %v2789 = vand.u32 %v2788, 4294901760
    %2790 = vmatpush1.msra.mxu0 %v2789
    %v2791 = vand.u32 %v1025, 4294901760
    %v2792 = vsub.f32 %v1025, %v2791
    %v2793 = vand.u32 %v2792, 4294901760
    %v2794 = vsub.f32 %v2792, %v2793
    %v2795 = vand.u32 %v2794, 4294901760
    %2796 = vmatprep.subr.mxu0 %v2795
    %v2797 = vand.u32 %v1024, 4294901760
    %v2798 = vsub.f32 %v1024, %v2797
    %v2799 = vand.u32 %v2798, 4294901760
    %v2800 = vsub.f32 %v2798, %v2799
    %v2801 = vand.u32 %v2800, 4294901760
    %2802 = vmatpush1.msra.mxu0 %v2801
    %v2803 = vand.u32 %v1027, 4294901760
    %v2804 = vsub.f32 %v1027, %v2803
    %v2805 = vand.u32 %v2804, 4294901760
    %v2806 = vsub.f32 %v2804, %v2805
    %v2807 = vand.u32 %v2806, 4294901760
    %2808 = vmatprep.subr.mxu0 %v2807
    %v2809 = vand.u32 %v1026, 4294901760
    %v2810 = vsub.f32 %v1026, %v2809
    %v2811 = vand.u32 %v2810, 4294901760
    %v2812 = vsub.f32 %v2810, %v2811
    %v2813 = vand.u32 %v2812, 4294901760
    %2814 = vmatpush1.msra.mxu0 %v2813
    %v2815 = vand.u32 %v1029, 4294901760
    %v2816 = vsub.f32 %v1029, %v2815
    %v2817 = vand.u32 %v2816, 4294901760
    %v2818 = vsub.f32 %v2816, %v2817
    %v2819 = vand.u32 %v2818, 4294901760
    %2820 = vmatprep.subr.mxu0 %v2819
    %v2821 = vand.u32 %v1028, 4294901760
    %v2822 = vsub.f32 %v1028, %v2821
    %v2823 = vand.u32 %v2822, 4294901760
    %v2824 = vsub.f32 %v2822, %v2823
    %v2825 = vand.u32 %v2824, 4294901760
    %2826 = vmatpush1.msra.mxu0 %v2825
    %v2827 = vand.u32 %v1031, 4294901760
    %v2828 = vsub.f32 %v1031, %v2827
    %v2829 = vand.u32 %v2828, 4294901760
    %v2830 = vsub.f32 %v2828, %v2829
    %v2831 = vand.u32 %v2830, 4294901760
    %2832 = vmatprep.subr.mxu0 %v2831
    %v2833 = vand.u32 %v1030, 4294901760
    %v2834 = vsub.f32 %v1030, %v2833
    %v2835 = vand.u32 %v2834, 4294901760
    %v2836 = vsub.f32 %v2834, %v2835
    %v2837 = vand.u32 %v2836, 4294901760
    %2838 = vmatpush1.msra.mxu0 %v2837
    %v2839 = vand.u32 %v1033, 4294901760
    %v2840 = vsub.f32 %v1033, %v2839
    %v2841 = vand.u32 %v2840, 4294901760
    %v2842 = vsub.f32 %v2840, %v2841
    %v2843 = vand.u32 %v2842, 4294901760
    %2844 = vmatprep.subr.mxu0 %v2843
    %v2845 = vand.u32 %v1032, 4294901760
    %v2846 = vsub.f32 %v1032, %v2845
    %v2847 = vand.u32 %v2846, 4294901760
    %v2848 = vsub.f32 %v2846, %v2847
    %v2849 = vand.u32 %v2848, 4294901760
    %2850 = vmatpush1.msra.mxu0 %v2849
    %v2851 = vand.u32 %v2321, 4294901760
    %2852 = vmatprep.mubr.f32.mxu0 %v2851
    %v2853 = vand.u32 %v2320, 4294901760
    %2854 = vmatmul.mubr.f32.gmra.mrb[0].mxu0 %v2853
    %v2855 = vpop.f32.mrb[0].mxu0
    %v2856 = vadd.f32 %v2463, %v2855
    %v2857 = vpop.f32.mrb[0].mxu0
    %v2858 = vadd.f32 %v2465, %v2857
    %2859 = vdwg.mxu0
    %v2860 = vand.u32 %v971, 4294901760
    %v2861 = vsub.f32 %v971, %v2860
    %2862 = vmatprep.subr.mxu0 %v2861
    %v2863 = vand.u32 %v970, 4294901760
    %v2864 = vsub.f32 %v970, %v2863
    %2865 = vmatpush1.msra.mxu0 %v2864
    %v2866 = vand.u32 %v973, 4294901760
    %v2867 = vsub.f32 %v973, %v2866
    %2868 = vmatprep.subr.mxu0 %v2867
    %v2869 = vand.u32 %v972, 4294901760
    %v2870 = vsub.f32 %v972, %v2869
    %2871 = vmatpush1.msra.mxu0 %v2870
    %v2872 = vand.u32 %v975, 4294901760
    %v2873 = vsub.f32 %v975, %v2872
    %2874 = vmatprep.subr.mxu0 %v2873
    %v2875 = vand.u32 %v974, 4294901760
    %v2876 = vsub.f32 %v974, %v2875
    %2877 = vmatpush1.msra.mxu0 %v2876
    %v2878 = vand.u32 %v977, 4294901760
    %v2879 = vsub.f32 %v977, %v2878
    %2880 = vmatprep.subr.mxu0 %v2879
    %v2881 = vand.u32 %v976, 4294901760
    %v2882 = vsub.f32 %v976, %v2881
    %2883 = vmatpush1.msra.mxu0 %v2882
    %v2884 = vand.u32 %v979, 4294901760
    %v2885 = vsub.f32 %v979, %v2884
    %2886 = vmatprep.subr.mxu0 %v2885
    %v2887 = vand.u32 %v978, 4294901760
    %v2888 = vsub.f32 %v978, %v2887
    %2889 = vmatpush1.msra.mxu0 %v2888
    %v2890 = vand.u32 %v981, 4294901760
    %v2891 = vsub.f32 %v981, %v2890
    %2892 = vmatprep.subr.mxu0 %v2891
    %v2893 = vand.u32 %v980, 4294901760
    %v2894 = vsub.f32 %v980, %v2893
    %2895 = vmatpush1.msra.mxu0 %v2894
    %v2896 = vand.u32 %v983, 4294901760
    %v2897 = vsub.f32 %v983, %v2896
    %2898 = vmatprep.subr.mxu0 %v2897
    %v2899 = vand.u32 %v982, 4294901760
    %v2900 = vsub.f32 %v982, %v2899
    %2901 = vmatpush1.msra.mxu0 %v2900
    %v2902 = vand.u32 %v985, 4294901760
    %v2903 = vsub.f32 %v985, %v2902
    %2904 = vmatprep.subr.mxu0 %v2903
    %v2905 = vand.u32 %v984, 4294901760
    %v2906 = vsub.f32 %v984, %v2905
    %2907 = vmatpush1.msra.mxu0 %v2906
    %v2908 = vand.u32 %v987, 4294901760
    %v2909 = vsub.f32 %v987, %v2908
    %2910 = vmatprep.subr.mxu0 %v2909
    %v2911 = vand.u32 %v986, 4294901760
    %v2912 = vsub.f32 %v986, %v2911
    %2913 = vmatpush1.msra.mxu0 %v2912
    %v2914 = vand.u32 %v989, 4294901760
    %v2915 = vsub.f32 %v989, %v2914
    %2916 = vmatprep.subr.mxu0 %v2915
    %v2917 = vand.u32 %v988, 4294901760
    %v2918 = vsub.f32 %v988, %v2917
    %2919 = vmatpush1.msra.mxu0 %v2918
    %v2920 = vand.u32 %v991, 4294901760
    %v2921 = vsub.f32 %v991, %v2920
    %2922 = vmatprep.subr.mxu0 %v2921
    %v2923 = vand.u32 %v990, 4294901760
    %v2924 = vsub.f32 %v990, %v2923
    %2925 = vmatpush1.msra.mxu0 %v2924
    %v2926 = vand.u32 %v993, 4294901760
    %v2927 = vsub.f32 %v993, %v2926
    %2928 = vmatprep.subr.mxu0 %v2927
    %v2929 = vand.u32 %v992, 4294901760
    %v2930 = vsub.f32 %v992, %v2929
    %2931 = vmatpush1.msra.mxu0 %v2930
    %v2932 = vand.u32 %v995, 4294901760
    %v2933 = vsub.f32 %v995, %v2932
    %2934 = vmatprep.subr.mxu0 %v2933
    %v2935 = vand.u32 %v994, 4294901760
    %v2936 = vsub.f32 %v994, %v2935
    %2937 = vmatpush1.msra.mxu0 %v2936
    %v2938 = vand.u32 %v997, 4294901760
    %v2939 = vsub.f32 %v997, %v2938
    %2940 = vmatprep.subr.mxu0 %v2939
    %v2941 = vand.u32 %v996, 4294901760
    %v2942 = vsub.f32 %v996, %v2941
    %2943 = vmatpush1.msra.mxu0 %v2942
    %v2944 = vand.u32 %v999, 4294901760
    %v2945 = vsub.f32 %v999, %v2944
    %2946 = vmatprep.subr.mxu0 %v2945
    %v2947 = vand.u32 %v998, 4294901760
    %v2948 = vsub.f32 %v998, %v2947
    %2949 = vmatpush1.msra.mxu0 %v2948
    %v2950 = vand.u32 %v1001, 4294901760
    %v2951 = vsub.f32 %v1001, %v2950
    %2952 = vmatprep.subr.mxu0 %v2951
    %v2953 = vand.u32 %v1000, 4294901760
    %v2954 = vsub.f32 %v1000, %v2953
    %2955 = vmatpush1.msra.mxu0 %v2954
    %v2956 = vand.u32 %v1003, 4294901760
    %v2957 = vsub.f32 %v1003, %v2956
    %2958 = vmatprep.subr.mxu0 %v2957
    %v2959 = vand.u32 %v1002, 4294901760
    %v2960 = vsub.f32 %v1002, %v2959
    %2961 = vmatpush1.msra.mxu0 %v2960
    %v2962 = vand.u32 %v1005, 4294901760
    %v2963 = vsub.f32 %v1005, %v2962
    %2964 = vmatprep.subr.mxu0 %v2963
    %v2965 = vand.u32 %v1004, 4294901760
    %v2966 = vsub.f32 %v1004, %v2965
    %2967 = vmatpush1.msra.mxu0 %v2966
    %v2968 = vand.u32 %v1007, 4294901760
    %v2969 = vsub.f32 %v1007, %v2968
    %2970 = vmatprep.subr.mxu0 %v2969
    %v2971 = vand.u32 %v1006, 4294901760
    %v2972 = vsub.f32 %v1006, %v2971
    %2973 = vmatpush1.msra.mxu0 %v2972
    %v2974 = vand.u32 %v1009, 4294901760
    %v2975 = vsub.f32 %v1009, %v2974
    %2976 = vmatprep.subr.mxu0 %v2975
    %v2977 = vand.u32 %v1008, 4294901760
    %v2978 = vsub.f32 %v1008, %v2977
    %2979 = vmatpush1.msra.mxu0 %v2978
    %v2980 = vand.u32 %v1011, 4294901760
    %v2981 = vsub.f32 %v1011, %v2980
    %2982 = vmatprep.subr.mxu0 %v2981
    %v2983 = vand.u32 %v1010, 4294901760
    %v2984 = vsub.f32 %v1010, %v2983
    %2985 = vmatpush1.msra.mxu0 %v2984
    %v2986 = vand.u32 %v1013, 4294901760
    %v2987 = vsub.f32 %v1013, %v2986
    %2988 = vmatprep.subr.mxu0 %v2987
    %v2989 = vand.u32 %v1012, 4294901760
    %v2990 = vsub.f32 %v1012, %v2989
    %2991 = vmatpush1.msra.mxu0 %v2990
    %v2992 = vand.u32 %v1015, 4294901760
    %v2993 = vsub.f32 %v1015, %v2992
    %2994 = vmatprep.subr.mxu0 %v2993
    %v2995 = vand.u32 %v1014, 4294901760
    %v2996 = vsub.f32 %v1014, %v2995
    %2997 = vmatpush1.msra.mxu0 %v2996
    %v2998 = vand.u32 %v1017, 4294901760
    %v2999 = vsub.f32 %v1017, %v2998
    %3000 = vmatprep.subr.mxu0 %v2999
    %v3001 = vand.u32 %v1016, 4294901760
    %v3002 = vsub.f32 %v1016, %v3001
    %3003 = vmatpush1.msra.mxu0 %v3002
    %v3004 = vand.u32 %v1019, 4294901760
    %v3005 = vsub.f32 %v1019, %v3004
    %3006 = vmatprep.subr.mxu0 %v3005
    %v3007 = vand.u32 %v1018, 4294901760
    %v3008 = vsub.f32 %v1018, %v3007
    %3009 = vmatpush1.msra.mxu0 %v3008
    %v3010 = vand.u32 %v1021, 4294901760
    %v3011 = vsub.f32 %v1021, %v3010
    %3012 = vmatprep.subr.mxu0 %v3011
    %v3013 = vand.u32 %v1020, 4294901760
    %v3014 = vsub.f32 %v1020, %v3013
    %3015 = vmatpush1.msra.mxu0 %v3014
    %v3016 = vand.u32 %v1023, 4294901760
    %v3017 = vsub.f32 %v1023, %v3016
    %3018 = vmatprep.subr.mxu0 %v3017
    %v3019 = vand.u32 %v1022, 4294901760
    %v3020 = vsub.f32 %v1022, %v3019
    %3021 = vmatpush1.msra.mxu0 %v3020
    %v3022 = vand.u32 %v1025, 4294901760
    %v3023 = vsub.f32 %v1025, %v3022
    %3024 = vmatprep.subr.mxu0 %v3023
    %v3025 = vand.u32 %v1024, 4294901760
    %v3026 = vsub.f32 %v1024, %v3025
    %3027 = vmatpush1.msra.mxu0 %v3026
    %v3028 = vand.u32 %v1027, 4294901760
    %v3029 = vsub.f32 %v1027, %v3028
    %3030 = vmatprep.subr.mxu0 %v3029
    %v3031 = vand.u32 %v1026, 4294901760
    %v3032 = vsub.f32 %v1026, %v3031
    %3033 = vmatpush1.msra.mxu0 %v3032
    %v3034 = vand.u32 %v1029, 4294901760
    %v3035 = vsub.f32 %v1029, %v3034
    %3036 = vmatprep.subr.mxu0 %v3035
    %v3037 = vand.u32 %v1028, 4294901760
    %v3038 = vsub.f32 %v1028, %v3037
    %3039 = vmatpush1.msra.mxu0 %v3038
    %v3040 = vand.u32 %v1031, 4294901760
    %v3041 = vsub.f32 %v1031, %v3040
    %3042 = vmatprep.subr.mxu0 %v3041
    %v3043 = vand.u32 %v1030, 4294901760
    %v3044 = vsub.f32 %v1030, %v3043
    %3045 = vmatpush1.msra.mxu0 %v3044
    %v3046 = vand.u32 %v1033, 4294901760
    %v3047 = vsub.f32 %v1033, %v3046
    %3048 = vmatprep.subr.mxu0 %v3047
    %v3049 = vand.u32 %v1032, 4294901760
    %v3050 = vsub.f32 %v1032, %v3049
    %3051 = vmatpush1.msra.mxu0 %v3050
    %v3052 = vand.u32 %v2321, 4294901760
    %v3053 = vsub.f32 %v2321, %v3052
    %3054 = vmatprep.mubr.f32.mxu0 %v3053
    %v3055 = vand.u32 %v2320, 4294901760
    %v3056 = vsub.f32 %v2320, %v3055
    %3057 = vmatmul.mubr.f32.gmra.mrb[0].mxu0 %v3056
    %v3058 = vpop.f32.mrb[0].mxu0
    %v3059 = vadd.f32 %v2856, %v3058
    %v3060 = vpop.f32.mrb[0].mxu0
    %v3061 = vadd.f32 %v2858, %v3060
    %3062 = vdwg.mxu0
    %v3063 = vand.u32 %v971, 4294901760
    %3064 = vmatprep.subr.mxu0 %v3063
    %v3065 = vand.u32 %v970, 4294901760
    %3066 = vmatpush1.msra.mxu0 %v3065
    %v3067 = vand.u32 %v973, 4294901760
    %3068 = vmatprep.subr.mxu0 %v3067
    %v3069 = vand.u32 %v972, 4294901760
    %3070 = vmatpush1.msra.mxu0 %v3069
    %v3071 = vand.u32 %v975, 4294901760
    %3072 = vmatprep.subr.mxu0 %v3071
    %v3073 = vand.u32 %v974, 4294901760
    %3074 = vmatpush1.msra.mxu0 %v3073
    %v3075 = vand.u32 %v977, 4294901760
    %3076 = vmatprep.subr.mxu0 %v3075
    %v3077 = vand.u32 %v976, 4294901760
    %3078 = vmatpush1.msra.mxu0 %v3077
    %v3079 = vand.u32 %v979, 4294901760
    %3080 = vmatprep.subr.mxu0 %v3079
    %v3081 = vand.u32 %v978, 4294901760
    %3082 = vmatpush1.msra.mxu0 %v3081
    %v3083 = vand.u32 %v981, 4294901760
    %3084 = vmatprep.subr.mxu0 %v3083
    %v3085 = vand.u32 %v980, 4294901760
    %3086 = vmatpush1.msra.mxu0 %v3085
    %v3087 = vand.u32 %v983, 4294901760
    %3088 = vmatprep.subr.mxu0 %v3087
    %v3089 = vand.u32 %v982, 4294901760
    %3090 = vmatpush1.msra.mxu0 %v3089
    %v3091 = vand.u32 %v985, 4294901760
    %3092 = vmatprep.subr.mxu0 %v3091
    %v3093 = vand.u32 %v984, 4294901760
    %3094 = vmatpush1.msra.mxu0 %v3093
    %v3095 = vand.u32 %v987, 4294901760
    %3096 = vmatprep.subr.mxu0 %v3095
    %v3097 = vand.u32 %v986, 4294901760
    %3098 = vmatpush1.msra.mxu0 %v3097
    %v3099 = vand.u32 %v989, 4294901760
    %3100 = vmatprep.subr.mxu0 %v3099
    %v3101 = vand.u32 %v988, 4294901760
    %3102 = vmatpush1.msra.mxu0 %v3101
    %v3103 = vand.u32 %v991, 4294901760
    %3104 = vmatprep.subr.mxu0 %v3103
    %v3105 = vand.u32 %v990, 4294901760
    %3106 = vmatpush1.msra.mxu0 %v3105
    %v3107 = vand.u32 %v993, 4294901760
    %3108 = vmatprep.subr.mxu0 %v3107
    %v3109 = vand.u32 %v992, 4294901760
    %3110 = vmatpush1.msra.mxu0 %v3109
    %v3111 = vand.u32 %v995, 4294901760
    %3112 = vmatprep.subr.mxu0 %v3111
    %v3113 = vand.u32 %v994, 4294901760
    %3114 = vmatpush1.msra.mxu0 %v3113
    %v3115 = vand.u32 %v997, 4294901760
    %3116 = vmatprep.subr.mxu0 %v3115
    %v3117 = vand.u32 %v996, 4294901760
    %3118 = vmatpush1.msra.mxu0 %v3117
    %v3119 = vand.u32 %v999, 4294901760
    %3120 = vmatprep.subr.mxu0 %v3119
    %v3121 = vand.u32 %v998, 4294901760
    %3122 = vmatpush1.msra.mxu0 %v3121
    %v3123 = vand.u32 %v1001, 4294901760
    %3124 = vmatprep.subr.mxu0 %v3123
    %v3125 = vand.u32 %v1000, 4294901760
    %3126 = vmatpush1.msra.mxu0 %v3125
    %v3127 = vand.u32 %v1003, 4294901760
    %3128 = vmatprep.subr.mxu0 %v3127
    %v3129 = vand.u32 %v1002, 4294901760
    %3130 = vmatpush1.msra.mxu0 %v3129
    %v3131 = vand.u32 %v1005, 4294901760
    %3132 = vmatprep.subr.mxu0 %v3131
    %v3133 = vand.u32 %v1004, 4294901760
    %3134 = vmatpush1.msra.mxu0 %v3133
    %v3135 = vand.u32 %v1007, 4294901760
    %3136 = vmatprep.subr.mxu0 %v3135
    %v3137 = vand.u32 %v1006, 4294901760
    %3138 = vmatpush1.msra.mxu0 %v3137
    %v3139 = vand.u32 %v1009, 4294901760
    %3140 = vmatprep.subr.mxu0 %v3139
    %v3141 = vand.u32 %v1008, 4294901760
    %3142 = vmatpush1.msra.mxu0 %v3141
    %v3143 = vand.u32 %v1011, 4294901760
    %3144 = vmatprep.subr.mxu0 %v3143
    %v3145 = vand.u32 %v1010, 4294901760
    %3146 = vmatpush1.msra.mxu0 %v3145
    %v3147 = vand.u32 %v1013, 4294901760
    %3148 = vmatprep.subr.mxu0 %v3147
    %v3149 = vand.u32 %v1012, 4294901760
    %3150 = vmatpush1.msra.mxu0 %v3149
    %v3151 = vand.u32 %v1015, 4294901760
    %3152 = vmatprep.subr.mxu0 %v3151
    %v3153 = vand.u32 %v1014, 4294901760
    %3154 = vmatpush1.msra.mxu0 %v3153
    %v3155 = vand.u32 %v1017, 4294901760
    %3156 = vmatprep.subr.mxu0 %v3155
    %v3157 = vand.u32 %v1016, 4294901760
    %3158 = vmatpush1.msra.mxu0 %v3157
    %v3159 = vand.u32 %v1019, 4294901760
    %3160 = vmatprep.subr.mxu0 %v3159
    %v3161 = vand.u32 %v1018, 4294901760
    %3162 = vmatpush1.msra.mxu0 %v3161
    %v3163 = vand.u32 %v1021, 4294901760
    %3164 = vmatprep.subr.mxu0 %v3163
    %v3165 = vand.u32 %v1020, 4294901760
    %3166 = vmatpush1.msra.mxu0 %v3165
    %v3167 = vand.u32 %v1023, 4294901760
    %3168 = vmatprep.subr.mxu0 %v3167
    %v3169 = vand.u32 %v1022, 4294901760
    %3170 = vmatpush1.msra.mxu0 %v3169
    %v3171 = vand.u32 %v1025, 4294901760
    %3172 = vmatprep.subr.mxu0 %v3171
    %v3173 = vand.u32 %v1024, 4294901760
    %3174 = vmatpush1.msra.mxu0 %v3173
    %v3175 = vand.u32 %v1027, 4294901760
    %3176 = vmatprep.subr.mxu0 %v3175
    %v3177 = vand.u32 %v1026, 4294901760
    %3178 = vmatpush1.msra.mxu0 %v3177
    %v3179 = vand.u32 %v1029, 4294901760
    %3180 = vmatprep.subr.mxu0 %v3179
    %v3181 = vand.u32 %v1028, 4294901760
    %3182 = vmatpush1.msra.mxu0 %v3181
    %v3183 = vand.u32 %v1031, 4294901760
    %3184 = vmatprep.subr.mxu0 %v3183
    %v3185 = vand.u32 %v1030, 4294901760
    %3186 = vmatpush1.msra.mxu0 %v3185
    %v3187 = vand.u32 %v1033, 4294901760
    %3188 = vmatprep.subr.mxu0 %v3187
    %v3189 = vand.u32 %v1032, 4294901760
    %3190 = vmatpush1.msra.mxu0 %v3189
    %v3191 = vand.u32 %v2321, 4294901760
    %v3192 = vsub.f32 %v2321, %v3191
    %v3193 = vand.u32 %v3192, 4294901760
    %3194 = vmatprep.mubr.f32.mxu0 %v3193
    %v3195 = vand.u32 %v2320, 4294901760
    %v3196 = vsub.f32 %v2320, %v3195
    %v3197 = vand.u32 %v3196, 4294901760
    %3198 = vmatmul.mubr.f32.gmra.mrb[0].mxu0 %v3197
    %v3199 = vpop.f32.mrb[0].mxu0
    %v3200 = vadd.f32 %v3059, %v3199
    %v3201 = vpop.f32.mrb[0].mxu0
    %v3202 = vadd.f32 %v3061, %v3201
    %3203 = vdwg.mxu0
    %v3204 = vand.u32 %v971, 4294901760
    %v3205 = vsub.f32 %v971, %v3204
    %v3206 = vand.u32 %v3205, 4294901760
    %3207 = vmatprep.subr.mxu0 %v3206
    %v3208 = vand.u32 %v970, 4294901760
    %v3209 = vsub.f32 %v970, %v3208
    %v3210 = vand.u32 %v3209, 4294901760
    %3211 = vmatpush1.msra.mxu0 %v3210
    %v3212 = vand.u32 %v973, 4294901760
    %v3213 = vsub.f32 %v973, %v3212
    %v3214 = vand.u32 %v3213, 4294901760
    %3215 = vmatprep.subr.mxu0 %v3214
    %v3216 = vand.u32 %v972, 4294901760
    %v3217 = vsub.f32 %v972, %v3216
    %v3218 = vand.u32 %v3217, 4294901760
    %3219 = vmatpush1.msra.mxu0 %v3218
    %v3220 = vand.u32 %v975, 4294901760
    %v3221 = vsub.f32 %v975, %v3220
    %v3222 = vand.u32 %v3221, 4294901760
    %3223 = vmatprep.subr.mxu0 %v3222
    %v3224 = vand.u32 %v974, 4294901760
    %v3225 = vsub.f32 %v974, %v3224
    %v3226 = vand.u32 %v3225, 4294901760
    %3227 = vmatpush1.msra.mxu0 %v3226
    %v3228 = vand.u32 %v977, 4294901760
    %v3229 = vsub.f32 %v977, %v3228
    %v3230 = vand.u32 %v3229, 4294901760
    %3231 = vmatprep.subr.mxu0 %v3230
    %v3232 = vand.u32 %v976, 4294901760
    %v3233 = vsub.f32 %v976, %v3232
    %v3234 = vand.u32 %v3233, 4294901760
    %3235 = vmatpush1.msra.mxu0 %v3234
    %v3236 = vand.u32 %v979, 4294901760
    %v3237 = vsub.f32 %v979, %v3236
    %v3238 = vand.u32 %v3237, 4294901760
    %3239 = vmatprep.subr.mxu0 %v3238
    %v3240 = vand.u32 %v978, 4294901760
    %v3241 = vsub.f32 %v978, %v3240
    %v3242 = vand.u32 %v3241, 4294901760
    %3243 = vmatpush1.msra.mxu0 %v3242
    %v3244 = vand.u32 %v981, 4294901760
    %v3245 = vsub.f32 %v981, %v3244
    %v3246 = vand.u32 %v3245, 4294901760
    %3247 = vmatprep.subr.mxu0 %v3246
    %v3248 = vand.u32 %v980, 4294901760
    %v3249 = vsub.f32 %v980, %v3248
    %v3250 = vand.u32 %v3249, 4294901760
    %3251 = vmatpush1.msra.mxu0 %v3250
    %v3252 = vand.u32 %v983, 4294901760
    %v3253 = vsub.f32 %v983, %v3252
    %v3254 = vand.u32 %v3253, 4294901760
    %3255 = vmatprep.subr.mxu0 %v3254
    %v3256 = vand.u32 %v982, 4294901760
    %v3257 = vsub.f32 %v982, %v3256
    %v3258 = vand.u32 %v3257, 4294901760
    %3259 = vmatpush1.msra.mxu0 %v3258
    %v3260 = vand.u32 %v985, 4294901760
    %v3261 = vsub.f32 %v985, %v3260
    %v3262 = vand.u32 %v3261, 4294901760
    %3263 = vmatprep.subr.mxu0 %v3262
    %v3264 = vand.u32 %v984, 4294901760
    %v3265 = vsub.f32 %v984, %v3264
    %v3266 = vand.u32 %v3265, 4294901760
    %3267 = vmatpush1.msra.mxu0 %v3266
    %v3268 = vand.u32 %v987, 4294901760
    %v3269 = vsub.f32 %v987, %v3268
    %v3270 = vand.u32 %v3269, 4294901760
    %3271 = vmatprep.subr.mxu0 %v3270
    %v3272 = vand.u32 %v986, 4294901760
    %v3273 = vsub.f32 %v986, %v3272
    %v3274 = vand.u32 %v3273, 4294901760
    %3275 = vmatpush1.msra.mxu0 %v3274
    %v3276 = vand.u32 %v989, 4294901760
    %v3277 = vsub.f32 %v989, %v3276
    %v3278 = vand.u32 %v3277, 4294901760
    %3279 = vmatprep.subr.mxu0 %v3278
    %v3280 = vand.u32 %v988, 4294901760
    %v3281 = vsub.f32 %v988, %v3280
    %v3282 = vand.u32 %v3281, 4294901760
    %3283 = vmatpush1.msra.mxu0 %v3282
    %v3284 = vand.u32 %v991, 4294901760
    %v3285 = vsub.f32 %v991, %v3284
    %v3286 = vand.u32 %v3285, 4294901760
    %3287 = vmatprep.subr.mxu0 %v3286
    %v3288 = vand.u32 %v990, 4294901760
    %v3289 = vsub.f32 %v990, %v3288
    %v3290 = vand.u32 %v3289, 4294901760
    %3291 = vmatpush1.msra.mxu0 %v3290
    %v3292 = vand.u32 %v993, 4294901760
    %v3293 = vsub.f32 %v993, %v3292
    %v3294 = vand.u32 %v3293, 4294901760
    %3295 = vmatprep.subr.mxu0 %v3294
    %v3296 = vand.u32 %v992, 4294901760
    %v3297 = vsub.f32 %v992, %v3296
    %v3298 = vand.u32 %v3297, 4294901760
    %3299 = vmatpush1.msra.mxu0 %v3298
    %v3300 = vand.u32 %v995, 4294901760
    %v3301 = vsub.f32 %v995, %v3300
    %v3302 = vand.u32 %v3301, 4294901760
    %3303 = vmatprep.subr.mxu0 %v3302
    %v3304 = vand.u32 %v994, 4294901760
    %v3305 = vsub.f32 %v994, %v3304
    %v3306 = vand.u32 %v3305, 4294901760
    %3307 = vmatpush1.msra.mxu0 %v3306
    %v3308 = vand.u32 %v997, 4294901760
    %v3309 = vsub.f32 %v997, %v3308
    %v3310 = vand.u32 %v3309, 4294901760
    %3311 = vmatprep.subr.mxu0 %v3310
    %v3312 = vand.u32 %v996, 4294901760
    %v3313 = vsub.f32 %v996, %v3312
    %v3314 = vand.u32 %v3313, 4294901760
    %3315 = vmatpush1.msra.mxu0 %v3314
    %v3316 = vand.u32 %v999, 4294901760
    %v3317 = vsub.f32 %v999, %v3316
    %v3318 = vand.u32 %v3317, 4294901760
    %3319 = vmatprep.subr.mxu0 %v3318
    %v3320 = vand.u32 %v998, 4294901760
    %v3321 = vsub.f32 %v998, %v3320
    %v3322 = vand.u32 %v3321, 4294901760
    %3323 = vmatpush1.msra.mxu0 %v3322
    %v3324 = vand.u32 %v1001, 4294901760
    %v3325 = vsub.f32 %v1001, %v3324
    %v3326 = vand.u32 %v3325, 4294901760
    %3327 = vmatprep.subr.mxu0 %v3326
    %v3328 = vand.u32 %v1000, 4294901760
    %v3329 = vsub.f32 %v1000, %v3328
    %v3330 = vand.u32 %v3329, 4294901760
    %3331 = vmatpush1.msra.mxu0 %v3330
    %v3332 = vand.u32 %v1003, 4294901760
    %v3333 = vsub.f32 %v1003, %v3332
    %v3334 = vand.u32 %v3333, 4294901760
    %3335 = vmatprep.subr.mxu0 %v3334
    %v3336 = vand.u32 %v1002, 4294901760
    %v3337 = vsub.f32 %v1002, %v3336
    %v3338 = vand.u32 %v3337, 4294901760
    %3339 = vmatpush1.msra.mxu0 %v3338
    %v3340 = vand.u32 %v1005, 4294901760
    %v3341 = vsub.f32 %v1005, %v3340
    %v3342 = vand.u32 %v3341, 4294901760
    %3343 = vmatprep.subr.mxu0 %v3342
    %v3344 = vand.u32 %v1004, 4294901760
    %v3345 = vsub.f32 %v1004, %v3344
    %v3346 = vand.u32 %v3345, 4294901760
    %3347 = vmatpush1.msra.mxu0 %v3346
    %v3348 = vand.u32 %v1007, 4294901760
    %v3349 = vsub.f32 %v1007, %v3348
    %v3350 = vand.u32 %v3349, 4294901760
    %3351 = vmatprep.subr.mxu0 %v3350
    %v3352 = vand.u32 %v1006, 4294901760
    %v3353 = vsub.f32 %v1006, %v3352
    %v3354 = vand.u32 %v3353, 4294901760
    %3355 = vmatpush1.msra.mxu0 %v3354
    %v3356 = vand.u32 %v1009, 4294901760
    %v3357 = vsub.f32 %v1009, %v3356
    %v3358 = vand.u32 %v3357, 4294901760
    %3359 = vmatprep.subr.mxu0 %v3358
    %v3360 = vand.u32 %v1008, 4294901760
    %v3361 = vsub.f32 %v1008, %v3360
    %v3362 = vand.u32 %v3361, 4294901760
    %3363 = vmatpush1.msra.mxu0 %v3362
    %v3364 = vand.u32 %v1011, 4294901760
    %v3365 = vsub.f32 %v1011, %v3364
    %v3366 = vand.u32 %v3365, 4294901760
    %3367 = vmatprep.subr.mxu0 %v3366
    %v3368 = vand.u32 %v1010, 4294901760
    %v3369 = vsub.f32 %v1010, %v3368
    %v3370 = vand.u32 %v3369, 4294901760
    %3371 = vmatpush1.msra.mxu0 %v3370
    %v3372 = vand.u32 %v1013, 4294901760
    %v3373 = vsub.f32 %v1013, %v3372
    %v3374 = vand.u32 %v3373, 4294901760
    %3375 = vmatprep.subr.mxu0 %v3374
    %v3376 = vand.u32 %v1012, 4294901760
    %v3377 = vsub.f32 %v1012, %v3376
    %v3378 = vand.u32 %v3377, 4294901760
    %3379 = vmatpush1.msra.mxu0 %v3378
    %v3380 = vand.u32 %v1015, 4294901760
    %v3381 = vsub.f32 %v1015, %v3380
    %v3382 = vand.u32 %v3381, 4294901760
    %3383 = vmatprep.subr.mxu0 %v3382
    %v3384 = vand.u32 %v1014, 4294901760
    %v3385 = vsub.f32 %v1014, %v3384
    %v3386 = vand.u32 %v3385, 4294901760
    %3387 = vmatpush1.msra.mxu0 %v3386
    %v3388 = vand.u32 %v1017, 4294901760
    %v3389 = vsub.f32 %v1017, %v3388
    %v3390 = vand.u32 %v3389, 4294901760
    %3391 = vmatprep.subr.mxu0 %v3390
    %v3392 = vand.u32 %v1016, 4294901760
    %v3393 = vsub.f32 %v1016, %v3392
    %v3394 = vand.u32 %v3393, 4294901760
    %3395 = vmatpush1.msra.mxu0 %v3394
    %v3396 = vand.u32 %v1019, 4294901760
    %v3397 = vsub.f32 %v1019, %v3396
    %v3398 = vand.u32 %v3397, 4294901760
    %3399 = vmatprep.subr.mxu0 %v3398
    %v3400 = vand.u32 %v1018, 4294901760
    %v3401 = vsub.f32 %v1018, %v3400
    %v3402 = vand.u32 %v3401, 4294901760
    %3403 = vmatpush1.msra.mxu0 %v3402
    %v3404 = vand.u32 %v1021, 4294901760
    %v3405 = vsub.f32 %v1021, %v3404
    %v3406 = vand.u32 %v3405, 4294901760
    %3407 = vmatprep.subr.mxu0 %v3406
    %v3408 = vand.u32 %v1020, 4294901760
    %v3409 = vsub.f32 %v1020, %v3408
    %v3410 = vand.u32 %v3409, 4294901760
    %3411 = vmatpush1.msra.mxu0 %v3410
    %v3412 = vand.u32 %v1023, 4294901760
    %v3413 = vsub.f32 %v1023, %v3412
    %v3414 = vand.u32 %v3413, 4294901760
    %3415 = vmatprep.subr.mxu0 %v3414
    %v3416 = vand.u32 %v1022, 4294901760
    %v3417 = vsub.f32 %v1022, %v3416
    %v3418 = vand.u32 %v3417, 4294901760
    %3419 = vmatpush1.msra.mxu0 %v3418
    %v3420 = vand.u32 %v1025, 4294901760
    %v3421 = vsub.f32 %v1025, %v3420
    %v3422 = vand.u32 %v3421, 4294901760
    %3423 = vmatprep.subr.mxu0 %v3422
    %v3424 = vand.u32 %v1024, 4294901760
    %v3425 = vsub.f32 %v1024, %v3424
    %v3426 = vand.u32 %v3425, 4294901760
    %3427 = vmatpush1.msra.mxu0 %v3426
    %v3428 = vand.u32 %v1027, 4294901760
    %v3429 = vsub.f32 %v1027, %v3428
    %v3430 = vand.u32 %v3429, 4294901760
    %3431 = vmatprep.subr.mxu0 %v3430
    %v3432 = vand.u32 %v1026, 4294901760
    %v3433 = vsub.f32 %v1026, %v3432
    %v3434 = vand.u32 %v3433, 4294901760
    %3435 = vmatpush1.msra.mxu0 %v3434
    %v3436 = vand.u32 %v1029, 4294901760
    %v3437 = vsub.f32 %v1029, %v3436
    %v3438 = vand.u32 %v3437, 4294901760
    %3439 = vmatprep.subr.mxu0 %v3438
    %v3440 = vand.u32 %v1028, 4294901760
    %v3441 = vsub.f32 %v1028, %v3440
    %v3442 = vand.u32 %v3441, 4294901760
    %3443 = vmatpush1.msra.mxu0 %v3442
    %v3444 = vand.u32 %v1031, 4294901760
    %v3445 = vsub.f32 %v1031, %v3444
    %v3446 = vand.u32 %v3445, 4294901760
    %3447 = vmatprep.subr.mxu0 %v3446
    %v3448 = vand.u32 %v1030, 4294901760
    %v3449 = vsub.f32 %v1030, %v3448
    %v3450 = vand.u32 %v3449, 4294901760
    %3451 = vmatpush1.msra.mxu0 %v3450
    %v3452 = vand.u32 %v1033, 4294901760
    %v3453 = vsub.f32 %v1033, %v3452
    %v3454 = vand.u32 %v3453, 4294901760
    %3455 = vmatprep.subr.mxu0 %v3454
    %v3456 = vand.u32 %v1032, 4294901760
    %v3457 = vsub.f32 %v1032, %v3456
    %v3458 = vand.u32 %v3457, 4294901760
    %3459 = vmatpush1.msra.mxu0 %v3458
    %v3460 = vand.u32 %v2321, 4294901760
    %3461 = vmatprep.mubr.f32.mxu0 %v3460
    %v3462 = vand.u32 %v2320, 4294901760
    %3463 = vmatmul.mubr.f32.gmra.mrb[0].mxu0 %v3462
    %v3464 = vpop.f32.mrb[0].mxu0
    %v3465 = vadd.f32 %v3200, %v3464
    %v3466 = vpop.f32.mrb[0].mxu0
    %v3467 = vadd.f32 %v3202, %v3466
    %3468 = vdwg.mxu0
    %v3469 = vand.u32 %v971, 4294901760
    %3470 = vmatprep.subr.mxu0 %v3469
    %v3471 = vand.u32 %v970, 4294901760
    %3472 = vmatpush1.msra.mxu0 %v3471
    %v3473 = vand.u32 %v973, 4294901760
    %3474 = vmatprep.subr.mxu0 %v3473
    %v3475 = vand.u32 %v972, 4294901760
    %3476 = vmatpush1.msra.mxu0 %v3475
    %v3477 = vand.u32 %v975, 4294901760
    %3478 = vmatprep.subr.mxu0 %v3477
    %v3479 = vand.u32 %v974, 4294901760
    %3480 = vmatpush1.msra.mxu0 %v3479
    %v3481 = vand.u32 %v977, 4294901760
    %3482 = vmatprep.subr.mxu0 %v3481
    %v3483 = vand.u32 %v976, 4294901760
    %3484 = vmatpush1.msra.mxu0 %v3483
    %v3485 = vand.u32 %v979, 4294901760
    %3486 = vmatprep.subr.mxu0 %v3485
    %v3487 = vand.u32 %v978, 4294901760
    %3488 = vmatpush1.msra.mxu0 %v3487
    %v3489 = vand.u32 %v981, 4294901760
    %3490 = vmatprep.subr.mxu0 %v3489
    %v3491 = vand.u32 %v980, 4294901760
    %3492 = vmatpush1.msra.mxu0 %v3491
    %v3493 = vand.u32 %v983, 4294901760
    %3494 = vmatprep.subr.mxu0 %v3493
    %v3495 = vand.u32 %v982, 4294901760
    %3496 = vmatpush1.msra.mxu0 %v3495
    %v3497 = vand.u32 %v985, 4294901760
    %3498 = vmatprep.subr.mxu0 %v3497
    %v3499 = vand.u32 %v984, 4294901760
    %3500 = vmatpush1.msra.mxu0 %v3499
    %v3501 = vand.u32 %v987, 4294901760
    %3502 = vmatprep.subr.mxu0 %v3501
    %v3503 = vand.u32 %v986, 4294901760
    %3504 = vmatpush1.msra.mxu0 %v3503
    %v3505 = vand.u32 %v989, 4294901760
    %3506 = vmatprep.subr.mxu0 %v3505
    %v3507 = vand.u32 %v988, 4294901760
    %3508 = vmatpush1.msra.mxu0 %v3507
    %v3509 = vand.u32 %v991, 4294901760
    %3510 = vmatprep.subr.mxu0 %v3509
    %v3511 = vand.u32 %v990, 4294901760
    %3512 = vmatpush1.msra.mxu0 %v3511
    %v3513 = vand.u32 %v993, 4294901760
    %3514 = vmatprep.subr.mxu0 %v3513
    %v3515 = vand.u32 %v992, 4294901760
    %3516 = vmatpush1.msra.mxu0 %v3515
    %v3517 = vand.u32 %v995, 4294901760
    %3518 = vmatprep.subr.mxu0 %v3517
    %v3519 = vand.u32 %v994, 4294901760
    %3520 = vmatpush1.msra.mxu0 %v3519
    %v3521 = vand.u32 %v997, 4294901760
    %3522 = vmatprep.subr.mxu0 %v3521
    %v3523 = vand.u32 %v996, 4294901760
    %3524 = vmatpush1.msra.mxu0 %v3523
    %v3525 = vand.u32 %v999, 4294901760
    %3526 = vmatprep.subr.mxu0 %v3525
    %v3527 = vand.u32 %v998, 4294901760
    %3528 = vmatpush1.msra.mxu0 %v3527
    %v3529 = vand.u32 %v1001, 4294901760
    %3530 = vmatprep.subr.mxu0 %v3529
    %v3531 = vand.u32 %v1000, 4294901760
    %3532 = vmatpush1.msra.mxu0 %v3531
    %v3533 = vand.u32 %v1003, 4294901760
    %3534 = vmatprep.subr.mxu0 %v3533
    %v3535 = vand.u32 %v1002, 4294901760
    %3536 = vmatpush1.msra.mxu0 %v3535
    %v3537 = vand.u32 %v1005, 4294901760
    %3538 = vmatprep.subr.mxu0 %v3537
    %v3539 = vand.u32 %v1004, 4294901760
    %3540 = vmatpush1.msra.mxu0 %v3539
    %v3541 = vand.u32 %v1007, 4294901760
    %3542 = vmatprep.subr.mxu0 %v3541
    %v3543 = vand.u32 %v1006, 4294901760
    %3544 = vmatpush1.msra.mxu0 %v3543
    %v3545 = vand.u32 %v1009, 4294901760
    %3546 = vmatprep.subr.mxu0 %v3545
    %v3547 = vand.u32 %v1008, 4294901760
    %3548 = vmatpush1.msra.mxu0 %v3547
    %v3549 = vand.u32 %v1011, 4294901760
    %3550 = vmatprep.subr.mxu0 %v3549
    %v3551 = vand.u32 %v1010, 4294901760
    %3552 = vmatpush1.msra.mxu0 %v3551
    %v3553 = vand.u32 %v1013, 4294901760
    %3554 = vmatprep.subr.mxu0 %v3553
    %v3555 = vand.u32 %v1012, 4294901760
    %3556 = vmatpush1.msra.mxu0 %v3555
    %v3557 = vand.u32 %v1015, 4294901760
    %3558 = vmatprep.subr.mxu0 %v3557
    %v3559 = vand.u32 %v1014, 4294901760
    %3560 = vmatpush1.msra.mxu0 %v3559
    %v3561 = vand.u32 %v1017, 4294901760
    %3562 = vmatprep.subr.mxu0 %v3561
    %v3563 = vand.u32 %v1016, 4294901760
    %3564 = vmatpush1.msra.mxu0 %v3563
    %v3565 = vand.u32 %v1019, 4294901760
    %3566 = vmatprep.subr.mxu0 %v3565
    %v3567 = vand.u32 %v1018, 4294901760
    %3568 = vmatpush1.msra.mxu0 %v3567
    %v3569 = vand.u32 %v1021, 4294901760
    %3570 = vmatprep.subr.mxu0 %v3569
    %v3571 = vand.u32 %v1020, 4294901760
    %3572 = vmatpush1.msra.mxu0 %v3571
    %v3573 = vand.u32 %v1023, 4294901760
    %3574 = vmatprep.subr.mxu0 %v3573
    %v3575 = vand.u32 %v1022, 4294901760
    %3576 = vmatpush1.msra.mxu0 %v3575
    %v3577 = vand.u32 %v1025, 4294901760
    %3578 = vmatprep.subr.mxu0 %v3577
    %v3579 = vand.u32 %v1024, 4294901760
    %3580 = vmatpush1.msra.mxu0 %v3579
    %v3581 = vand.u32 %v1027, 4294901760
    %3582 = vmatprep.subr.mxu0 %v3581
    %v3583 = vand.u32 %v1026, 4294901760
    %3584 = vmatpush1.msra.mxu0 %v3583
    %v3585 = vand.u32 %v1029, 4294901760
    %3586 = vmatprep.subr.mxu0 %v3585
    %v3587 = vand.u32 %v1028, 4294901760
    %3588 = vmatpush1.msra.mxu0 %v3587
    %v3589 = vand.u32 %v1031, 4294901760
    %3590 = vmatprep.subr.mxu0 %v3589
    %v3591 = vand.u32 %v1030, 4294901760
    %3592 = vmatpush1.msra.mxu0 %v3591
    %v3593 = vand.u32 %v1033, 4294901760
    %3594 = vmatprep.subr.mxu0 %v3593
    %v3595 = vand.u32 %v1032, 4294901760
    %3596 = vmatpush1.msra.mxu0 %v3595
    %v3597 = vand.u32 %v2321, 4294901760
    %3598 = vmatprep.mubr.f32.mxu0 %v3597
    %v3599 = vand.u32 %v2320, 4294901760
    %3600 = vmatmul.mubr.f32.gmra.mrb[0].mxu0 %v3599
    %v3601 = vpop.f32.mrb[0].mxu0
    %v3602 = vadd.f32 %v3465, %v3601
    %v3603 = vpop.f32.mrb[0].mxu0
    %v3604 = vadd.f32 %v3467, %v3603
    %3605 = vdwg.mxu0
    %v3606 = vrsqrt.pop %v3602
    %v3607 = vrsqrt.pop %v3604
    %v3608 = vmul.f32 %v2318, %v3606
    %v3609 = vmul.f32 %v2319, %v3607
    %v3610 = vld [vmem:[%s3] sm:$0x3]
    %v3612 = vlaneseq
    %v3613 = vshrl.u32 %v3612, 7
    %v3614 = vsub.s32 0, %v3613
    %v3615 = vrot.slane %v3610, %v3614
    %v3616 = vlaneseq
    %v3617 = vshrl.u32 %v3616, 7
    %v3618 = vsub.s32 1, %v3617
    %v3619 = vrot.slane %v3610, %v3618
    %v3622 = vmul.f32 %v3608, %v3615
    %v3623 = vmul.f32 %v3609, %v3619
    %v3624 = vld [vmem:[%s4] sm:$0x3]
    %v3626 = vlaneseq
    %v3627 = vshrl.u32 %v3626, 7
    %v3628 = vsub.s32 0, %v3627
    %v3629 = vrot.slane %v3624, %v3628
    %v3630 = vlaneseq
    %v3631 = vshrl.u32 %v3630, 7
    %v3632 = vsub.s32 1, %v3631
    %v3633 = vrot.slane %v3624, %v3632
    %v3636 = vadd.f32 %v3622, %v3629
    %v3637 = vadd.f32 %v3623, %v3633
    %3638 = vst [vmem:[#allocation8] sm:$0xff] %v3636
    %3639 = vst [vmem:[#allocation8 + $0x8] sm:$0xff] %v3637
    // Predicated region
    $region42: #{tpu_custom_call.1} parent=1 // pred_check
      _
    $region43: #{tpu_custom_call.1} parent=1 // pred_check_branch
      %3641 = sbr.rel (0) target = $region45
    $region44: #{tpu_custom_call.1} parent=1 // pred_region
      %s3643 = ssub.s32 256, 256
      %3644 = vsyncadd [#allocation4], %s3643
      %s3646 = sshll.u32 [#allocation8], 4
      %s3647 = int_to_ptr.vmem [resolvable:$true] %s3646
      %3649 = dma.vmem_to_hbm [thread:$0]  %s3647, 256, %s7, [#allocation4]
    $region45: #{tpu_custom_call.1} parent=1 // pred_fallthru
      _
    // Predicated region
    $region46: #{tpu_custom_call.1} parent=1 // pred_check
      _
    $region47: #{tpu_custom_call.1} parent=1 // pred_check_branch
      %3651 = sbr.rel (0) target = $region49
    $region48: #{tpu_custom_call.1} parent=1 // pred_region
      %3652 = dma.done [#allocation4], 256
    $region49: #{tpu_custom_call.1} parent=1 // pred_fallthru
      _
    %3653 = vsyncpa [#allocation3], 1
    %3654 = vsyncpa [#allocation6], 1
    %3655 = vsyncpa [#allocation4], 1

</llo_original>
